<compile_context>
chip_gen: v7x
topology: tpu7x:2x2x1
jax: 0.10.0
libtpu: 0.0.40
codegen_flags: <defaults>
</compile_context>

<pallas_src>
import math

import jax
import jax.numpy as jnp
from jax.experimental import pallas as pl
from jax.experimental.pallas import tpu as pltpu

# ----------------------------- configuration --------------------------------
NUM_MOTION = 2
USE_ORIGIN = True
VIEW_W     = 16                                   # W : view-embedding width
FEAT_CH_IN = 8                                    # feat_ch ctor arg
FEAT_CH    = FEAT_CH_IN * (NUM_MOTION + 1 if USE_ORIGIN else NUM_MOTION)   # 24
D_IN       = VIEW_W + FEAT_CH                     # 40
W_R = W_V = W_W = 32
H_CAT = W_R + W_V + W_W                           # 96  (fused hidden width)
OUT_R = 3 * NUM_MOTION                            # 6
OUT_V = 3 * NUM_MOTION                            # 6
OUT_W = NUM_MOTION + 1                            # 3
OUT_CAT = OUT_R + OUT_V + OUT_W                   # 15
RAY_ROWS = (NUM_MOTION + 1) * 6                   # 18
RV_WINDOW = 0.1

N_RAYS     = 1024
NUM_IMAGES = 8

# v7x: switch to (pltpu.CORE_PARALLEL,) to shard a multi-step ray grid across both
# TensorCores; plain "parallel" keeps codegen unchanged on single-TC v5e/v6e.
_GRID_SEMANTICS = ("parallel",)


def _choose_tile(n):
    """Ray-axis tile.

    1024 rays per step (S = 8 sublane groups) makes every per-channel temporary in the
    SE(3) warp exactly one (8,128) vreg -> full sublane utilization with ~40 live vregs
    (no spills).  Smaller / non-multiple-of-1024 N runs as a single full-N tile, which
    also removes per-step pipeline overhead on single-TC chips for small batches.
    """
    assert n % 128 == 0, "number of rays must be a multiple of 128"
    if n > 1024 and n % 1024 == 0:
        return 1024
    return n


# ------------------------------- the kernel ---------------------------------
def _rbk_kernel(idx_ref, feats_ref, rays_ref, w1i_ref, w1f_ref, w2_ref, b2_ref,
                newrays_ref, weight_ref):
    # idx_ref   : [1, T]  int32        per-ray image index (lane-major)
    # feats_ref : [FEAT_CH, T]         per-ray features (channel-major)
    # rays_ref  : [6, S, 128]          rows = ox, dx, oy, dy, oz, dz   (S = T // 128)
    # w1i_ref   : [H_CAT, NUM_IMAGES]  (embed @ W1_view + b1)^T  (embedding + b1 fold)
    # w1f_ref   : [H_CAT, FEAT_CH]     feats part of the fused first-layer weight
    # w2_ref    : [OUT_CAT, H_CAT]     block-diagonal fused head weight
    # b2_ref    : [OUT_CAT, 1]
    # newrays_ref : [(NUM_MOTION+1)*6, S, 128]
    # weight_ref  : [OUT_W, S, 128]
    S = rays_ref.shape[1]
    T = S * 128

    # ---- fused branch MLP (DEFAULT = single-pass bf16-input MXU precision) ----
    # In-kernel nn.Embedding lookup: exact 0/1 one-hot against the resident per-image
    # table; because each one-hot column sums to 1 this also applies b1 exactly.
    onehot = (jax.lax.broadcasted_iota(jnp.int32, (NUM_IMAGES, T), 0)
              == idx_ref[...]).astype(jnp.float32)
    h = (jnp.dot(w1i_ref[...], onehot, preferred_element_type=jnp.float32)
         + jnp.dot(w1f_ref[...], feats_ref[...], preferred_element_type=jnp.float32))
    h = jnp.maximum(h, 0.0)                                           # [H_CAT, T]
    rvw = (jnp.dot(w2_ref[...], h, preferred_element_type=jnp.float32)
           + b2_ref[...])                                             # [OUT_CAT, T]

    # Retile the 15 result rows into full (8,128) ray slabs so the warp below runs at
    # 8/8 sublane utilization (one vreg per channel temp at T=1024).  One VMEM copy.
    rvw = rvw.reshape(OUT_CAT, S, 128)

    # ---- composite weights: sigmoid + exact normalization ----------------------
    wl = [jax.nn.sigmoid(rvw[OUT_R + OUT_V + j]) for j in range(OUT_W)]
    wsum = wl[0]
    for j in range(1, OUT_W):
        wsum = wsum + wl[j]
    wsum = wsum + 1e-10
    for j in range(OUT_W):
        weight_ref[j] = wl[j] / wsum              # exact divide, tile-aligned store

    # ---- SE(3) warp of the input rays -------------------------------------------
    rays = rays_ref[...]                          # [6, S, 128]
    newrays_ref[0:6] = rays                       # slot 0: original rays (bulk copy)
    ox, dxx = rays[0], rays[1]
    oy, dyy = rays[2], rays[3]
    oz, dzz = rays[4], rays[5]

    nm = NUM_MOTION
    for i in range(nm):
        # r.reshape(N, 3, nm)[:, a, i]  ->  row a*nm + i of the lane-major r/v blocks
        rx = rvw[i] * RV_WINDOW
        ry = rvw[nm + i] * RV_WINDOW
        rz = rvw[2 * nm + i] * RV_WINDOW
        vx = rvw[OUT_R + i] * RV_WINDOW
        vy = rvw[OUT_R + nm + i] * RV_WINDOW
        vz = rvw[OUT_R + 2 * nm + i] * RV_WINDOW

        ss = rx * rx + ry * ry + rz * rz
        inv_t = jax.lax.rsqrt(ss + 1e-12)         # 1/theta (EUP; finite as theta -> 0)
        theta = ss * inv_t                        # ~ ||r||
        wx, wy, wz = rx * inv_t, ry * inv_t, rz * inv_t      # unit rotation axis
        sx, sy, sz = vx * inv_t, vy * inv_t, vz * inv_t      # screw translation
        st, ct = jnp.sin(theta), jnp.cos(theta)
        omc = 1.0 - ct
        tms = theta - st

        # p = (theta*I + (1-cos)*W + (theta-sin)*W^2) s ;   W^2 s = w (w.s) - s
        dws = wx * sx + wy * sy + wz * sz
        px = theta * sx + omc * (wy * sz - wz * sy) + tms * (wx * dws - sx)
        py = theta * sy + omc * (wz * sx - wx * sz) + tms * (wy * dws - sy)
        pz = theta * sz + omc * (wx * sy - wy * sx) + tms * (wz * dws - sz)

        # Rodrigues:  R q = q cos + (w x q) sin + w (w.q)(1 - cos)
        d_o = wx * ox + wy * oy + wz * oz
        wox = ox * ct + (wy * oz - wz * oy) * st + wx * d_o * omc + px
        woy = oy * ct + (wz * ox - wx * oz) * st + wy * d_o * omc + py
        woz = oz * ct + (wx * oy - wy * ox) * st + wz * d_o * omc + pz
        base = 6 * (i + 1)
        newrays_ref[base + 0] = wox               # tile-aligned [S,128] stores,
        newrays_ref[base + 2] = woy               # written immediately to bound
        newrays_ref[base + 4] = woz               # live ranges

        # warped direction = warp(origin + dir) - warp(origin)  (matches reference)
        ex, ey, ez = ox + dxx, oy + dyy, oz + dzz
        d_e = wx * ex + wy * ey + wz * ez
        newrays_ref[base + 1] = (ex * ct + (wy * ez - wz * ey) * st
                                 + wx * d_e * omc + px) - wox
        newrays_ref[base + 3] = (ey * ct + (wz * ex - wx * ez) * st
                                 + wy * d_e * omc + py) - woy
        newrays_ref[base + 5] = (ez * ct + (wx * ey - wy * ex) * st
                                 + wz * d_e * omc + pz) - woz


# ------------------------------- host wrapper --------------------------------
def _pack_params(params):
    """Fuse the three branch GEMMs and fold embedding + b1 into resident weights."""
    w1 = jnp.concatenate([params["rW1"], params["vW1"], params["wW1"]], axis=1)  # [D_IN, 96]
    b1 = jnp.concatenate([params["rb1"], params["vb1"], params["wb1"]], axis=1)  # [1, 96]
    w1v, w1f = w1[:VIEW_W], w1[VIEW_W:]
    # Exact f32 fold (tiny 8x16x96 GEMM): column j of w1i is  W1_view^T @ embed[j] + b1
    w1i = (jnp.dot(params["embed"], w1v, precision=jax.lax.Precision.HIGHEST) + b1).T
    w2 = jnp.zeros((H_CAT, OUT_CAT), jnp.float32)
    w2 = w2.at[0:W_R, 0:OUT_R].set(params["rW2"])
    w2 = w2.at[W_R:W_R + W_V, OUT_R:OUT_R + OUT_V].set(params["vW2"])
    w2 = w2.at[W_R + W_V:, OUT_R + OUT_V:].set(params["wW2"])
    b2 = jnp.concatenate([params["rb2"], params["vb2"], params["wb2"]], axis=1)  # [1, 15]
    return (w1i.astype(jnp.float32), w1f.T.astype(jnp.float32),
            w2.T.astype(jnp.float32), b2.T.astype(jnp.float32))


def rigid_blurring_forward(params, rays, images_idx, feats):
    """Returns (new_rays [N, num_motion+1, 3, 2], weight [N, num_motion+1], None, {})."""
    N = rays.shape[0]
    tile = _choose_tile(N)
    s_tile = tile // 128
    s_total = N // 128

    # Glue (all small): idx row, channel-major feats, channel-slab rays.
    idx_row  = images_idx.reshape(1, N).astype(jnp.int32)
    feats_cm = feats.reshape(N, FEAT_CH).astype(jnp.float32).T                 # [24, N]
    rays_cm  = (rays.astype(jnp.float32).reshape(N, 6).T                       # [6, N]
                .reshape(6, s_total, 128))                                     # rows ox,dx,oy,dy,oz,dz

    w1i, w1f, w2t, b2t = _pack_params(params)

    row_spec  = lambda nrow: pl.BlockSpec((nrow, tile), lambda i: (0, i))
    slab_spec = lambda nrow: pl.BlockSpec((nrow, s_tile, 128), lambda i: (0, i, 0))
    full_spec = lambda arr: pl.BlockSpec(arr.shape, lambda i: (0, 0))

    newrays, weight = pl.pallas_call(
        _rbk_kernel,
        out_shape=(jax.ShapeDtypeStruct((RAY_ROWS, s_total, 128), jnp.float32),
                   jax.ShapeDtypeStruct((OUT_W, s_total, 128), jnp.float32)),
        grid_spec=pltpu.PrefetchScalarGridSpec(
            num_scalar_prefetch=0,
            grid=(N // tile,),
            in_specs=[row_spec(1), row_spec(FEAT_CH), slab_spec(6),
                      full_spec(w1i), full_spec(w1f), full_spec(w2t), full_spec(b2t)],
            out_specs=[slab_spec(RAY_ROWS), slab_spec(OUT_W)],
        ),
        compiler_params=pltpu.CompilerParams(dimension_semantics=_GRID_SEMANTICS),
    )(idx_row, feats_cm, rays_cm, w1i, w1f, w2t, b2t)

    # Cheap layout plumbing back to the PyTorch convention (single output transpose).
    new_rays = (newrays.reshape(NUM_MOTION + 1, 3, 2, s_total, 128)
                .transpose(3, 4, 0, 1, 2).reshape(N, NUM_MOTION + 1, 3, 2))
    weight = weight.reshape(OUT_W, N).T
    align = None
    extras = {}
    return new_rays, weight, align, extras


# ---------------------------- deterministic params ---------------------------
def init_params(key):
    ks = jax.random.split(key, 8)

    def linear(k, fin, fout, scale=None):
        if scale is None:
            scale = 1.0 / math.sqrt(fin)
        kw, kb = jax.random.split(k)
        W = jax.random.uniform(kw, (fin, fout), jnp.float32, -scale, scale)
        b = jax.random.uniform(kb, (1, fout), jnp.float32, -scale, scale)
        return W, b

    p = {"embed": jax.random.normal(ks[0], (NUM_IMAGES, VIEW_W), jnp.float32)}
    p["rW1"], p["rb1"] = linear(ks[1], D_IN, W_R)
    p["vW1"], p["vb1"] = linear(ks[2], D_IN, W_V)
    p["wW1"], p["wb1"] = linear(ks[3], D_IN, W_W)
    # Original uses xavier_uniform with ~1e-5 gain on r_linear / v_linear; a moderate
    # deterministic scale keeps the SE(3) warp numerically non-trivial for the test.
    p["rW2"], p["rb2"] = linear(ks[4], W_R, OUT_R, scale=0.2)
    p["vW2"], p["vb2"] = linear(ks[5], W_V, OUT_V, scale=0.2)
    p["wW2"], p["wb2"] = linear(ks[6], W_W, OUT_W)
    return p


# ------------------------------ pure-JAX reference ---------------------------
def _ref_forward(params, rays, images_idx, feats):
    # Matmuls use the same DEFAULT TPU precision policy as the kernel.
    N = rays.shape[0]
    vf = params["embed"][images_idx[:, 0]]
    hb = jnp.concatenate([vf, feats.reshape(N, FEAT_CH)], -1).astype(jnp.float32)
    relu = jax.nn.relu
    h_r = relu(hb @ params["rW1"] + params["rb1"])
    h_v = relu(hb @ params["vW1"] + params["vb1"])
    h_w = relu(hb @ params["wW1"] + params["wb1"])
    r = (h_r @ params["rW2"] + params["rb2"]) * RV_WINDOW
    v = (h_v @ params["vW2"] + params["vb2"]) * RV_WINDOW
    wgt = jax.nn.sigmoid(h_w @ params["wW2"] + params["wb2"])
    wgt = wgt / (jnp.sum(wgt, -1, keepdims=True) + 1e-10)

    r = r.reshape(N, 3, NUM_MOTION)
    v = v.reshape(N, 3, NUM_MOTION)
    rays = rays.astype(jnp.float32)
    rays_o, rays_d = rays[..., 0], rays[..., 1]
    pts_end = rays_o + rays_d

    def skew(a):
        ax, ay, az = a[:, 0], a[:, 1], a[:, 2]
        z = jnp.zeros_like(ax)
        return jnp.stack([jnp.stack([z, -az, ay], -1),
                          jnp.stack([az, z, -ax], -1),
                          jnp.stack([-ay, ax, z], -1)], -2)

    out = [jnp.stack([rays_o, rays_d], -1)]
    for i in range(NUM_MOTION):
        w = r[:, :, i]
        t = v[:, :, i]
        theta = jnp.linalg.norm(w, axis=-1, keepdims=True)
        wu = w / theta
        s = t / theta
        Wm = skew(wu)
        th = theta[..., None]
        I = jnp.eye(3)[None]
        R = I + jnp.sin(th) * Wm + (1.0 - jnp.cos(th)) * (Wm @ Wm)
        G = th * I + (1.0 - jnp.cos(th)) * Wm + (th - jnp.sin(th)) * (Wm @ Wm)
        p = (G @ s[..., None])[..., 0]
        wo = (R @ rays_o[..., None])[..., 0] + p
        we = (R @ pts_end[..., None])[..., 0] + p
        out.append(jnp.stack([wo, we - wo], -1))
    return jnp.stack(out, axis=1), wgt


# ------------------------------------ main -----------------------------------
if __name__ == "__main__":
    key = jax.random.PRNGKey(0)
    kp, kr, ki, kf = jax.random.split(key, 4)

    params = init_params(kp)
    rays = jax.random.normal(kr, (N_RAYS, 3, 2), jnp.float32)
    images_idx = jax.random.randint(ki, (N_RAYS, 1), 0, NUM_IMAGES, jnp.int32)
    feats = jax.random.normal(kf, (N_RAYS, FEAT_CH), jnp.float32)

    new_rays, weight, align, extras = rigid_blurring_forward(params, rays, images_idx, feats)
    jax.block_until_ready((new_rays, weight))

    ref_rays, ref_w = _ref_forward(params, rays, images_idx, feats)
    assert new_rays.shape == (N_RAYS, NUM_MOTION + 1, 3, 2)
    assert weight.shape == (N_RAYS, NUM_MOTION + 1)
    # new_rays: warp math is pure f32; only the (DEFAULT-precision) GEMM rounding feeds it.
    assert jnp.allclose(new_rays, ref_rays, atol=1e-3, rtol=1e-3)
    # weight: tolerance sized for the single-pass bf16-input MXU precision requested
    # by the perf review (both kernel and reference use the DEFAULT matmul policy).
    assert jnp.allclose(weight, ref_w, atol=2e-3, rtol=2e-3)

    print("KERNEL_OK")
</pallas_src>

<mosaic_0001>
module attributes {stable_mosaic.version = 11 : i64} {
  func.func @_rbk_kernel(%arg0: i32, %arg1: memref<1x1024xi32, #tpu.memory_space<vmem>>, %arg2: memref<24x1024xf32, #tpu.memory_space<vmem>>, %arg3: memref<6x8x128xf32, #tpu.memory_space<vmem>>, %arg4: memref<96x8xf32, #tpu.memory_space<vmem>>, %arg5: memref<96x24xf32, #tpu.memory_space<vmem>>, %arg6: memref<15x96xf32, #tpu.memory_space<vmem>>, %arg7: memref<15x1xf32, #tpu.memory_space<vmem>>, %arg8: memref<18x8x128xf32, #tpu.memory_space<vmem>>, %arg9: memref<3x8x128xf32, #tpu.memory_space<vmem>>) attributes {dimension_semantics = [#tpu.dimension_semantics<parallel>], iteration_bounds = array<i64: 1>, scalar_prefetch = 0 : i64, scratch_operands = 0 : i64, tpu.core_type = #tpu.core_type<tc>, window_params = [{transform_indices = @transform_0, window_bounds = array<i64: 1, 1024>}, {transform_indices = @transform_1, window_bounds = array<i64: 24, 1024>}, {transform_indices = @transform_2, window_bounds = array<i64: 6, 8, 128>}, {pipeline_mode = #tpu.pipeline_mode<synchronous>, transform_indices = @transform_3, window_bounds = array<i64: 96, 8>}, {pipeline_mode = #tpu.pipeline_mode<synchronous>, transform_indices = @transform_4, window_bounds = array<i64: 96, 24>}, {pipeline_mode = #tpu.pipeline_mode<synchronous>, transform_indices = @transform_5, window_bounds = array<i64: 15, 96>}, {pipeline_mode = #tpu.pipeline_mode<synchronous>, transform_indices = @transform_6, window_bounds = array<i64: 15, 1>}, {transform_indices = @transform_7, window_bounds = array<i64: 18, 8, 128>}, {transform_indices = @transform_8, window_bounds = array<i64: 3, 8, 128>}]} {
    %0 = tpu.iota {dimensions = array<i32: 0>} : vector<8x1024xi32>
    %c0 = arith.constant 0 : index
    %c0_0 = arith.constant 0 : index
    %1 = vector.load %arg1[%c0, %c0_0] : memref<1x1024xi32, #tpu.memory_space<vmem>>, vector<1x1024xi32>
    %2 = vector.broadcast %1 : vector<1x1024xi32> to vector<8x1024xi32>
    %3 = arith.cmpi eq, %0, %2 : vector<8x1024xi32>
    %4 = arith.extui %3 : vector<8x1024xi1> to vector<8x1024xi32>
    %5 = arith.sitofp %4 : vector<8x1024xi32> to vector<8x1024xf32>
    %c0_1 = arith.constant 0 : index
    %c0_2 = arith.constant 0 : index
    %6 = vector.load %arg4[%c0_1, %c0_2] : memref<96x8xf32, #tpu.memory_space<vmem>>, vector<96x8xf32>
    %cst = arith.constant dense<0.000000e+00> : vector<96x1024xf32>
    %7 = tpu.matmul %6, %5, %cst {dimension_numbers = #tpu.dot_dimension_numbers<[1], [0], [0], [1], [0, 0, 1, 1], [], []>} : vector<96x8xf32>, vector<8x1024xf32>, vector<96x1024xf32> -> vector<96x1024xf32>
    %c0_3 = arith.constant 0 : index
    %c0_4 = arith.constant 0 : index
    %8 = vector.load %arg5[%c0_3, %c0_4] : memref<96x24xf32, #tpu.memory_space<vmem>>, vector<96x24xf32>
    %c0_5 = arith.constant 0 : index
    %c0_6 = arith.constant 0 : index
    %9 = vector.load %arg2[%c0_5, %c0_6] : memref<24x1024xf32, #tpu.memory_space<vmem>>, vector<24x1024xf32>
    %cst_7 = arith.constant dense<0.000000e+00> : vector<96x1024xf32>
    %10 = tpu.matmul %8, %9, %cst_7 {dimension_numbers = #tpu.dot_dimension_numbers<[1], [0], [0], [1], [0, 0, 1, 1], [], []>} : vector<96x24xf32>, vector<24x1024xf32>, vector<96x1024xf32> -> vector<96x1024xf32>
    %11 = arith.addf %7, %10 : vector<96x1024xf32>
    %cst_8 = arith.constant 0.000000e+00 : f32
    %12 = vector.broadcast %cst_8 : f32 to vector<96x1024xf32>
    %13 = arith.maximumf %11, %12 : vector<96x1024xf32>
    %c0_9 = arith.constant 0 : index
    %c0_10 = arith.constant 0 : index
    %14 = vector.load %arg6[%c0_9, %c0_10] : memref<15x96xf32, #tpu.memory_space<vmem>>, vector<15x96xf32>
    %cst_11 = arith.constant dense<0.000000e+00> : vector<15x1024xf32>
    %15 = tpu.matmul %14, %13, %cst_11 {dimension_numbers = #tpu.dot_dimension_numbers<[1], [0], [0], [1], [0, 0, 1, 1], [], []>} : vector<15x96xf32>, vector<96x1024xf32>, vector<15x1024xf32> -> vector<15x1024xf32>
    %c0_12 = arith.constant 0 : index
    %c0_13 = arith.constant 0 : index
    %16 = vector.load %arg7[%c0_12, %c0_13] : memref<15x1xf32, #tpu.memory_space<vmem>>, vector<15x1xf32>
    %17 = vector.broadcast %16 : vector<15x1xf32> to vector<15x1024xf32>
    %18 = arith.addf %15, %17 : vector<15x1024xf32>
    %19 = vector.shape_cast %18 : vector<15x1024xf32> to vector<15x8x128xf32>
    %20 = vector.extract_strided_slice %19 {offsets = [12, 0, 0], sizes = [1, 8, 128], strides = [1, 1, 1]} : vector<15x8x128xf32> to vector<1x8x128xf32>
    %21 = vector.shape_cast %20 : vector<1x8x128xf32> to vector<8x128xf32>
    %22 = arith.negf %21 : vector<8x128xf32>
    %23 = math.exp %22 : vector<8x128xf32>
    %cst_14 = arith.constant 1.000000e+00 : f32
    %24 = vector.broadcast %cst_14 : f32 to vector<8x128xf32>
    %25 = arith.addf %24, %23 : vector<8x128xf32>
    %26 = arith.divf %24, %25 : vector<8x128xf32>
    %27 = vector.extract_strided_slice %19 {offsets = [13, 0, 0], sizes = [1, 8, 128], strides = [1, 1, 1]} : vector<15x8x128xf32> to vector<1x8x128xf32>
    %28 = vector.shape_cast %27 : vector<1x8x128xf32> to vector<8x128xf32>
    %29 = arith.negf %28 : vector<8x128xf32>
    %30 = math.exp %29 : vector<8x128xf32>
    %cst_15 = arith.constant 1.000000e+00 : f32
    %31 = vector.broadcast %cst_15 : f32 to vector<8x128xf32>
    %32 = arith.addf %31, %30 : vector<8x128xf32>
    %33 = arith.divf %31, %32 : vector<8x128xf32>
    %34 = vector.extract_strided_slice %19 {offsets = [14, 0, 0], sizes = [1, 8, 128], strides = [1, 1, 1]} : vector<15x8x128xf32> to vector<1x8x128xf32>
    %35 = vector.shape_cast %34 : vector<1x8x128xf32> to vector<8x128xf32>
    %36 = arith.negf %35 : vector<8x128xf32>
    %37 = math.exp %36 : vector<8x128xf32>
    %cst_16 = arith.constant 1.000000e+00 : f32
    %38 = vector.broadcast %cst_16 : f32 to vector<8x128xf32>
    %39 = arith.addf %38, %37 : vector<8x128xf32>
    %40 = arith.divf %38, %39 : vector<8x128xf32>
    %41 = arith.addf %26, %33 : vector<8x128xf32>
    %42 = arith.addf %41, %40 : vector<8x128xf32>
    %cst_17 = arith.constant 1.000000e-10 : f32
    %43 = vector.broadcast %cst_17 : f32 to vector<8x128xf32>
    %44 = arith.addf %42, %43 : vector<8x128xf32>
    %45 = arith.divf %26, %44 : vector<8x128xf32>
    %c0_18 = arith.constant 0 : index
    %c0_19 = arith.constant 0 : index
    %c0_20 = arith.constant 0 : index
    %46 = vector.load %arg9[%c0_18, %c0_19, %c0_20] : memref<3x8x128xf32, #tpu.memory_space<vmem>>, vector<1x8x128xf32>
    %47 = vector.shape_cast %46 : vector<1x8x128xf32> to vector<8x128xf32>
    %48 = vector.shape_cast %45 : vector<8x128xf32> to vector<1x8x128xf32>
    tpu.vector_store %arg9[%c0_18, %c0_19, %c0_20], %48 {strides = array<i32>} : memref<3x8x128xf32, #tpu.memory_space<vmem>>, vector<1x8x128xf32>,
    %49 = arith.divf %33, %44 : vector<8x128xf32>
    %c1 = arith.constant 1 : index
    %c0_21 = arith.constant 0 : index
    %c0_22 = arith.constant 0 : index
    %50 = vector.load %arg9[%c1, %c0_21, %c0_22] : memref<3x8x128xf32, #tpu.memory_space<vmem>>, vector<1x8x128xf32>
    %51 = vector.shape_cast %50 : vector<1x8x128xf32> to vector<8x128xf32>
    %52 = vector.shape_cast %49 : vector<8x128xf32> to vector<1x8x128xf32>
    tpu.vector_store %arg9[%c1, %c0_21, %c0_22], %52 {strides = array<i32>} : memref<3x8x128xf32, #tpu.memory_space<vmem>>, vector<1x8x128xf32>,
    %53 = arith.divf %40, %44 : vector<8x128xf32>
    %c2 = arith.constant 2 : index
    %c0_23 = arith.constant 0 : index
    %c0_24 = arith.constant 0 : index
    %54 = vector.load %arg9[%c2, %c0_23, %c0_24] : memref<3x8x128xf32, #tpu.memory_space<vmem>>, vector<1x8x128xf32>
    %55 = vector.shape_cast %54 : vector<1x8x128xf32> to vector<8x128xf32>
    %56 = vector.shape_cast %53 : vector<8x128xf32> to vector<1x8x128xf32>
    tpu.vector_store %arg9[%c2, %c0_23, %c0_24], %56 {strides = array<i32>} : memref<3x8x128xf32, #tpu.memory_space<vmem>>, vector<1x8x128xf32>,
    %c0_25 = arith.constant 0 : index
    %c0_26 = arith.constant 0 : index
    %c0_27 = arith.constant 0 : index
    %57 = vector.load %arg3[%c0_25, %c0_26, %c0_27] : memref<6x8x128xf32, #tpu.memory_space<vmem>>, vector<6x8x128xf32>
    %c0_28 = arith.constant 0 : index
    %c0_29 = arith.constant 0 : index
    %c0_30 = arith.constant 0 : index
    %58 = vector.load %arg8[%c0_28, %c0_29, %c0_30] : memref<18x8x128xf32, #tpu.memory_space<vmem>>, vector<6x8x128xf32>
    tpu.vector_store %arg8[%c0_28, %c0_29, %c0_30], %57 {strides = array<i32>} : memref<18x8x128xf32, #tpu.memory_space<vmem>>, vector<6x8x128xf32>,
    %59 = vector.extract_strided_slice %57 {offsets = [0, 0, 0], sizes = [1, 8, 128], strides = [1, 1, 1]} : vector<6x8x128xf32> to vector<1x8x128xf32>
    %60 = vector.shape_cast %59 : vector<1x8x128xf32> to vector<8x128xf32>
    %61 = vector.extract_strided_slice %57 {offsets = [1, 0, 0], sizes = [1, 8, 128], strides = [1, 1, 1]} : vector<6x8x128xf32> to vector<1x8x128xf32>
    %62 = vector.shape_cast %61 : vector<1x8x128xf32> to vector<8x128xf32>
    %63 = vector.extract_strided_slice %57 {offsets = [2, 0, 0], sizes = [1, 8, 128], strides = [1, 1, 1]} : vector<6x8x128xf32> to vector<1x8x128xf32>
    %64 = vector.shape_cast %63 : vector<1x8x128xf32> to vector<8x128xf32>
    %65 = vector.extract_strided_slice %57 {offsets = [3, 0, 0], sizes = [1, 8, 128], strides = [1, 1, 1]} : vector<6x8x128xf32> to vector<1x8x128xf32>
    %66 = vector.shape_cast %65 : vector<1x8x128xf32> to vector<8x128xf32>
    %67 = vector.extract_strided_slice %57 {offsets = [4, 0, 0], sizes = [1, 8, 128], strides = [1, 1, 1]} : vector<6x8x128xf32> to vector<1x8x128xf32>
    %68 = vector.shape_cast %67 : vector<1x8x128xf32> to vector<8x128xf32>
    %69 = vector.extract_strided_slice %57 {offsets = [5, 0, 0], sizes = [1, 8, 128], strides = [1, 1, 1]} : vector<6x8x128xf32> to vector<1x8x128xf32>
    %70 = vector.shape_cast %69 : vector<1x8x128xf32> to vector<8x128xf32>
    %71 = vector.extract_strided_slice %19 {offsets = [0, 0, 0], sizes = [1, 8, 128], strides = [1, 1, 1]} : vector<15x8x128xf32> to vector<1x8x128xf32>
    %72 = vector.shape_cast %71 : vector<1x8x128xf32> to vector<8x128xf32>
    %cst_31 = arith.constant 1.000000e-01 : f32
    %73 = vector.broadcast %cst_31 : f32 to vector<8x128xf32>
    %74 = arith.mulf %72, %73 : vector<8x128xf32>
    %75 = vector.extract_strided_slice %19 {offsets = [2, 0, 0], sizes = [1, 8, 128], strides = [1, 1, 1]} : vector<15x8x128xf32> to vector<1x8x128xf32>
    %76 = vector.shape_cast %75 : vector<1x8x128xf32> to vector<8x128xf32>
    %cst_32 = arith.constant 1.000000e-01 : f32
    %77 = vector.broadcast %cst_32 : f32 to vector<8x128xf32>
    %78 = arith.mulf %76, %77 : vector<8x128xf32>
    %79 = vector.extract_strided_slice %19 {offsets = [4, 0, 0], sizes = [1, 8, 128], strides = [1, 1, 1]} : vector<15x8x128xf32> to vector<1x8x128xf32>
    %80 = vector.shape_cast %79 : vector<1x8x128xf32> to vector<8x128xf32>
    %cst_33 = arith.constant 1.000000e-01 : f32
    %81 = vector.broadcast %cst_33 : f32 to vector<8x128xf32>
    %82 = arith.mulf %80, %81 : vector<8x128xf32>
    %83 = vector.extract_strided_slice %19 {offsets = [6, 0, 0], sizes = [1, 8, 128], strides = [1, 1, 1]} : vector<15x8x128xf32> to vector<1x8x128xf32>
    %84 = vector.shape_cast %83 : vector<1x8x128xf32> to vector<8x128xf32>
    %cst_34 = arith.constant 1.000000e-01 : f32
    %85 = vector.broadcast %cst_34 : f32 to vector<8x128xf32>
    %86 = arith.mulf %84, %85 : vector<8x128xf32>
    %87 = vector.extract_strided_slice %19 {offsets = [8, 0, 0], sizes = [1, 8, 128], strides = [1, 1, 1]} : vector<15x8x128xf32> to vector<1x8x128xf32>
    %88 = vector.shape_cast %87 : vector<1x8x128xf32> to vector<8x128xf32>
    %cst_35 = arith.constant 1.000000e-01 : f32
    %89 = vector.broadcast %cst_35 : f32 to vector<8x128xf32>
    %90 = arith.mulf %88, %89 : vector<8x128xf32>
    %91 = vector.extract_strided_slice %19 {offsets = [10, 0, 0], sizes = [1, 8, 128], strides = [1, 1, 1]} : vector<15x8x128xf32> to vector<1x8x128xf32>
    %92 = vector.shape_cast %91 : vector<1x8x128xf32> to vector<8x128xf32>
    %cst_36 = arith.constant 1.000000e-01 : f32
    %93 = vector.broadcast %cst_36 : f32 to vector<8x128xf32>
    %94 = arith.mulf %92, %93 : vector<8x128xf32>
    %95 = arith.mulf %74, %74 : vector<8x128xf32>
    %96 = arith.mulf %78, %78 : vector<8x128xf32>
    %97 = arith.addf %95, %96 : vector<8x128xf32>
    %98 = arith.mulf %82, %82 : vector<8x128xf32>
    %99 = arith.addf %97, %98 : vector<8x128xf32>
    %cst_37 = arith.constant 9.99999996E-13 : f32
    %100 = vector.broadcast %cst_37 : f32 to vector<8x128xf32>
    %101 = arith.addf %99, %100 : vector<8x128xf32>
    %102 = math.rsqrt %101 : vector<8x128xf32>
    %103 = arith.mulf %99, %102 : vector<8x128xf32>
    %104 = arith.mulf %74, %102 : vector<8x128xf32>
    %105 = arith.mulf %78, %102 : vector<8x128xf32>
    %106 = arith.mulf %82, %102 : vector<8x128xf32>
    %107 = arith.mulf %86, %102 : vector<8x128xf32>
    %108 = arith.mulf %90, %102 : vector<8x128xf32>
    %109 = arith.mulf %94, %102 : vector<8x128xf32>
    %110 = math.sin %103 : vector<8x128xf32>
    %111 = math.cos %103 : vector<8x128xf32>
    %cst_38 = arith.constant 1.000000e+00 : f32
    %112 = vector.broadcast %cst_38 : f32 to vector<8x128xf32>
    %113 = arith.subf %112, %111 : vector<8x128xf32>
    %114 = arith.subf %103, %110 : vector<8x128xf32>
    %115 = arith.mulf %104, %107 : vector<8x128xf32>
    %116 = arith.mulf %105, %108 : vector<8x128xf32>
    %117 = arith.addf %115, %116 : vector<8x128xf32>
    %118 = arith.mulf %106, %109 : vector<8x128xf32>
    %119 = arith.addf %117, %118 : vector<8x128xf32>
    %120 = arith.mulf %103, %107 : vector<8x128xf32>
    %121 = arith.mulf %105, %109 : vector<8x128xf32>
    %122 = arith.mulf %106, %108 : vector<8x128xf32>
    %123 = arith.subf %121, %122 : vector<8x128xf32>
    %124 = arith.mulf %113, %123 : vector<8x128xf32>
    %125 = arith.addf %120, %124 : vector<8x128xf32>
    %126 = arith.mulf %104, %119 : vector<8x128xf32>
    %127 = arith.subf %126, %107 : vector<8x128xf32>
    %128 = arith.mulf %114, %127 : vector<8x128xf32>
    %129 = arith.addf %125, %128 : vector<8x128xf32>
    %130 = arith.mulf %103, %108 : vector<8x128xf32>
    %131 = arith.mulf %106, %107 : vector<8x128xf32>
    %132 = arith.mulf %104, %109 : vector<8x128xf32>
    %133 = arith.subf %131, %132 : vector<8x128xf32>
    %134 = arith.mulf %113, %133 : vector<8x128xf32>
    %135 = arith.addf %130, %134 : vector<8x128xf32>
    %136 = arith.mulf %105, %119 : vector<8x128xf32>
    %137 = arith.subf %136, %108 : vector<8x128xf32>
    %138 = arith.mulf %114, %137 : vector<8x128xf32>
    %139 = arith.addf %135, %138 : vector<8x128xf32>
    %140 = arith.mulf %103, %109 : vector<8x128xf32>
    %141 = arith.mulf %104, %108 : vector<8x128xf32>
    %142 = arith.mulf %105, %107 : vector<8x128xf32>
    %143 = arith.subf %141, %142 : vector<8x128xf32>
    %144 = arith.mulf %113, %143 : vector<8x128xf32>
    %145 = arith.addf %140, %144 : vector<8x128xf32>
    %146 = arith.mulf %106, %119 : vector<8x128xf32>
    %147 = arith.subf %146, %109 : vector<8x128xf32>
    %148 = arith.mulf %114, %147 : vector<8x128xf32>
    %149 = arith.addf %145, %148 : vector<8x128xf32>
    %150 = arith.mulf %104, %60 : vector<8x128xf32>
    %151 = arith.mulf %105, %64 : vector<8x128xf32>
    %152 = arith.addf %150, %151 : vector<8x128xf32>
    %153 = arith.mulf %106, %68 : vector<8x128xf32>
    %154 = arith.addf %152, %153 : vector<8x128xf32>
    %155 = arith.mulf %60, %111 : vector<8x128xf32>
    %156 = arith.mulf %105, %68 : vector<8x128xf32>
    %157 = arith.mulf %106, %64 : vector<8x128xf32>
    %158 = arith.subf %156, %157 : vector<8x128xf32>
    %159 = arith.mulf %158, %110 : vector<8x128xf32>
    %160 = arith.addf %155, %159 : vector<8x128xf32>
    %161 = arith.mulf %104, %154 : vector<8x128xf32>
    %162 = arith.mulf %161, %113 : vector<8x128xf32>
    %163 = arith.addf %160, %162 : vector<8x128xf32>
    %164 = arith.addf %163, %129 : vector<8x128xf32>
    %165 = arith.mulf %64, %111 : vector<8x128xf32>
    %166 = arith.mulf %106, %60 : vector<8x128xf32>
    %167 = arith.mulf %104, %68 : vector<8x128xf32>
    %168 = arith.subf %166, %167 : vector<8x128xf32>
    %169 = arith.mulf %168, %110 : vector<8x128xf32>
    %170 = arith.addf %165, %169 : vector<8x128xf32>
    %171 = arith.mulf %105, %154 : vector<8x128xf32>
    %172 = arith.mulf %171, %113 : vector<8x128xf32>
    %173 = arith.addf %170, %172 : vector<8x128xf32>
    %174 = arith.addf %173, %139 : vector<8x128xf32>
    %175 = arith.mulf %68, %111 : vector<8x128xf32>
    %176 = arith.mulf %104, %64 : vector<8x128xf32>
    %177 = arith.mulf %105, %60 : vector<8x128xf32>
    %178 = arith.subf %176, %177 : vector<8x128xf32>
    %179 = arith.mulf %178, %110 : vector<8x128xf32>
    %180 = arith.addf %175, %179 : vector<8x128xf32>
    %181 = arith.mulf %106, %154 : vector<8x128xf32>
    %182 = arith.mulf %181, %113 : vector<8x128xf32>
    %183 = arith.addf %180, %182 : vector<8x128xf32>
    %184 = arith.addf %183, %149 : vector<8x128xf32>
    %c6 = arith.constant 6 : index
    %c0_39 = arith.constant 0 : index
    %c0_40 = arith.constant 0 : index
    %185 = vector.load %arg8[%c6, %c0_39, %c0_40] : memref<18x8x128xf32, #tpu.memory_space<vmem>>, vector<1x8x128xf32>
    %186 = vector.shape_cast %185 : vector<1x8x128xf32> to vector<8x128xf32>
    %187 = vector.shape_cast %164 : vector<8x128xf32> to vector<1x8x128xf32>
    tpu.vector_store %arg8[%c6, %c0_39, %c0_40], %187 {strides = array<i32>} : memref<18x8x128xf32, #tpu.memory_space<vmem>>, vector<1x8x128xf32>,
    %c8 = arith.constant 8 : index
    %c0_41 = arith.constant 0 : index
    %c0_42 = arith.constant 0 : index
    %188 = vector.load %arg8[%c8, %c0_41, %c0_42] : memref<18x8x128xf32, #tpu.memory_space<vmem>>, vector<1x8x128xf32>
    %189 = vector.shape_cast %188 : vector<1x8x128xf32> to vector<8x128xf32>
    %190 = vector.shape_cast %174 : vector<8x128xf32> to vector<1x8x128xf32>
    tpu.vector_store %arg8[%c8, %c0_41, %c0_42], %190 {strides = array<i32>} : memref<18x8x128xf32, #tpu.memory_space<vmem>>, vector<1x8x128xf32>,
    %c10 = arith.constant 10 : index
    %c0_43 = arith.constant 0 : index
    %c0_44 = arith.constant 0 : index
    %191 = vector.load %arg8[%c10, %c0_43, %c0_44] : memref<18x8x128xf32, #tpu.memory_space<vmem>>, vector<1x8x128xf32>
    %192 = vector.shape_cast %191 : vector<1x8x128xf32> to vector<8x128xf32>
    %193 = vector.shape_cast %184 : vector<8x128xf32> to vector<1x8x128xf32>
    tpu.vector_store %arg8[%c10, %c0_43, %c0_44], %193 {strides = array<i32>} : memref<18x8x128xf32, #tpu.memory_space<vmem>>, vector<1x8x128xf32>,
    %194 = arith.addf %60, %62 : vector<8x128xf32>
    %195 = arith.addf %64, %66 : vector<8x128xf32>
    %196 = arith.addf %68, %70 : vector<8x128xf32>
    %197 = arith.mulf %104, %194 : vector<8x128xf32>
    %198 = arith.mulf %105, %195 : vector<8x128xf32>
    %199 = arith.addf %197, %198 : vector<8x128xf32>
    %200 = arith.mulf %106, %196 : vector<8x128xf32>
    %201 = arith.addf %199, %200 : vector<8x128xf32>
    %202 = arith.mulf %194, %111 : vector<8x128xf32>
    %203 = arith.mulf %105, %196 : vector<8x128xf32>
    %204 = arith.mulf %106, %195 : vector<8x128xf32>
    %205 = arith.subf %203, %204 : vector<8x128xf32>
    %206 = arith.mulf %205, %110 : vector<8x128xf32>
    %207 = arith.addf %202, %206 : vector<8x128xf32>
    %208 = arith.mulf %104, %201 : vector<8x128xf32>
    %209 = arith.mulf %208, %113 : vector<8x128xf32>
    %210 = arith.addf %207, %209 : vector<8x128xf32>
    %211 = arith.addf %210, %129 : vector<8x128xf32>
    %212 = arith.subf %211, %164 : vector<8x128xf32>
    %c7 = arith.constant 7 : index
    %c0_45 = arith.constant 0 : index
    %c0_46 = arith.constant 0 : index
    %213 = vector.load %arg8[%c7, %c0_45, %c0_46] : memref<18x8x128xf32, #tpu.memory_space<vmem>>, vector<1x8x128xf32>
    %214 = vector.shape_cast %213 : vector<1x8x128xf32> to vector<8x128xf32>
    %215 = vector.shape_cast %212 : vector<8x128xf32> to vector<1x8x128xf32>
    tpu.vector_store %arg8[%c7, %c0_45, %c0_46], %215 {strides = array<i32>} : memref<18x8x128xf32, #tpu.memory_space<vmem>>, vector<1x8x128xf32>,
    %216 = arith.mulf %195, %111 : vector<8x128xf32>
    %217 = arith.mulf %106, %194 : vector<8x128xf32>
    %218 = arith.mulf %104, %196 : vector<8x128xf32>
    %219 = arith.subf %217, %218 : vector<8x128xf32>
    %220 = arith.mulf %219, %110 : vector<8x128xf32>
    %221 = arith.addf %216, %220 : vector<8x128xf32>
    %222 = arith.mulf %105, %201 : vector<8x128xf32>
    %223 = arith.mulf %222, %113 : vector<8x128xf32>
    %224 = arith.addf %221, %223 : vector<8x128xf32>
    %225 = arith.addf %224, %139 : vector<8x128xf32>
    %226 = arith.subf %225, %174 : vector<8x128xf32>
    %c9 = arith.constant 9 : index
    %c0_47 = arith.constant 0 : index
    %c0_48 = arith.constant 0 : index
    %227 = vector.load %arg8[%c9, %c0_47, %c0_48] : memref<18x8x128xf32, #tpu.memory_space<vmem>>, vector<1x8x128xf32>
    %228 = vector.shape_cast %227 : vector<1x8x128xf32> to vector<8x128xf32>
    %229 = vector.shape_cast %226 : vector<8x128xf32> to vector<1x8x128xf32>
    tpu.vector_store %arg8[%c9, %c0_47, %c0_48], %229 {strides = array<i32>} : memref<18x8x128xf32, #tpu.memory_space<vmem>>, vector<1x8x128xf32>,
    %230 = arith.mulf %196, %111 : vector<8x128xf32>
    %231 = arith.mulf %104, %195 : vector<8x128xf32>
    %232 = arith.mulf %105, %194 : vector<8x128xf32>
    %233 = arith.subf %231, %232 : vector<8x128xf32>
    %234 = arith.mulf %233, %110 : vector<8x128xf32>
    %235 = arith.addf %230, %234 : vector<8x128xf32>
    %236 = arith.mulf %106, %201 : vector<8x128xf32>
    %237 = arith.mulf %236, %113 : vector<8x128xf32>
    %238 = arith.addf %235, %237 : vector<8x128xf32>
    %239 = arith.addf %238, %149 : vector<8x128xf32>
    %240 = arith.subf %239, %184 : vector<8x128xf32>
    %c11 = arith.constant 11 : index
    %c0_49 = arith.constant 0 : index
    %c0_50 = arith.constant 0 : index
    %241 = vector.load %arg8[%c11, %c0_49, %c0_50] : memref<18x8x128xf32, #tpu.memory_space<vmem>>, vector<1x8x128xf32>
    %242 = vector.shape_cast %241 : vector<1x8x128xf32> to vector<8x128xf32>
    %243 = vector.shape_cast %240 : vector<8x128xf32> to vector<1x8x128xf32>
    tpu.vector_store %arg8[%c11, %c0_49, %c0_50], %243 {strides = array<i32>} : memref<18x8x128xf32, #tpu.memory_space<vmem>>, vector<1x8x128xf32>,
    %244 = vector.extract_strided_slice %19 {offsets = [1, 0, 0], sizes = [1, 8, 128], strides = [1, 1, 1]} : vector<15x8x128xf32> to vector<1x8x128xf32>
    %245 = vector.shape_cast %244 : vector<1x8x128xf32> to vector<8x128xf32>
    %cst_51 = arith.constant 1.000000e-01 : f32
    %246 = vector.broadcast %cst_51 : f32 to vector<8x128xf32>
    %247 = arith.mulf %245, %246 : vector<8x128xf32>
    %248 = vector.extract_strided_slice %19 {offsets = [3, 0, 0], sizes = [1, 8, 128], strides = [1, 1, 1]} : vector<15x8x128xf32> to vector<1x8x128xf32>
    %249 = vector.shape_cast %248 : vector<1x8x128xf32> to vector<8x128xf32>
    %cst_52 = arith.constant 1.000000e-01 : f32
    %250 = vector.broadcast %cst_52 : f32 to vector<8x128xf32>
    %251 = arith.mulf %249, %250 : vector<8x128xf32>
    %252 = vector.extract_strided_slice %19 {offsets = [5, 0, 0], sizes = [1, 8, 128], strides = [1, 1, 1]} : vector<15x8x128xf32> to vector<1x8x128xf32>
    %253 = vector.shape_cast %252 : vector<1x8x128xf32> to vector<8x128xf32>
    %cst_53 = arith.constant 1.000000e-01 : f32
    %254 = vector.broadcast %cst_53 : f32 to vector<8x128xf32>
    %255 = arith.mulf %253, %254 : vector<8x128xf32>
    %256 = vector.extract_strided_slice %19 {offsets = [7, 0, 0], sizes = [1, 8, 128], strides = [1, 1, 1]} : vector<15x8x128xf32> to vector<1x8x128xf32>
    %257 = vector.shape_cast %256 : vector<1x8x128xf32> to vector<8x128xf32>
    %cst_54 = arith.constant 1.000000e-01 : f32
    %258 = vector.broadcast %cst_54 : f32 to vector<8x128xf32>
    %259 = arith.mulf %257, %258 : vector<8x128xf32>
    %260 = vector.extract_strided_slice %19 {offsets = [9, 0, 0], sizes = [1, 8, 128], strides = [1, 1, 1]} : vector<15x8x128xf32> to vector<1x8x128xf32>
    %261 = vector.shape_cast %260 : vector<1x8x128xf32> to vector<8x128xf32>
    %cst_55 = arith.constant 1.000000e-01 : f32
    %262 = vector.broadcast %cst_55 : f32 to vector<8x128xf32>
    %263 = arith.mulf %261, %262 : vector<8x128xf32>
    %264 = vector.extract_strided_slice %19 {offsets = [11, 0, 0], sizes = [1, 8, 128], strides = [1, 1, 1]} : vector<15x8x128xf32> to vector<1x8x128xf32>
    %265 = vector.shape_cast %264 : vector<1x8x128xf32> to vector<8x128xf32>
    %cst_56 = arith.constant 1.000000e-01 : f32
    %266 = vector.broadcast %cst_56 : f32 to vector<8x128xf32>
    %267 = arith.mulf %265, %266 : vector<8x128xf32>
    %268 = arith.mulf %247, %247 : vector<8x128xf32>
    %269 = arith.mulf %251, %251 : vector<8x128xf32>
    %270 = arith.addf %268, %269 : vector<8x128xf32>
    %271 = arith.mulf %255, %255 : vector<8x128xf32>
    %272 = arith.addf %270, %271 : vector<8x128xf32>
    %cst_57 = arith.constant 9.99999996E-13 : f32
    %273 = vector.broadcast %cst_57 : f32 to vector<8x128xf32>
    %274 = arith.addf %272, %273 : vector<8x128xf32>
    %275 = math.rsqrt %274 : vector<8x128xf32>
    %276 = arith.mulf %272, %275 : vector<8x128xf32>
    %277 = arith.mulf %247, %275 : vector<8x128xf32>
    %278 = arith.mulf %251, %275 : vector<8x128xf32>
    %279 = arith.mulf %255, %275 : vector<8x128xf32>
    %280 = arith.mulf %259, %275 : vector<8x128xf32>
    %281 = arith.mulf %263, %275 : vector<8x128xf32>
    %282 = arith.mulf %267, %275 : vector<8x128xf32>
    %283 = math.sin %276 : vector<8x128xf32>
    %284 = math.cos %276 : vector<8x128xf32>
    %cst_58 = arith.constant 1.000000e+00 : f32
    %285 = vector.broadcast %cst_58 : f32 to vector<8x128xf32>
    %286 = arith.subf %285, %284 : vector<8x128xf32>
    %287 = arith.subf %276, %283 : vector<8x128xf32>
    %288 = arith.mulf %277, %280 : vector<8x128xf32>
    %289 = arith.mulf %278, %281 : vector<8x128xf32>
    %290 = arith.addf %288, %289 : vector<8x128xf32>
    %291 = arith.mulf %279, %282 : vector<8x128xf32>
    %292 = arith.addf %290, %291 : vector<8x128xf32>
    %293 = arith.mulf %276, %280 : vector<8x128xf32>
    %294 = arith.mulf %278, %282 : vector<8x128xf32>
    %295 = arith.mulf %279, %281 : vector<8x128xf32>
    %296 = arith.subf %294, %295 : vector<8x128xf32>
    %297 = arith.mulf %286, %296 : vector<8x128xf32>
    %298 = arith.addf %293, %297 : vector<8x128xf32>
    %299 = arith.mulf %277, %292 : vector<8x128xf32>
    %300 = arith.subf %299, %280 : vector<8x128xf32>
    %301 = arith.mulf %287, %300 : vector<8x128xf32>
    %302 = arith.addf %298, %301 : vector<8x128xf32>
    %303 = arith.mulf %276, %281 : vector<8x128xf32>
    %304 = arith.mulf %279, %280 : vector<8x128xf32>
    %305 = arith.mulf %277, %282 : vector<8x128xf32>
    %306 = arith.subf %304, %305 : vector<8x128xf32>
    %307 = arith.mulf %286, %306 : vector<8x128xf32>
    %308 = arith.addf %303, %307 : vector<8x128xf32>
    %309 = arith.mulf %278, %292 : vector<8x128xf32>
    %310 = arith.subf %309, %281 : vector<8x128xf32>
    %311 = arith.mulf %287, %310 : vector<8x128xf32>
    %312 = arith.addf %308, %311 : vector<8x128xf32>
    %313 = arith.mulf %276, %282 : vector<8x128xf32>
    %314 = arith.mulf %277, %281 : vector<8x128xf32>
    %315 = arith.mulf %278, %280 : vector<8x128xf32>
    %316 = arith.subf %314, %315 : vector<8x128xf32>
    %317 = arith.mulf %286, %316 : vector<8x128xf32>
    %318 = arith.addf %313, %317 : vector<8x128xf32>
    %319 = arith.mulf %279, %292 : vector<8x128xf32>
    %320 = arith.subf %319, %282 : vector<8x128xf32>
    %321 = arith.mulf %287, %320 : vector<8x128xf32>
    %322 = arith.addf %318, %321 : vector<8x128xf32>
    %323 = arith.mulf %277, %60 : vector<8x128xf32>
    %324 = arith.mulf %278, %64 : vector<8x128xf32>
    %325 = arith.addf %323, %324 : vector<8x128xf32>
    %326 = arith.mulf %279, %68 : vector<8x128xf32>
    %327 = arith.addf %325, %326 : vector<8x128xf32>
    %328 = arith.mulf %60, %284 : vector<8x128xf32>
    %329 = arith.mulf %278, %68 : vector<8x128xf32>
    %330 = arith.mulf %279, %64 : vector<8x128xf32>
    %331 = arith.subf %329, %330 : vector<8x128xf32>
    %332 = arith.mulf %331, %283 : vector<8x128xf32>
    %333 = arith.addf %328, %332 : vector<8x128xf32>
    %334 = arith.mulf %277, %327 : vector<8x128xf32>
    %335 = arith.mulf %334, %286 : vector<8x128xf32>
    %336 = arith.addf %333, %335 : vector<8x128xf32>
    %337 = arith.addf %336, %302 : vector<8x128xf32>
    %338 = arith.mulf %64, %284 : vector<8x128xf32>
    %339 = arith.mulf %279, %60 : vector<8x128xf32>
    %340 = arith.mulf %277, %68 : vector<8x128xf32>
    %341 = arith.subf %339, %340 : vector<8x128xf32>
    %342 = arith.mulf %341, %283 : vector<8x128xf32>
    %343 = arith.addf %338, %342 : vector<8x128xf32>
    %344 = arith.mulf %278, %327 : vector<8x128xf32>
    %345 = arith.mulf %344, %286 : vector<8x128xf32>
    %346 = arith.addf %343, %345 : vector<8x128xf32>
    %347 = arith.addf %346, %312 : vector<8x128xf32>
    %348 = arith.mulf %68, %284 : vector<8x128xf32>
    %349 = arith.mulf %277, %64 : vector<8x128xf32>
    %350 = arith.mulf %278, %60 : vector<8x128xf32>
    %351 = arith.subf %349, %350 : vector<8x128xf32>
    %352 = arith.mulf %351, %283 : vector<8x128xf32>
    %353 = arith.addf %348, %352 : vector<8x128xf32>
    %354 = arith.mulf %279, %327 : vector<8x128xf32>
    %355 = arith.mulf %354, %286 : vector<8x128xf32>
    %356 = arith.addf %353, %355 : vector<8x128xf32>
    %357 = arith.addf %356, %322 : vector<8x128xf32>
    %c12 = arith.constant 12 : index
    %c0_59 = arith.constant 0 : index
    %c0_60 = arith.constant 0 : index
    %358 = vector.load %arg8[%c12, %c0_59, %c0_60] : memref<18x8x128xf32, #tpu.memory_space<vmem>>, vector<1x8x128xf32>
    %359 = vector.shape_cast %358 : vector<1x8x128xf32> to vector<8x128xf32>
    %360 = vector.shape_cast %337 : vector<8x128xf32> to vector<1x8x128xf32>
    tpu.vector_store %arg8[%c12, %c0_59, %c0_60], %360 {strides = array<i32>} : memref<18x8x128xf32, #tpu.memory_space<vmem>>, vector<1x8x128xf32>,
    %c14 = arith.constant 14 : index
    %c0_61 = arith.constant 0 : index
    %c0_62 = arith.constant 0 : index
    %361 = vector.load %arg8[%c14, %c0_61, %c0_62] : memref<18x8x128xf32, #tpu.memory_space<vmem>>, vector<1x8x128xf32>
    %362 = vector.shape_cast %361 : vector<1x8x128xf32> to vector<8x128xf32>
    %363 = vector.shape_cast %347 : vector<8x128xf32> to vector<1x8x128xf32>
    tpu.vector_store %arg8[%c14, %c0_61, %c0_62], %363 {strides = array<i32>} : memref<18x8x128xf32, #tpu.memory_space<vmem>>, vector<1x8x128xf32>,
    %c16 = arith.constant 16 : index
    %c0_63 = arith.constant 0 : index
    %c0_64 = arith.constant 0 : index
    %364 = vector.load %arg8[%c16, %c0_63, %c0_64] : memref<18x8x128xf32, #tpu.memory_space<vmem>>, vector<1x8x128xf32>
    %365 = vector.shape_cast %364 : vector<1x8x128xf32> to vector<8x128xf32>
    %366 = vector.shape_cast %357 : vector<8x128xf32> to vector<1x8x128xf32>
    tpu.vector_store %arg8[%c16, %c0_63, %c0_64], %366 {strides = array<i32>} : memref<18x8x128xf32, #tpu.memory_space<vmem>>, vector<1x8x128xf32>,
    %367 = arith.addf %60, %62 : vector<8x128xf32>
    %368 = arith.addf %64, %66 : vector<8x128xf32>
    %369 = arith.addf %68, %70 : vector<8x128xf32>
    %370 = arith.mulf %277, %367 : vector<8x128xf32>
    %371 = arith.mulf %278, %368 : vector<8x128xf32>
    %372 = arith.addf %370, %371 : vector<8x128xf32>
    %373 = arith.mulf %279, %369 : vector<8x128xf32>
    %374 = arith.addf %372, %373 : vector<8x128xf32>
    %375 = arith.mulf %367, %284 : vector<8x128xf32>
    %376 = arith.mulf %278, %369 : vector<8x128xf32>
    %377 = arith.mulf %279, %368 : vector<8x128xf32>
    %378 = arith.subf %376, %377 : vector<8x128xf32>
    %379 = arith.mulf %378, %283 : vector<8x128xf32>
    %380 = arith.addf %375, %379 : vector<8x128xf32>
    %381 = arith.mulf %277, %374 : vector<8x128xf32>
    %382 = arith.mulf %381, %286 : vector<8x128xf32>
    %383 = arith.addf %380, %382 : vector<8x128xf32>
    %384 = arith.addf %383, %302 : vector<8x128xf32>
    %385 = arith.subf %384, %337 : vector<8x128xf32>
    %c13 = arith.constant 13 : index
    %c0_65 = arith.constant 0 : index
    %c0_66 = arith.constant 0 : index
    %386 = vector.load %arg8[%c13, %c0_65, %c0_66] : memref<18x8x128xf32, #tpu.memory_space<vmem>>, vector<1x8x128xf32>
    %387 = vector.shape_cast %386 : vector<1x8x128xf32> to vector<8x128xf32>
    %388 = vector.shape_cast %385 : vector<8x128xf32> to vector<1x8x128xf32>
    tpu.vector_store %arg8[%c13, %c0_65, %c0_66], %388 {strides = array<i32>} : memref<18x8x128xf32, #tpu.memory_space<vmem>>, vector<1x8x128xf32>,
    %389 = arith.mulf %368, %284 : vector<8x128xf32>
    %390 = arith.mulf %279, %367 : vector<8x128xf32>
    %391 = arith.mulf %277, %369 : vector<8x128xf32>
    %392 = arith.subf %390, %391 : vector<8x128xf32>
    %393 = arith.mulf %392, %283 : vector<8x128xf32>
    %394 = arith.addf %389, %393 : vector<8x128xf32>
    %395 = arith.mulf %278, %374 : vector<8x128xf32>
    %396 = arith.mulf %395, %286 : vector<8x128xf32>
    %397 = arith.addf %394, %396 : vector<8x128xf32>
    %398 = arith.addf %397, %312 : vector<8x128xf32>
    %399 = arith.subf %398, %347 : vector<8x128xf32>
    %c15 = arith.constant 15 : index
    %c0_67 = arith.constant 0 : index
    %c0_68 = arith.constant 0 : index
    %400 = vector.load %arg8[%c15, %c0_67, %c0_68] : memref<18x8x128xf32, #tpu.memory_space<vmem>>, vector<1x8x128xf32>
    %401 = vector.shape_cast %400 : vector<1x8x128xf32> to vector<8x128xf32>
    %402 = vector.shape_cast %399 : vector<8x128xf32> to vector<1x8x128xf32>
    tpu.vector_store %arg8[%c15, %c0_67, %c0_68], %402 {strides = array<i32>} : memref<18x8x128xf32, #tpu.memory_space<vmem>>, vector<1x8x128xf32>,
    %403 = arith.mulf %369, %284 : vector<8x128xf32>
    %404 = arith.mulf %277, %368 : vector<8x128xf32>
    %405 = arith.mulf %278, %367 : vector<8x128xf32>
    %406 = arith.subf %404, %405 : vector<8x128xf32>
    %407 = arith.mulf %406, %283 : vector<8x128xf32>
    %408 = arith.addf %403, %407 : vector<8x128xf32>
    %409 = arith.mulf %279, %374 : vector<8x128xf32>
    %410 = arith.mulf %409, %286 : vector<8x128xf32>
    %411 = arith.addf %408, %410 : vector<8x128xf32>
    %412 = arith.addf %411, %322 : vector<8x128xf32>
    %413 = arith.subf %412, %357 : vector<8x128xf32>
    %c17 = arith.constant 17 : index
    %c0_69 = arith.constant 0 : index
    %c0_70 = arith.constant 0 : index
    %414 = vector.load %arg8[%c17, %c0_69, %c0_70] : memref<18x8x128xf32, #tpu.memory_space<vmem>>, vector<1x8x128xf32>
    %415 = vector.shape_cast %414 : vector<1x8x128xf32> to vector<8x128xf32>
    %416 = vector.shape_cast %413 : vector<8x128xf32> to vector<1x8x128xf32>
    tpu.vector_store %arg8[%c17, %c0_69, %c0_70], %416 {strides = array<i32>} : memref<18x8x128xf32, #tpu.memory_space<vmem>>, vector<1x8x128xf32>,
    return
  }
  func.func @transform_0(%arg0: i32) -> (i32, i32) {
    %c0_i32 = arith.constant 0 : i32
    %c0_i32_0 = arith.constant 0 : i32
    return %c0_i32, %arg0 : i32, i32
  }
  func.func @transform_1(%arg0: i32) -> (i32, i32) {
    %c0_i32 = arith.constant 0 : i32
    %c0_i32_0 = arith.constant 0 : i32
    return %c0_i32, %arg0 : i32, i32
  }
  func.func @transform_2(%arg0: i32) -> (i32, i32, i32) {
    %c0_i32 = arith.constant 0 : i32
    %c0_i32_0 = arith.constant 0 : i32
    %c0_i32_1 = arith.constant 0 : i32
    return %c0_i32, %arg0, %c0_i32_0 : i32, i32, i32
  }
  func.func @transform_3(%arg0: i32) -> (i32, i32) {
    %c0_i32 = arith.constant 0 : i32
    %c0_i32_0 = arith.constant 0 : i32
    %c0_i32_1 = arith.constant 0 : i32
    return %c0_i32, %c0_i32_0 : i32, i32
  }
  func.func @transform_4(%arg0: i32) -> (i32, i32) {
    %c0_i32 = arith.constant 0 : i32
    %c0_i32_0 = arith.constant 0 : i32
    %c0_i32_1 = arith.constant 0 : i32
    return %c0_i32, %c0_i32_0 : i32, i32
  }
  func.func @transform_5(%arg0: i32) -> (i32, i32) {
    %c0_i32 = arith.constant 0 : i32
    %c0_i32_0 = arith.constant 0 : i32
    %c0_i32_1 = arith.constant 0 : i32
    return %c0_i32, %c0_i32_0 : i32, i32
  }
  func.func @transform_6(%arg0: i32) -> (i32, i32) {
    %c0_i32 = arith.constant 0 : i32
    %c0_i32_0 = arith.constant 0 : i32
    %c0_i32_1 = arith.constant 0 : i32
    return %c0_i32, %c0_i32_0 : i32, i32
  }
  func.func @transform_7(%arg0: i32) -> (i32, i32, i32) {
    %c0_i32 = arith.constant 0 : i32
    %c0_i32_0 = arith.constant 0 : i32
    %c0_i32_1 = arith.constant 0 : i32
    return %c0_i32, %arg0, %c0_i32_0 : i32, i32, i32
  }
  func.func @transform_8(%arg0: i32) -> (i32, i32, i32) {
    %c0_i32 = arith.constant 0 : i32
    %c0_i32_0 = arith.constant 0 : i32
    %c0_i32_1 = arith.constant 0 : i32
    return %c0_i32, %arg0, %c0_i32_0 : i32, i32, i32
  }
}

</mosaic_0001>

<llo_original>
// kernel: tpu_custom_call.1
$region0: #{tpu_custom_call.1}
  #allocation0 [shape = 'u32[]', space=smem, size = 0x4, offset = 0x4, fixed_abs, tag = 'smem constant byte address 0x4 - core index']
  #allocation1 [shape = 'u32[144,128]{1,0:T(1,128)}', space=vmem, size = 0x12000, scoped, tag = 'internal scratch']
  %s0 = inlined_call_operand.hbm [shape: s32[1,1024], index: 0, kind: input, shape index: {}]
  %s1 = inlined_call_operand.vmem [shape: f32[24,1024], index: 1, kind: input, shape index: {}]
  %s2 = inlined_call_operand.vmem [shape: f32[6,8,128], index: 2, kind: input, shape index: {}]
  %s3 = inlined_call_operand.vmem [shape: f32[96,8], index: 3, kind: input, shape index: {}]
  %s4 = inlined_call_operand.vmem [shape: f32[96,24], index: 4, kind: input, shape index: {}]
  %s5 = inlined_call_operand.vmem [shape: f32[15,96], index: 5, kind: input, shape index: {}]
  %s6 = inlined_call_operand.vmem [shape: f32[15,1], index: 6, kind: input, shape index: {}]
  %s7 = inlined_call_operand.hbm [shape: f32[18,8,128], index: 7, kind: output, shape index: {0}]
  %s8 = inlined_call_operand.hbm [shape: f32[3,8,128], index: 8, kind: output, shape index: {1}]
  %9 = xla_tuple %s7, %s8
  %s10 = sld [smem:[#allocation0]]
  $region50: #{tpu_custom_call.1} parent=0
    _
  %s12 = ssub.s32 1, %s10
  %s13 = scalar_select 0, %s12, %s10
  $region1: #{tpu_custom_call.1} parent=0
    #allocation2 [shape = 'u8[4096]{0}', space=vmem, size = 0x1000, scoped, tag = 'input window, operand 0, single buffered']
    #allocation3 [shape = 's32[1]{0}', space=sflag, size = 0x4, scoped, tag = 'scoped memory for tpu_custom_call.1']
    #allocation4 [shape = 's32[1]{0}', space=sflag, size = 0x4, scoped, tag = 'scoped memory for tpu_custom_call.1']
    #allocation5 [shape = 'u8[73728]{0}', space=vmem, size = 0x12000, scoped, tag = 'output window, operand 0, single buffered']
    #allocation6 [shape = 'u8[12288]{0}', space=vmem, size = 0x3000, scoped, tag = 'output window, operand 1, single buffered']
    #allocation7 [shape = 's32[1]{0}', space=sflag, size = 0x4, scoped, tag = 'scoped memory for tpu_custom_call.1']
    %14 = vsyncpa [#allocation3], 0
    %15 = vsyncpa [#allocation4], 0
    %16 = vsyncpa [#allocation7], 0
    // Predicated region
    $region2: #{tpu_custom_call.1} parent=1 // pred_check
      _
    $region3: #{tpu_custom_call.1} parent=1 // pred_check_branch
      %18 = sbr.rel (0) target = $region5
    $region4: #{tpu_custom_call.1} parent=1 // pred_region
      %s20 = ssub.s32 128, 128
      %21 = vsyncadd [#allocation3], %s20
      %s23 = sshll.u32 [#allocation2], 4
      %s24 = int_to_ptr.vmem [resolvable:$true] %s23
      %26 = dma.hbm_to_vmem [thread:$0]  %s0, 128, %s24, [#allocation3]
    $region5: #{tpu_custom_call.1} parent=1 // pred_fallthru
      _
    // Predicated region
    $region6: #{tpu_custom_call.1} parent=1 // pred_check
      _
    $region7: #{tpu_custom_call.1} parent=1 // pred_check_branch
      %28 = sbr.rel (0) target = $region9
    $region8: #{tpu_custom_call.1} parent=1 // pred_region
      _
    $region9: #{tpu_custom_call.1} parent=1 // pred_fallthru
      _
    // Predicated region
    $region10: #{tpu_custom_call.1} parent=1 // pred_check
      _
    $region11: #{tpu_custom_call.1} parent=1 // pred_check_branch
      %30 = sbr.rel (0) target = $region13
    $region12: #{tpu_custom_call.1} parent=1 // pred_region
      _
    $region13: #{tpu_custom_call.1} parent=1 // pred_fallthru
      _
    // Predicated region
    $region14: #{tpu_custom_call.1} parent=1 // pred_check
      _
    $region15: #{tpu_custom_call.1} parent=1 // pred_check_branch
      %32 = sbr.rel (0) target = $region17
    $region16: #{tpu_custom_call.1} parent=1 // pred_region
      _
    $region17: #{tpu_custom_call.1} parent=1 // pred_fallthru
      _
    // Predicated region
    $region18: #{tpu_custom_call.1} parent=1 // pred_check
      _
    $region19: #{tpu_custom_call.1} parent=1 // pred_check_branch
      %34 = sbr.rel (0) target = $region21
    $region20: #{tpu_custom_call.1} parent=1 // pred_region
      _
    $region21: #{tpu_custom_call.1} parent=1 // pred_fallthru
      _
    // Predicated region
    $region22: #{tpu_custom_call.1} parent=1 // pred_check
      _
    $region23: #{tpu_custom_call.1} parent=1 // pred_check_branch
      %36 = sbr.rel (0) target = $region25
    $region24: #{tpu_custom_call.1} parent=1 // pred_region
      _
    $region25: #{tpu_custom_call.1} parent=1 // pred_fallthru
      _
    // Predicated region
    $region26: #{tpu_custom_call.1} parent=1 // pred_check
      _
    $region27: #{tpu_custom_call.1} parent=1 // pred_check_branch
      %38 = sbr.rel (0) target = $region29
    $region28: #{tpu_custom_call.1} parent=1 // pred_region
      _
    $region29: #{tpu_custom_call.1} parent=1 // pred_fallthru
      _
    // Predicated region
    $region30: #{tpu_custom_call.1} parent=1 // pred_check
      _
    $region31: #{tpu_custom_call.1} parent=1 // pred_check_branch
      %40 = sbr.rel (0) target = $region33
    $region32: #{tpu_custom_call.1} parent=1 // pred_region
      %41 = dma.done [#allocation3], 128
    $region33: #{tpu_custom_call.1} parent=1 // pred_fallthru
      _
    %v42 = vlaneseq
    %v43 = vshrl.u32 %v42, 7
    %v44 = vld [vmem:[#allocation2] sm:$0xff]
    %v45 = vlaneseq
    %v46 = vshrl.u32 %v45, 7
    %v47 = vsub.s32 0, %v46
    %v48 = vrot.slane %v44, %v47
    %v49 = vlaneseq
    %v50 = vshrl.u32 %v49, 7
    %v51 = vsub.s32 1, %v50
    %v52 = vrot.slane %v44, %v51
    %v53 = vlaneseq
    %v54 = vshrl.u32 %v53, 7
    %v55 = vsub.s32 2, %v54
    %v56 = vrot.slane %v44, %v55
    %v57 = vlaneseq
    %v58 = vshrl.u32 %v57, 7
    %v59 = vsub.s32 3, %v58
    %v60 = vrot.slane %v44, %v59
    %v61 = vlaneseq
    %v62 = vshrl.u32 %v61, 7
    %v63 = vsub.s32 4, %v62
    %v64 = vrot.slane %v44, %v63
    %v65 = vlaneseq
    %v66 = vshrl.u32 %v65, 7
    %v67 = vsub.s32 5, %v66
    %v68 = vrot.slane %v44, %v67
    %v69 = vlaneseq
    %v70 = vshrl.u32 %v69, 7
    %v71 = vsub.s32 6, %v70
    %v72 = vrot.slane %v44, %v71
    %v73 = vlaneseq
    %v74 = vshrl.u32 %v73, 7
    %v75 = vsub.s32 7, %v74
    %v76 = vrot.slane %v44, %v75
    %vm77 = vcmp.eq.s32.totalorder %v43, %v48
    %vm78 = vcmp.eq.s32.totalorder %v43, %v52
    %vm79 = vcmp.eq.s32.totalorder %v43, %v56
    %vm80 = vcmp.eq.s32.totalorder %v43, %v60
    %vm81 = vcmp.eq.s32.totalorder %v43, %v64
    %vm82 = vcmp.eq.s32.totalorder %v43, %v68
    %vm83 = vcmp.eq.s32.totalorder %v43, %v72
    %vm84 = vcmp.eq.s32.totalorder %v43, %v76
    %v85 = vsel %vm77, 1, 0
    %v86 = vsel %vm78, 1, 0
    %v87 = vsel %vm79, 1, 0
    %v88 = vsel %vm80, 1, 0
    %v89 = vsel %vm81, 1, 0
    %v90 = vsel %vm82, 1, 0
    %v91 = vsel %vm83, 1, 0
    %v92 = vsel %vm84, 1, 0
    %v93 = vcvt.s32.f32 %v85
    %v94 = vcvt.s32.f32 %v86
    %v95 = vcvt.s32.f32 %v87
    %v96 = vcvt.s32.f32 %v88
    %v97 = vcvt.s32.f32 %v89
    %v98 = vcvt.s32.f32 %v90
    %v99 = vcvt.s32.f32 %v91
    %v100 = vcvt.s32.f32 %v92
    %v101 = vld [vmem:[%s3] sm:$0xff]
    %v102 = vld [vmem:[%s3 + $0x8] sm:$0xff]
    %v103 = vld [vmem:[%s3 + $0x10] sm:$0xff]
    %v104 = vld [vmem:[%s3 + $0x18] sm:$0xff]
    %v105 = vld [vmem:[%s3 + $0x20] sm:$0xff]
    %v106 = vld [vmem:[%s3 + $0x28] sm:$0xff]
    %v107 = vld [vmem:[%s3 + $0x30] sm:$0xff]
    %v108 = vld [vmem:[%s3 + $0x38] sm:$0xff]
    %v109 = vld [vmem:[%s3 + $0x40] sm:$0xff]
    %v110 = vld [vmem:[%s3 + $0x48] sm:$0xff]
    %v111 = vld [vmem:[%s3 + $0x50] sm:$0xff]
    %v112 = vld [vmem:[%s3 + $0x58] sm:$0xff]
    %v113 = vld [vmem:[%s4] sm:$0xff]
    %v114 = vld [vmem:[%s4 + $0x8] sm:$0xff]
    %v115 = vld [vmem:[%s4 + $0x10] sm:$0xff]
    %v116 = vld [vmem:[%s4 + $0x18] sm:$0xff]
    %v117 = vld [vmem:[%s4 + $0x20] sm:$0xff]
    %v118 = vld [vmem:[%s4 + $0x28] sm:$0xff]
    %v119 = vld [vmem:[%s4 + $0x30] sm:$0xff]
    %v120 = vld [vmem:[%s4 + $0x38] sm:$0xff]
    %v121 = vld [vmem:[%s4 + $0x40] sm:$0xff]
    %v122 = vld [vmem:[%s4 + $0x48] sm:$0xff]
    %v123 = vld [vmem:[%s4 + $0x50] sm:$0xff]
    %v124 = vld [vmem:[%s4 + $0x58] sm:$0xff]
    %v125 = vld [vmem:[%s1] sm:$0xff]
    %v126 = vld [vmem:[%s1 + $0x8] sm:$0xff]
    %v127 = vld [vmem:[%s1 + $0x10] sm:$0xff]
    %v128 = vld [vmem:[%s1 + $0x18] sm:$0xff]
    %v129 = vld [vmem:[%s1 + $0x20] sm:$0xff]
    %v130 = vld [vmem:[%s1 + $0x28] sm:$0xff]
    %v131 = vld [vmem:[%s1 + $0x30] sm:$0xff]
    %v132 = vld [vmem:[%s1 + $0x38] sm:$0xff]
    %v133 = vld [vmem:[%s1 + $0x40] sm:$0xff]
    %v134 = vld [vmem:[%s1 + $0x48] sm:$0xff]
    %v135 = vld [vmem:[%s1 + $0x50] sm:$0xff]
    %v136 = vld [vmem:[%s1 + $0x58] sm:$0xff]
    %v137 = vld [vmem:[%s1 + $0x60] sm:$0xff]
    %v138 = vld [vmem:[%s1 + $0x68] sm:$0xff]
    %v139 = vld [vmem:[%s1 + $0x70] sm:$0xff]
    %v140 = vld [vmem:[%s1 + $0x78] sm:$0xff]
    %v141 = vld [vmem:[%s1 + $0x80] sm:$0xff]
    %v142 = vld [vmem:[%s1 + $0x88] sm:$0xff]
    %v143 = vld [vmem:[%s1 + $0x90] sm:$0xff]
    %v144 = vld [vmem:[%s1 + $0x98] sm:$0xff]
    %v145 = vld [vmem:[%s1 + $0xa0] sm:$0xff]
    %v146 = vld [vmem:[%s1 + $0xa8] sm:$0xff]
    %v147 = vld [vmem:[%s1 + $0xb0] sm:$0xff]
    %v148 = vld [vmem:[%s1 + $0xb8] sm:$0xff]
    %vm149 = vcmask 195584
    %v151 = vsel %vm149, %v113, 0
    %v154 = vsel %vm149, %v114, 0
    %v157 = vsel %vm149, %v115, 0
    %v160 = vsel %vm149, %v116, 0
    %v163 = vsel %vm149, %v117, 0
    %v166 = vsel %vm149, %v118, 0
    %v169 = vsel %vm149, %v119, 0
    %v172 = vsel %vm149, %v120, 0
    %v175 = vsel %vm149, %v121, 0
    %v178 = vsel %vm149, %v122, 0
    %v181 = vsel %vm149, %v123, 0
    %v184 = vsel %vm149, %v124, 0
    %186 = vmatprep.subr.mxu0 %v126
    %187 = vmatpush1.msra.mxu0 %v125
    %188 = vmatprep.subr.mxu0 %v134
    %189 = vmatpush1.msra.mxu0 %v133
    %190 = vmatprep.subr.mxu0 %v142
    %191 = vmatpush1.msra.mxu0 %v141
    %192 = vmatprep.subr.mxu0 0.0
    %193 = vmatpush1.msra.mxu0 0.0
    %194 = vmatprep.subr.mxu0 0.0
    %195 = vmatpush1.msra.mxu0 0.0
    %196 = vmatprep.subr.mxu0 0.0
    %197 = vmatpush1.msra.mxu0 0.0
    %198 = vmatprep.subr.mxu0 0.0
    %199 = vmatpush1.msra.mxu0 0.0
    %200 = vmatprep.subr.mxu0 0.0
    %201 = vmatpush1.msra.mxu0 0.0
    %202 = vmatprep.subr.mxu0 0.0
    %203 = vmatpush1.msra.mxu0 0.0
    %204 = vmatprep.subr.mxu0 0.0
    %205 = vmatpush1.msra.mxu0 0.0
    %206 = vmatprep.subr.mxu0 0.0
    %207 = vmatpush1.msra.mxu0 0.0
    %208 = vmatprep.subr.mxu0 0.0
    %209 = vmatpush1.msra.mxu0 0.0
    %210 = vmatprep.subr.mxu0 0.0
    %211 = vmatpush1.msra.mxu0 0.0
    %212 = vmatprep.subr.mxu0 0.0
    %213 = vmatpush1.msra.mxu0 0.0
    %214 = vmatprep.subr.mxu0 0.0
    %215 = vmatpush1.msra.mxu0 0.0
    %216 = vmatprep.subr.mxu0 0.0
    %217 = vmatpush1.msra.mxu0 0.0
    %218 = vmatprep.subr.mxu0 0.0
    %219 = vmatpush1.msra.mxu0 0.0
    %220 = vmatprep.subr.mxu0 0.0
    %221 = vmatpush1.msra.mxu0 0.0
    %222 = vmatprep.subr.mxu0 0.0
    %223 = vmatpush1.msra.mxu0 0.0
    %224 = vmatprep.subr.mxu0 0.0
    %225 = vmatpush1.msra.mxu0 0.0
    %226 = vmatprep.subr.mxu0 0.0
    %227 = vmatpush1.msra.mxu0 0.0
    %228 = vmatprep.subr.mxu0 0.0
    %229 = vmatpush1.msra.mxu0 0.0
    %230 = vmatprep.subr.mxu0 0.0
    %231 = vmatpush1.msra.mxu0 0.0
    %232 = vmatprep.subr.mxu0 0.0
    %233 = vmatpush1.msra.mxu0 0.0
    %234 = vmatprep.subr.mxu0 0.0
    %235 = vmatpush1.msra.mxu0 0.0
    %236 = vmatprep.subr.mxu0 0.0
    %237 = vmatpush1.msra.mxu0 0.0
    %238 = vmatprep.subr.mxu0 0.0
    %239 = vmatpush1.msra.mxu0 0.0
    %240 = vmatprep.subr.mxu0 0.0
    %241 = vmatpush1.msra.mxu0 0.0
    %242 = vmatprep.subr.mxu0 0.0
    %243 = vmatpush1.msra.mxu0 0.0
    %244 = vmatprep.subr.mxu0 0.0
    %245 = vmatpush1.msra.mxu0 0.0
    %246 = vmatprep.subr.mxu0 0.0
    %247 = vmatpush1.msra.mxu0 0.0
    %248 = vmatprep.subr.mxu0 0.0
    %249 = vmatpush1.msra.mxu0 0.0
    %250 = vmatprep.mubr.f32.mxu0 0.0
    %251 = vmatmul.mubr.f32.gmra.mrb[0].mxu0 %v151
    %v252 = vpop.f32.mrb[0].mxu0
    %v253 = vadd.f32 0.0, %v252
    %v254 = vpop.f32.mrb[0].mxu0
    %v255 = vadd.f32 0.0, %v254
    %256 = vmatprep.mubr.f32.mxu0 0.0
    %257 = vmatmul.mubr.f32.gmra.mrb[0].mxu0 %v154
    %v258 = vpop.f32.mrb[0].mxu0
    %v259 = vadd.f32 0.0, %v258
    %v260 = vpop.f32.mrb[0].mxu0
    %v261 = vadd.f32 0.0, %v260
    %262 = vmatprep.mubr.f32.mxu0 0.0
    %263 = vmatmul.mubr.f32.gmra.mrb[0].mxu0 %v157
    %v264 = vpop.f32.mrb[0].mxu0
    %v265 = vadd.f32 0.0, %v264
    %v266 = vpop.f32.mrb[0].mxu0
    %v267 = vadd.f32 0.0, %v266
    %268 = vmatprep.mubr.f32.mxu0 0.0
    %269 = vmatmul.mubr.f32.gmra.mrb[0].mxu0 %v160
    %v270 = vpop.f32.mrb[0].mxu0
    %v271 = vadd.f32 0.0, %v270
    %v272 = vpop.f32.mrb[0].mxu0
    %v273 = vadd.f32 0.0, %v272
    %274 = vmatprep.mubr.f32.mxu0 0.0
    %275 = vmatmul.mubr.f32.gmra.mrb[0].mxu0 %v163
    %v276 = vpop.f32.mrb[0].mxu0
    %v277 = vadd.f32 0.0, %v276
    %v278 = vpop.f32.mrb[0].mxu0
    %v279 = vadd.f32 0.0, %v278
    %280 = vmatprep.mubr.f32.mxu0 0.0
    %281 = vmatmul.mubr.f32.gmra.mrb[0].mxu0 %v166
    %v282 = vpop.f32.mrb[0].mxu0
    %v283 = vadd.f32 0.0, %v282
    %v284 = vpop.f32.mrb[0].mxu0
    %v285 = vadd.f32 0.0, %v284
    %286 = vmatprep.mubr.f32.mxu0 0.0
    %287 = vmatmul.mubr.f32.gmra.mrb[0].mxu0 %v169
    %v288 = vpop.f32.mrb[0].mxu0
    %v289 = vadd.f32 0.0, %v288
    %v290 = vpop.f32.mrb[0].mxu0
    %v291 = vadd.f32 0.0, %v290
    %292 = vmatprep.mubr.f32.mxu0 0.0
    %293 = vmatmul.mubr.f32.gmra.mrb[0].mxu0 %v172
    %v294 = vpop.f32.mrb[0].mxu0
    %v295 = vadd.f32 0.0, %v294
    %v296 = vpop.f32.mrb[0].mxu0
    %v297 = vadd.f32 0.0, %v296
    %298 = vmatprep.mubr.f32.mxu0 0.0
    %299 = vmatmul.mubr.f32.gmra.mrb[0].mxu0 %v175
    %v300 = vpop.f32.mrb[0].mxu0
    %v301 = vadd.f32 0.0, %v300
    %v302 = vpop.f32.mrb[0].mxu0
    %v303 = vadd.f32 0.0, %v302
    %304 = vmatprep.mubr.f32.mxu0 0.0
    %305 = vmatmul.mubr.f32.gmra.mrb[0].mxu0 %v178
    %v306 = vpop.f32.mrb[0].mxu0
    %v307 = vadd.f32 0.0, %v306
    %v308 = vpop.f32.mrb[0].mxu0
    %v309 = vadd.f32 0.0, %v308
    %310 = vmatprep.mubr.f32.mxu0 0.0
    %311 = vmatmul.mubr.f32.gmra.mrb[0].mxu0 %v181
    %v312 = vpop.f32.mrb[0].mxu0
    %v313 = vadd.f32 0.0, %v312
    %v314 = vpop.f32.mrb[0].mxu0
    %v315 = vadd.f32 0.0, %v314
    %316 = vmatprep.mubr.f32.mxu0 0.0
    %317 = vmatmul.mubr.f32.gmra.mrb[0].mxu0 %v184
    %v318 = vpop.f32.mrb[0].mxu0
    %v319 = vadd.f32 0.0, %v318
    %v320 = vpop.f32.mrb[0].mxu0
    %v321 = vadd.f32 0.0, %v320
    %322 = vdwg.mxu0
    %323 = vmatprep.subr.mxu0 %v128
    %324 = vmatpush1.msra.mxu0 %v127
    %325 = vmatprep.subr.mxu0 %v136
    %326 = vmatpush1.msra.mxu0 %v135
    %327 = vmatprep.subr.mxu0 %v144
    %328 = vmatpush1.msra.mxu0 %v143
    %329 = vmatprep.subr.mxu0 0.0
    %330 = vmatpush1.msra.mxu0 0.0
    %331 = vmatprep.subr.mxu0 0.0
    %332 = vmatpush1.msra.mxu0 0.0
    %333 = vmatprep.subr.mxu0 0.0
    %334 = vmatpush1.msra.mxu0 0.0
    %335 = vmatprep.subr.mxu0 0.0
    %336 = vmatpush1.msra.mxu0 0.0
    %337 = vmatprep.subr.mxu0 0.0
    %338 = vmatpush1.msra.mxu0 0.0
    %339 = vmatprep.subr.mxu0 0.0
    %340 = vmatpush1.msra.mxu0 0.0
    %341 = vmatprep.subr.mxu0 0.0
    %342 = vmatpush1.msra.mxu0 0.0
    %343 = vmatprep.subr.mxu0 0.0
    %344 = vmatpush1.msra.mxu0 0.0
    %345 = vmatprep.subr.mxu0 0.0
    %346 = vmatpush1.msra.mxu0 0.0
    %347 = vmatprep.subr.mxu0 0.0
    %348 = vmatpush1.msra.mxu0 0.0
    %349 = vmatprep.subr.mxu0 0.0
    %350 = vmatpush1.msra.mxu0 0.0
    %351 = vmatprep.subr.mxu0 0.0
    %352 = vmatpush1.msra.mxu0 0.0
    %353 = vmatprep.subr.mxu0 0.0
    %354 = vmatpush1.msra.mxu0 0.0
    %355 = vmatprep.subr.mxu0 0.0
    %356 = vmatpush1.msra.mxu0 0.0
    %357 = vmatprep.subr.mxu0 0.0
    %358 = vmatpush1.msra.mxu0 0.0
    %359 = vmatprep.subr.mxu0 0.0
    %360 = vmatpush1.msra.mxu0 0.0
    %361 = vmatprep.subr.mxu0 0.0
    %362 = vmatpush1.msra.mxu0 0.0
    %363 = vmatprep.subr.mxu0 0.0
    %364 = vmatpush1.msra.mxu0 0.0
    %365 = vmatprep.subr.mxu0 0.0
    %366 = vmatpush1.msra.mxu0 0.0
    %367 = vmatprep.subr.mxu0 0.0
    %368 = vmatpush1.msra.mxu0 0.0
    %369 = vmatprep.subr.mxu0 0.0
    %370 = vmatpush1.msra.mxu0 0.0
    %371 = vmatprep.subr.mxu0 0.0
    %372 = vmatpush1.msra.mxu0 0.0
    %373 = vmatprep.subr.mxu0 0.0
    %374 = vmatpush1.msra.mxu0 0.0
    %375 = vmatprep.subr.mxu0 0.0
    %376 = vmatpush1.msra.mxu0 0.0
    %377 = vmatprep.subr.mxu0 0.0
    %378 = vmatpush1.msra.mxu0 0.0
    %379 = vmatprep.subr.mxu0 0.0
    %380 = vmatpush1.msra.mxu0 0.0
    %381 = vmatprep.subr.mxu0 0.0
    %382 = vmatpush1.msra.mxu0 0.0
    %383 = vmatprep.subr.mxu0 0.0
    %384 = vmatpush1.msra.mxu0 0.0
    %385 = vmatprep.subr.mxu0 0.0
    %386 = vmatpush1.msra.mxu0 0.0
    %387 = vmatprep.mubr.f32.mxu0 0.0
    %388 = vmatmul.mubr.f32.gmra.mrb[0].mxu0 %v151
    %v389 = vpop.f32.mrb[0].mxu0
    %v390 = vadd.f32 0.0, %v389
    %v391 = vpop.f32.mrb[0].mxu0
    %v392 = vadd.f32 0.0, %v391
    %393 = vmatprep.mubr.f32.mxu0 0.0
    %394 = vmatmul.mubr.f32.gmra.mrb[0].mxu0 %v154
    %v395 = vpop.f32.mrb[0].mxu0
    %v396 = vadd.f32 0.0, %v395
    %v397 = vpop.f32.mrb[0].mxu0
    %v398 = vadd.f32 0.0, %v397
    %399 = vmatprep.mubr.f32.mxu0 0.0
    %400 = vmatmul.mubr.f32.gmra.mrb[0].mxu0 %v157
    %v401 = vpop.f32.mrb[0].mxu0
    %v402 = vadd.f32 0.0, %v401
    %v403 = vpop.f32.mrb[0].mxu0
    %v404 = vadd.f32 0.0, %v403
    %405 = vmatprep.mubr.f32.mxu0 0.0
    %406 = vmatmul.mubr.f32.gmra.mrb[0].mxu0 %v160
    %v407 = vpop.f32.mrb[0].mxu0
    %v408 = vadd.f32 0.0, %v407
    %v409 = vpop.f32.mrb[0].mxu0
    %v410 = vadd.f32 0.0, %v409
    %411 = vmatprep.mubr.f32.mxu0 0.0
    %412 = vmatmul.mubr.f32.gmra.mrb[0].mxu0 %v163
    %v413 = vpop.f32.mrb[0].mxu0
    %v414 = vadd.f32 0.0, %v413
    %v415 = vpop.f32.mrb[0].mxu0
    %v416 = vadd.f32 0.0, %v415
    %417 = vmatprep.mubr.f32.mxu0 0.0
    %418 = vmatmul.mubr.f32.gmra.mrb[0].mxu0 %v166
    %v419 = vpop.f32.mrb[0].mxu0
    %v420 = vadd.f32 0.0, %v419
    %v421 = vpop.f32.mrb[0].mxu0
    %v422 = vadd.f32 0.0, %v421
    %423 = vmatprep.mubr.f32.mxu0 0.0
    %424 = vmatmul.mubr.f32.gmra.mrb[0].mxu0 %v169
    %v425 = vpop.f32.mrb[0].mxu0
    %v426 = vadd.f32 0.0, %v425
    %v427 = vpop.f32.mrb[0].mxu0
    %v428 = vadd.f32 0.0, %v427
    %429 = vmatprep.mubr.f32.mxu0 0.0
    %430 = vmatmul.mubr.f32.gmra.mrb[0].mxu0 %v172
    %v431 = vpop.f32.mrb[0].mxu0
    %v432 = vadd.f32 0.0, %v431
    %v433 = vpop.f32.mrb[0].mxu0
    %v434 = vadd.f32 0.0, %v433
    %435 = vmatprep.mubr.f32.mxu0 0.0
    %436 = vmatmul.mubr.f32.gmra.mrb[0].mxu0 %v175
    %v437 = vpop.f32.mrb[0].mxu0
    %v438 = vadd.f32 0.0, %v437
    %v439 = vpop.f32.mrb[0].mxu0
    %v440 = vadd.f32 0.0, %v439
    %441 = vmatprep.mubr.f32.mxu0 0.0
    %442 = vmatmul.mubr.f32.gmra.mrb[0].mxu0 %v178
    %v443 = vpop.f32.mrb[0].mxu0
    %v444 = vadd.f32 0.0, %v443
    %v445 = vpop.f32.mrb[0].mxu0
    %v446 = vadd.f32 0.0, %v445
    %447 = vmatprep.mubr.f32.mxu0 0.0
    %448 = vmatmul.mubr.f32.gmra.mrb[0].mxu0 %v181
    %v449 = vpop.f32.mrb[0].mxu0
    %v450 = vadd.f32 0.0, %v449
    %v451 = vpop.f32.mrb[0].mxu0
    %v452 = vadd.f32 0.0, %v451
    %453 = vmatprep.mubr.f32.mxu0 0.0
    %454 = vmatmul.mubr.f32.gmra.mrb[0].mxu0 %v184
    %v455 = vpop.f32.mrb[0].mxu0
    %v456 = vadd.f32 0.0, %v455
    %v457 = vpop.f32.mrb[0].mxu0
    %v458 = vadd.f32 0.0, %v457
    %459 = vdwg.mxu0
    %460 = vmatprep.subr.mxu0 %v130
    %461 = vmatpush1.msra.mxu0 %v129
    %462 = vmatprep.subr.mxu0 %v138
    %463 = vmatpush1.msra.mxu0 %v137
    %464 = vmatprep.subr.mxu0 %v146
    %465 = vmatpush1.msra.mxu0 %v145
    %466 = vmatprep.subr.mxu0 0.0
    %467 = vmatpush1.msra.mxu0 0.0
    %468 = vmatprep.subr.mxu0 0.0
    %469 = vmatpush1.msra.mxu0 0.0
    %470 = vmatprep.subr.mxu0 0.0
    %471 = vmatpush1.msra.mxu0 0.0
    %472 = vmatprep.subr.mxu0 0.0
    %473 = vmatpush1.msra.mxu0 0.0
    %474 = vmatprep.subr.mxu0 0.0
    %475 = vmatpush1.msra.mxu0 0.0
    %476 = vmatprep.subr.mxu0 0.0
    %477 = vmatpush1.msra.mxu0 0.0
    %478 = vmatprep.subr.mxu0 0.0
    %479 = vmatpush1.msra.mxu0 0.0
    %480 = vmatprep.subr.mxu0 0.0
    %481 = vmatpush1.msra.mxu0 0.0
    %482 = vmatprep.subr.mxu0 0.0
    %483 = vmatpush1.msra.mxu0 0.0
    %484 = vmatprep.subr.mxu0 0.0
    %485 = vmatpush1.msra.mxu0 0.0
    %486 = vmatprep.subr.mxu0 0.0
    %487 = vmatpush1.msra.mxu0 0.0
    %488 = vmatprep.subr.mxu0 0.0
    %489 = vmatpush1.msra.mxu0 0.0
    %490 = vmatprep.subr.mxu0 0.0
    %491 = vmatpush1.msra.mxu0 0.0
    %492 = vmatprep.subr.mxu0 0.0
    %493 = vmatpush1.msra.mxu0 0.0
    %494 = vmatprep.subr.mxu0 0.0
    %495 = vmatpush1.msra.mxu0 0.0
    %496 = vmatprep.subr.mxu0 0.0
    %497 = vmatpush1.msra.mxu0 0.0
    %498 = vmatprep.subr.mxu0 0.0
    %499 = vmatpush1.msra.mxu0 0.0
    %500 = vmatprep.subr.mxu0 0.0
    %501 = vmatpush1.msra.mxu0 0.0
    %502 = vmatprep.subr.mxu0 0.0
    %503 = vmatpush1.msra.mxu0 0.0
    %504 = vmatprep.subr.mxu0 0.0
    %505 = vmatpush1.msra.mxu0 0.0
    %506 = vmatprep.subr.mxu0 0.0
    %507 = vmatpush1.msra.mxu0 0.0
    %508 = vmatprep.subr.mxu0 0.0
    %509 = vmatpush1.msra.mxu0 0.0
    %510 = vmatprep.subr.mxu0 0.0
    %511 = vmatpush1.msra.mxu0 0.0
    %512 = vmatprep.subr.mxu0 0.0
    %513 = vmatpush1.msra.mxu0 0.0
    %514 = vmatprep.subr.mxu0 0.0
    %515 = vmatpush1.msra.mxu0 0.0
    %516 = vmatprep.subr.mxu0 0.0
    %517 = vmatpush1.msra.mxu0 0.0
    %518 = vmatprep.subr.mxu0 0.0
    %519 = vmatpush1.msra.mxu0 0.0
    %520 = vmatprep.subr.mxu0 0.0
    %521 = vmatpush1.msra.mxu0 0.0
    %522 = vmatprep.subr.mxu0 0.0
    %523 = vmatpush1.msra.mxu0 0.0
    %524 = vmatprep.mubr.f32.mxu0 0.0
    %525 = vmatmul.mubr.f32.gmra.mrb[0].mxu0 %v151
    %v526 = vpop.f32.mrb[0].mxu0
    %v527 = vadd.f32 0.0, %v526
    %v528 = vpop.f32.mrb[0].mxu0
    %v529 = vadd.f32 0.0, %v528
    %530 = vmatprep.mubr.f32.mxu0 0.0
    %531 = vmatmul.mubr.f32.gmra.mrb[0].mxu0 %v154
    %v532 = vpop.f32.mrb[0].mxu0
    %v533 = vadd.f32 0.0, %v532
    %v534 = vpop.f32.mrb[0].mxu0
    %v535 = vadd.f32 0.0, %v534
    %536 = vmatprep.mubr.f32.mxu0 0.0
    %537 = vmatmul.mubr.f32.gmra.mrb[0].mxu0 %v157
    %v538 = vpop.f32.mrb[0].mxu0
    %v539 = vadd.f32 0.0, %v538
    %v540 = vpop.f32.mrb[0].mxu0
    %v541 = vadd.f32 0.0, %v540
    %542 = vmatprep.mubr.f32.mxu0 0.0
    %543 = vmatmul.mubr.f32.gmra.mrb[0].mxu0 %v160
    %v544 = vpop.f32.mrb[0].mxu0
    %v545 = vadd.f32 0.0, %v544
    %v546 = vpop.f32.mrb[0].mxu0
    %v547 = vadd.f32 0.0, %v546
    %548 = vmatprep.mubr.f32.mxu0 0.0
    %549 = vmatmul.mubr.f32.gmra.mrb[0].mxu0 %v163
    %v550 = vpop.f32.mrb[0].mxu0
    %v551 = vadd.f32 0.0, %v550
    %v552 = vpop.f32.mrb[0].mxu0
    %v553 = vadd.f32 0.0, %v552
    %554 = vmatprep.mubr.f32.mxu0 0.0
    %555 = vmatmul.mubr.f32.gmra.mrb[0].mxu0 %v166
    %v556 = vpop.f32.mrb[0].mxu0
    %v557 = vadd.f32 0.0, %v556
    %v558 = vpop.f32.mrb[0].mxu0
    %v559 = vadd.f32 0.0, %v558
    %560 = vmatprep.mubr.f32.mxu0 0.0
    %561 = vmatmul.mubr.f32.gmra.mrb[0].mxu0 %v169
    %v562 = vpop.f32.mrb[0].mxu0
    %v563 = vadd.f32 0.0, %v562
    %v564 = vpop.f32.mrb[0].mxu0
    %v565 = vadd.f32 0.0, %v564
    %566 = vmatprep.mubr.f32.mxu0 0.0
    %567 = vmatmul.mubr.f32.gmra.mrb[0].mxu0 %v172
    %v568 = vpop.f32.mrb[0].mxu0
    %v569 = vadd.f32 0.0, %v568
    %v570 = vpop.f32.mrb[0].mxu0
    %v571 = vadd.f32 0.0, %v570
    %572 = vmatprep.mubr.f32.mxu0 0.0
    %573 = vmatmul.mubr.f32.gmra.mrb[0].mxu0 %v175
    %v574 = vpop.f32.mrb[0].mxu0
    %v575 = vadd.f32 0.0, %v574
    %v576 = vpop.f32.mrb[0].mxu0
    %v577 = vadd.f32 0.0, %v576
    %578 = vmatprep.mubr.f32.mxu0 0.0
    %579 = vmatmul.mubr.f32.gmra.mrb[0].mxu0 %v178
    %v580 = vpop.f32.mrb[0].mxu0
    %v581 = vadd.f32 0.0, %v580
    %v582 = vpop.f32.mrb[0].mxu0
    %v583 = vadd.f32 0.0, %v582
    %584 = vmatprep.mubr.f32.mxu0 0.0
    %585 = vmatmul.mubr.f32.gmra.mrb[0].mxu0 %v181
    %v586 = vpop.f32.mrb[0].mxu0
    %v587 = vadd.f32 0.0, %v586
    %v588 = vpop.f32.mrb[0].mxu0
    %v589 = vadd.f32 0.0, %v588
    %590 = vmatprep.mubr.f32.mxu0 0.0
    %591 = vmatmul.mubr.f32.gmra.mrb[0].mxu0 %v184
    %v592 = vpop.f32.mrb[0].mxu0
    %v593 = vadd.f32 0.0, %v592
    %v594 = vpop.f32.mrb[0].mxu0
    %v595 = vadd.f32 0.0, %v594
    %596 = vdwg.mxu0
    %597 = vmatprep.subr.mxu0 %v132
    %598 = vmatpush1.msra.mxu0 %v131
    %599 = vmatprep.subr.mxu0 %v140
    %600 = vmatpush1.msra.mxu0 %v139
    %601 = vmatprep.subr.mxu0 %v148
    %602 = vmatpush1.msra.mxu0 %v147
    %603 = vmatprep.subr.mxu0 0.0
    %604 = vmatpush1.msra.mxu0 0.0
    %605 = vmatprep.subr.mxu0 0.0
    %606 = vmatpush1.msra.mxu0 0.0
    %607 = vmatprep.subr.mxu0 0.0
    %608 = vmatpush1.msra.mxu0 0.0
    %609 = vmatprep.subr.mxu0 0.0
    %610 = vmatpush1.msra.mxu0 0.0
    %611 = vmatprep.subr.mxu0 0.0
    %612 = vmatpush1.msra.mxu0 0.0
    %613 = vmatprep.subr.mxu0 0.0
    %614 = vmatpush1.msra.mxu0 0.0
    %615 = vmatprep.subr.mxu0 0.0
    %616 = vmatpush1.msra.mxu0 0.0
    %617 = vmatprep.subr.mxu0 0.0
    %618 = vmatpush1.msra.mxu0 0.0
    %619 = vmatprep.subr.mxu0 0.0
    %620 = vmatpush1.msra.mxu0 0.0
    %621 = vmatprep.subr.mxu0 0.0
    %622 = vmatpush1.msra.mxu0 0.0
    %623 = vmatprep.subr.mxu0 0.0
    %624 = vmatpush1.msra.mxu0 0.0
    %625 = vmatprep.subr.mxu0 0.0
    %626 = vmatpush1.msra.mxu0 0.0
    %627 = vmatprep.subr.mxu0 0.0
    %628 = vmatpush1.msra.mxu0 0.0
    %629 = vmatprep.subr.mxu0 0.0
    %630 = vmatpush1.msra.mxu0 0.0
    %631 = vmatprep.subr.mxu0 0.0
    %632 = vmatpush1.msra.mxu0 0.0
    %633 = vmatprep.subr.mxu0 0.0
    %634 = vmatpush1.msra.mxu0 0.0
    %635 = vmatprep.subr.mxu0 0.0
    %636 = vmatpush1.msra.mxu0 0.0
    %637 = vmatprep.subr.mxu0 0.0
    %638 = vmatpush1.msra.mxu0 0.0
    %639 = vmatprep.subr.mxu0 0.0
    %640 = vmatpush1.msra.mxu0 0.0
    %641 = vmatprep.subr.mxu0 0.0
    %642 = vmatpush1.msra.mxu0 0.0
    %643 = vmatprep.subr.mxu0 0.0
    %644 = vmatpush1.msra.mxu0 0.0
    %645 = vmatprep.subr.mxu0 0.0
    %646 = vmatpush1.msra.mxu0 0.0
    %647 = vmatprep.subr.mxu0 0.0
    %648 = vmatpush1.msra.mxu0 0.0
    %649 = vmatprep.subr.mxu0 0.0
    %650 = vmatpush1.msra.mxu0 0.0
    %651 = vmatprep.subr.mxu0 0.0
    %652 = vmatpush1.msra.mxu0 0.0
    %653 = vmatprep.subr.mxu0 0.0
    %654 = vmatpush1.msra.mxu0 0.0
    %655 = vmatprep.subr.mxu0 0.0
    %656 = vmatpush1.msra.mxu0 0.0
    %657 = vmatprep.subr.mxu0 0.0
    %658 = vmatpush1.msra.mxu0 0.0
    %659 = vmatprep.subr.mxu0 0.0
    %660 = vmatpush1.msra.mxu0 0.0
    %661 = vmatprep.mubr.f32.mxu0 0.0
    %662 = vmatmul.mubr.f32.gmra.mrb[0].mxu0 %v151
    %v663 = vpop.f32.mrb[0].mxu0
    %v664 = vadd.f32 0.0, %v663
    %v665 = vpop.f32.mrb[0].mxu0
    %v666 = vadd.f32 0.0, %v665
    %667 = vmatprep.mubr.f32.mxu0 0.0
    %668 = vmatmul.mubr.f32.gmra.mrb[0].mxu0 %v154
    %v669 = vpop.f32.mrb[0].mxu0
    %v670 = vadd.f32 0.0, %v669
    %v671 = vpop.f32.mrb[0].mxu0
    %v672 = vadd.f32 0.0, %v671
    %673 = vmatprep.mubr.f32.mxu0 0.0
    %674 = vmatmul.mubr.f32.gmra.mrb[0].mxu0 %v157
    %v675 = vpop.f32.mrb[0].mxu0
    %v676 = vadd.f32 0.0, %v675
    %v677 = vpop.f32.mrb[0].mxu0
    %v678 = vadd.f32 0.0, %v677
    %679 = vmatprep.mubr.f32.mxu0 0.0
    %680 = vmatmul.mubr.f32.gmra.mrb[0].mxu0 %v160
    %v681 = vpop.f32.mrb[0].mxu0
    %v682 = vadd.f32 0.0, %v681
    %v683 = vpop.f32.mrb[0].mxu0
    %v684 = vadd.f32 0.0, %v683
    %685 = vmatprep.mubr.f32.mxu0 0.0
    %686 = vmatmul.mubr.f32.gmra.mrb[0].mxu0 %v163
    %v687 = vpop.f32.mrb[0].mxu0
    %v688 = vadd.f32 0.0, %v687
    %v689 = vpop.f32.mrb[0].mxu0
    %v690 = vadd.f32 0.0, %v689
    %691 = vmatprep.mubr.f32.mxu0 0.0
    %692 = vmatmul.mubr.f32.gmra.mrb[0].mxu0 %v166
    %v693 = vpop.f32.mrb[0].mxu0
    %v694 = vadd.f32 0.0, %v693
    %v695 = vpop.f32.mrb[0].mxu0
    %v696 = vadd.f32 0.0, %v695
    %697 = vmatprep.mubr.f32.mxu0 0.0
    %698 = vmatmul.mubr.f32.gmra.mrb[0].mxu0 %v169
    %v699 = vpop.f32.mrb[0].mxu0
    %v700 = vadd.f32 0.0, %v699
    %v701 = vpop.f32.mrb[0].mxu0
    %v702 = vadd.f32 0.0, %v701
    %703 = vmatprep.mubr.f32.mxu0 0.0
    %704 = vmatmul.mubr.f32.gmra.mrb[0].mxu0 %v172
    %v705 = vpop.f32.mrb[0].mxu0
    %v706 = vadd.f32 0.0, %v705
    %v707 = vpop.f32.mrb[0].mxu0
    %v708 = vadd.f32 0.0, %v707
    %709 = vmatprep.mubr.f32.mxu0 0.0
    %710 = vmatmul.mubr.f32.gmra.mrb[0].mxu0 %v175
    %v711 = vpop.f32.mrb[0].mxu0
    %v712 = vadd.f32 0.0, %v711
    %v713 = vpop.f32.mrb[0].mxu0
    %v714 = vadd.f32 0.0, %v713
    %715 = vmatprep.mubr.f32.mxu0 0.0
    %716 = vmatmul.mubr.f32.gmra.mrb[0].mxu0 %v178
    %v717 = vpop.f32.mrb[0].mxu0
    %v718 = vadd.f32 0.0, %v717
    %v719 = vpop.f32.mrb[0].mxu0
    %v720 = vadd.f32 0.0, %v719
    %721 = vmatprep.mubr.f32.mxu0 0.0
    %722 = vmatmul.mubr.f32.gmra.mrb[0].mxu0 %v181
    %v723 = vpop.f32.mrb[0].mxu0
    %v724 = vadd.f32 0.0, %v723
    %v725 = vpop.f32.mrb[0].mxu0
    %v726 = vadd.f32 0.0, %v725
    %727 = vmatprep.mubr.f32.mxu0 0.0
    %728 = vmatmul.mubr.f32.gmra.mrb[0].mxu0 %v184
    %v729 = vpop.f32.mrb[0].mxu0
    %v730 = vadd.f32 0.0, %v729
    %v731 = vpop.f32.mrb[0].mxu0
    %v732 = vadd.f32 0.0, %v731
    %733 = vdwg.mxu0
    %vm734 = vcmask 64512
    %v736 = vsel %vm734, %v101, 0
    %v739 = vsel %vm734, %v102, 0
    %v742 = vsel %vm734, %v103, 0
    %v745 = vsel %vm734, %v104, 0
    %v748 = vsel %vm734, %v105, 0
    %v751 = vsel %vm734, %v106, 0
    %v754 = vsel %vm734, %v107, 0
    %v757 = vsel %vm734, %v108, 0
    %v760 = vsel %vm734, %v109, 0
    %v763 = vsel %vm734, %v110, 0
    %v766 = vsel %vm734, %v111, 0
    %v769 = vsel %vm734, %v112, 0
    %771 = vmatprep.subr.mxu0 %v94
    %772 = vmatpush1.msra.mxu0 %v93
    %773 = vmatprep.subr.mxu0 0.0
    %774 = vmatpush1.msra.mxu0 0.0
    %775 = vmatprep.subr.mxu0 0.0
    %776 = vmatpush1.msra.mxu0 0.0
    %777 = vmatprep.subr.mxu0 0.0
    %778 = vmatpush1.msra.mxu0 0.0
    %779 = vmatprep.subr.mxu0 0.0
    %780 = vmatpush1.msra.mxu0 0.0
    %781 = vmatprep.subr.mxu0 0.0
    %782 = vmatpush1.msra.mxu0 0.0
    %783 = vmatprep.subr.mxu0 0.0
    %784 = vmatpush1.msra.mxu0 0.0
    %785 = vmatprep.subr.mxu0 0.0
    %786 = vmatpush1.msra.mxu0 0.0
    %787 = vmatprep.subr.mxu0 0.0
    %788 = vmatpush1.msra.mxu0 0.0
    %789 = vmatprep.subr.mxu0 0.0
    %790 = vmatpush1.msra.mxu0 0.0
    %791 = vmatprep.subr.mxu0 0.0
    %792 = vmatpush1.msra.mxu0 0.0
    %793 = vmatprep.subr.mxu0 0.0
    %794 = vmatpush1.msra.mxu0 0.0
    %795 = vmatprep.subr.mxu0 0.0
    %796 = vmatpush1.msra.mxu0 0.0
    %797 = vmatprep.subr.mxu0 0.0
    %798 = vmatpush1.msra.mxu0 0.0
    %799 = vmatprep.subr.mxu0 0.0
    %800 = vmatpush1.msra.mxu0 0.0
    %801 = vmatprep.subr.mxu0 0.0
    %802 = vmatpush1.msra.mxu0 0.0
    %803 = vmatprep.subr.mxu0 0.0
    %804 = vmatpush1.msra.mxu0 0.0
    %805 = vmatprep.subr.mxu0 0.0
    %806 = vmatpush1.msra.mxu0 0.0
    %807 = vmatprep.subr.mxu0 0.0
    %808 = vmatpush1.msra.mxu0 0.0
    %809 = vmatprep.subr.mxu0 0.0
    %810 = vmatpush1.msra.mxu0 0.0
    %811 = vmatprep.subr.mxu0 0.0
    %812 = vmatpush1.msra.mxu0 0.0
    %813 = vmatprep.subr.mxu0 0.0
    %814 = vmatpush1.msra.mxu0 0.0
    %815 = vmatprep.subr.mxu0 0.0
    %816 = vmatpush1.msra.mxu0 0.0
    %817 = vmatprep.subr.mxu0 0.0
    %818 = vmatpush1.msra.mxu0 0.0
    %819 = vmatprep.subr.mxu0 0.0
    %820 = vmatpush1.msra.mxu0 0.0
    %821 = vmatprep.subr.mxu0 0.0
    %822 = vmatpush1.msra.mxu0 0.0
    %823 = vmatprep.subr.mxu0 0.0
    %824 = vmatpush1.msra.mxu0 0.0
    %825 = vmatprep.subr.mxu0 0.0
    %826 = vmatpush1.msra.mxu0 0.0
    %827 = vmatprep.subr.mxu0 0.0
    %828 = vmatpush1.msra.mxu0 0.0
    %829 = vmatprep.subr.mxu0 0.0
    %830 = vmatpush1.msra.mxu0 0.0
    %831 = vmatprep.subr.mxu0 0.0
    %832 = vmatpush1.msra.mxu0 0.0
    %833 = vmatprep.subr.mxu0 0.0
    %834 = vmatpush1.msra.mxu0 0.0
    %835 = vmatprep.mubr.f32.mxu0 0.0
    %836 = vmatmul.mubr.f32.gmra.mrb[0].mxu0 %v736
    %v837 = vpop.f32.mrb[0].mxu0
    %v838 = vadd.f32 %v253, %v837
    %v839 = vpop.f32.mrb[0].mxu0
    %v840 = vadd.f32 %v255, %v839
    %841 = vmatprep.mubr.f32.mxu0 0.0
    %842 = vmatmul.mubr.f32.gmra.mrb[0].mxu0 %v739
    %v843 = vpop.f32.mrb[0].mxu0
    %v844 = vadd.f32 %v259, %v843
    %v845 = vpop.f32.mrb[0].mxu0
    %v846 = vadd.f32 %v261, %v845
    %847 = vmatprep.mubr.f32.mxu0 0.0
    %848 = vmatmul.mubr.f32.gmra.mrb[0].mxu0 %v742
    %v849 = vpop.f32.mrb[0].mxu0
    %v850 = vadd.f32 %v265, %v849
    %v851 = vpop.f32.mrb[0].mxu0
    %v852 = vadd.f32 %v267, %v851
    %853 = vmatprep.mubr.f32.mxu0 0.0
    %854 = vmatmul.mubr.f32.gmra.mrb[0].mxu0 %v745
    %v855 = vpop.f32.mrb[0].mxu0
    %v856 = vadd.f32 %v271, %v855
    %v857 = vpop.f32.mrb[0].mxu0
    %v858 = vadd.f32 %v273, %v857
    %859 = vmatprep.mubr.f32.mxu0 0.0
    %860 = vmatmul.mubr.f32.gmra.mrb[0].mxu0 %v748
    %v861 = vpop.f32.mrb[0].mxu0
    %v862 = vadd.f32 %v277, %v861
    %v863 = vpop.f32.mrb[0].mxu0
    %v864 = vadd.f32 %v279, %v863
    %865 = vmatprep.mubr.f32.mxu0 0.0
    %866 = vmatmul.mubr.f32.gmra.mrb[0].mxu0 %v751
    %v867 = vpop.f32.mrb[0].mxu0
    %v868 = vadd.f32 %v283, %v867
    %v869 = vpop.f32.mrb[0].mxu0
    %v870 = vadd.f32 %v285, %v869
    %871 = vmatprep.mubr.f32.mxu0 0.0
    %872 = vmatmul.mubr.f32.gmra.mrb[0].mxu0 %v754
    %v873 = vpop.f32.mrb[0].mxu0
    %v874 = vadd.f32 %v289, %v873
    %v875 = vpop.f32.mrb[0].mxu0
    %v876 = vadd.f32 %v291, %v875
    %877 = vmatprep.mubr.f32.mxu0 0.0
    %878 = vmatmul.mubr.f32.gmra.mrb[0].mxu0 %v757
    %v879 = vpop.f32.mrb[0].mxu0
    %v880 = vadd.f32 %v295, %v879
    %v881 = vpop.f32.mrb[0].mxu0
    %v882 = vadd.f32 %v297, %v881
    %883 = vmatprep.mubr.f32.mxu0 0.0
    %884 = vmatmul.mubr.f32.gmra.mrb[0].mxu0 %v760
    %v885 = vpop.f32.mrb[0].mxu0
    %v886 = vadd.f32 %v301, %v885
    %v887 = vpop.f32.mrb[0].mxu0
    %v888 = vadd.f32 %v303, %v887
    %889 = vmatprep.mubr.f32.mxu0 0.0
    %890 = vmatmul.mubr.f32.gmra.mrb[0].mxu0 %v763
    %v891 = vpop.f32.mrb[0].mxu0
    %v892 = vadd.f32 %v307, %v891
    %v893 = vpop.f32.mrb[0].mxu0
    %v894 = vadd.f32 %v309, %v893
    %895 = vmatprep.mubr.f32.mxu0 0.0
    %896 = vmatmul.mubr.f32.gmra.mrb[0].mxu0 %v766
    %v897 = vpop.f32.mrb[0].mxu0
    %v898 = vadd.f32 %v313, %v897
    %v899 = vpop.f32.mrb[0].mxu0
    %v900 = vadd.f32 %v315, %v899
    %901 = vmatprep.mubr.f32.mxu0 0.0
    %902 = vmatmul.mubr.f32.gmra.mrb[0].mxu0 %v769
    %v903 = vpop.f32.mrb[0].mxu0
    %v904 = vadd.f32 %v319, %v903
    %v905 = vpop.f32.mrb[0].mxu0
    %v906 = vadd.f32 %v321, %v905
    %907 = vdwg.mxu0
    %908 = vmatprep.subr.mxu0 %v96
    %909 = vmatpush1.msra.mxu0 %v95
    %910 = vmatprep.subr.mxu0 0.0
    %911 = vmatpush1.msra.mxu0 0.0
    %912 = vmatprep.subr.mxu0 0.0
    %913 = vmatpush1.msra.mxu0 0.0
    %914 = vmatprep.subr.mxu0 0.0
    %915 = vmatpush1.msra.mxu0 0.0
    %916 = vmatprep.subr.mxu0 0.0
    %917 = vmatpush1.msra.mxu0 0.0
    %918 = vmatprep.subr.mxu0 0.0
    %919 = vmatpush1.msra.mxu0 0.0
    %920 = vmatprep.subr.mxu0 0.0
    %921 = vmatpush1.msra.mxu0 0.0
    %922 = vmatprep.subr.mxu0 0.0
    %923 = vmatpush1.msra.mxu0 0.0
    %924 = vmatprep.subr.mxu0 0.0
    %925 = vmatpush1.msra.mxu0 0.0
    %926 = vmatprep.subr.mxu0 0.0
    %927 = vmatpush1.msra.mxu0 0.0
    %928 = vmatprep.subr.mxu0 0.0
    %929 = vmatpush1.msra.mxu0 0.0
    %930 = vmatprep.subr.mxu0 0.0
    %931 = vmatpush1.msra.mxu0 0.0
    %932 = vmatprep.subr.mxu0 0.0
    %933 = vmatpush1.msra.mxu0 0.0
    %934 = vmatprep.subr.mxu0 0.0
    %935 = vmatpush1.msra.mxu0 0.0
    %936 = vmatprep.subr.mxu0 0.0
    %937 = vmatpush1.msra.mxu0 0.0
    %938 = vmatprep.subr.mxu0 0.0
    %939 = vmatpush1.msra.mxu0 0.0
    %940 = vmatprep.subr.mxu0 0.0
    %941 = vmatpush1.msra.mxu0 0.0
    %942 = vmatprep.subr.mxu0 0.0
    %943 = vmatpush1.msra.mxu0 0.0
    %944 = vmatprep.subr.mxu0 0.0
    %945 = vmatpush1.msra.mxu0 0.0
    %946 = vmatprep.subr.mxu0 0.0
    %947 = vmatpush1.msra.mxu0 0.0
    %948 = vmatprep.subr.mxu0 0.0
    %949 = vmatpush1.msra.mxu0 0.0
    %950 = vmatprep.subr.mxu0 0.0
    %951 = vmatpush1.msra.mxu0 0.0
    %952 = vmatprep.subr.mxu0 0.0
    %953 = vmatpush1.msra.mxu0 0.0
    %954 = vmatprep.subr.mxu0 0.0
    %955 = vmatpush1.msra.mxu0 0.0
    %956 = vmatprep.subr.mxu0 0.0
    %957 = vmatpush1.msra.mxu0 0.0
    %958 = vmatprep.subr.mxu0 0.0
    %959 = vmatpush1.msra.mxu0 0.0
    %960 = vmatprep.subr.mxu0 0.0
    %961 = vmatpush1.msra.mxu0 0.0
    %962 = vmatprep.subr.mxu0 0.0
    %963 = vmatpush1.msra.mxu0 0.0
    %964 = vmatprep.subr.mxu0 0.0
    %965 = vmatpush1.msra.mxu0 0.0
    %966 = vmatprep.subr.mxu0 0.0
    %967 = vmatpush1.msra.mxu0 0.0
    %968 = vmatprep.subr.mxu0 0.0
    %969 = vmatpush1.msra.mxu0 0.0
    %970 = vmatprep.subr.mxu0 0.0
    %971 = vmatpush1.msra.mxu0 0.0
    %972 = vmatprep.mubr.f32.mxu0 0.0
    %973 = vmatmul.mubr.f32.gmra.mrb[0].mxu0 %v736
    %v974 = vpop.f32.mrb[0].mxu0
    %v975 = vadd.f32 %v390, %v974
    %v976 = vpop.f32.mrb[0].mxu0
    %v977 = vadd.f32 %v392, %v976
    %978 = vmatprep.mubr.f32.mxu0 0.0
    %979 = vmatmul.mubr.f32.gmra.mrb[0].mxu0 %v739
    %v980 = vpop.f32.mrb[0].mxu0
    %v981 = vadd.f32 %v396, %v980
    %v982 = vpop.f32.mrb[0].mxu0
    %v983 = vadd.f32 %v398, %v982
    %984 = vmatprep.mubr.f32.mxu0 0.0
    %985 = vmatmul.mubr.f32.gmra.mrb[0].mxu0 %v742
    %v986 = vpop.f32.mrb[0].mxu0
    %v987 = vadd.f32 %v402, %v986
    %v988 = vpop.f32.mrb[0].mxu0
    %v989 = vadd.f32 %v404, %v988
    %990 = vmatprep.mubr.f32.mxu0 0.0
    %991 = vmatmul.mubr.f32.gmra.mrb[0].mxu0 %v745
    %v992 = vpop.f32.mrb[0].mxu0
    %v993 = vadd.f32 %v408, %v992
    %v994 = vpop.f32.mrb[0].mxu0
    %v995 = vadd.f32 %v410, %v994
    %996 = vmatprep.mubr.f32.mxu0 0.0
    %997 = vmatmul.mubr.f32.gmra.mrb[0].mxu0 %v748
    %v998 = vpop.f32.mrb[0].mxu0
    %v999 = vadd.f32 %v414, %v998
    %v1000 = vpop.f32.mrb[0].mxu0
    %v1001 = vadd.f32 %v416, %v1000
    %1002 = vmatprep.mubr.f32.mxu0 0.0
    %1003 = vmatmul.mubr.f32.gmra.mrb[0].mxu0 %v751
    %v1004 = vpop.f32.mrb[0].mxu0
    %v1005 = vadd.f32 %v420, %v1004
    %v1006 = vpop.f32.mrb[0].mxu0
    %v1007 = vadd.f32 %v422, %v1006
    %1008 = vmatprep.mubr.f32.mxu0 0.0
    %1009 = vmatmul.mubr.f32.gmra.mrb[0].mxu0 %v754
    %v1010 = vpop.f32.mrb[0].mxu0
    %v1011 = vadd.f32 %v426, %v1010
    %v1012 = vpop.f32.mrb[0].mxu0
    %v1013 = vadd.f32 %v428, %v1012
    %1014 = vmatprep.mubr.f32.mxu0 0.0
    %1015 = vmatmul.mubr.f32.gmra.mrb[0].mxu0 %v757
    %v1016 = vpop.f32.mrb[0].mxu0
    %v1017 = vadd.f32 %v432, %v1016
    %v1018 = vpop.f32.mrb[0].mxu0
    %v1019 = vadd.f32 %v434, %v1018
    %1020 = vmatprep.mubr.f32.mxu0 0.0
    %1021 = vmatmul.mubr.f32.gmra.mrb[0].mxu0 %v760
    %v1022 = vpop.f32.mrb[0].mxu0
    %v1023 = vadd.f32 %v438, %v1022
    %v1024 = vpop.f32.mrb[0].mxu0
    %v1025 = vadd.f32 %v440, %v1024
    %1026 = vmatprep.mubr.f32.mxu0 0.0
    %1027 = vmatmul.mubr.f32.gmra.mrb[0].mxu0 %v763
    %v1028 = vpop.f32.mrb[0].mxu0
    %v1029 = vadd.f32 %v444, %v1028
    %v1030 = vpop.f32.mrb[0].mxu0
    %v1031 = vadd.f32 %v446, %v1030
    %1032 = vmatprep.mubr.f32.mxu0 0.0
    %1033 = vmatmul.mubr.f32.gmra.mrb[0].mxu0 %v766
    %v1034 = vpop.f32.mrb[0].mxu0
    %v1035 = vadd.f32 %v450, %v1034
    %v1036 = vpop.f32.mrb[0].mxu0
    %v1037 = vadd.f32 %v452, %v1036
    %1038 = vmatprep.mubr.f32.mxu0 0.0
    %1039 = vmatmul.mubr.f32.gmra.mrb[0].mxu0 %v769
    %v1040 = vpop.f32.mrb[0].mxu0
    %v1041 = vadd.f32 %v456, %v1040
    %v1042 = vpop.f32.mrb[0].mxu0
    %v1043 = vadd.f32 %v458, %v1042
    %1044 = vdwg.mxu0
    %1045 = vmatprep.subr.mxu0 %v98
    %1046 = vmatpush1.msra.mxu0 %v97
    %1047 = vmatprep.subr.mxu0 0.0
    %1048 = vmatpush1.msra.mxu0 0.0
    %1049 = vmatprep.subr.mxu0 0.0
    %1050 = vmatpush1.msra.mxu0 0.0
    %1051 = vmatprep.subr.mxu0 0.0
    %1052 = vmatpush1.msra.mxu0 0.0
    %1053 = vmatprep.subr.mxu0 0.0
    %1054 = vmatpush1.msra.mxu0 0.0
    %1055 = vmatprep.subr.mxu0 0.0
    %1056 = vmatpush1.msra.mxu0 0.0
    %1057 = vmatprep.subr.mxu0 0.0
    %1058 = vmatpush1.msra.mxu0 0.0
    %1059 = vmatprep.subr.mxu0 0.0
    %1060 = vmatpush1.msra.mxu0 0.0
    %1061 = vmatprep.subr.mxu0 0.0
    %1062 = vmatpush1.msra.mxu0 0.0
    %1063 = vmatprep.subr.mxu0 0.0
    %1064 = vmatpush1.msra.mxu0 0.0
    %1065 = vmatprep.subr.mxu0 0.0
    %1066 = vmatpush1.msra.mxu0 0.0
    %1067 = vmatprep.subr.mxu0 0.0
    %1068 = vmatpush1.msra.mxu0 0.0
    %1069 = vmatprep.subr.mxu0 0.0
    %1070 = vmatpush1.msra.mxu0 0.0
    %1071 = vmatprep.subr.mxu0 0.0
    %1072 = vmatpush1.msra.mxu0 0.0
    %1073 = vmatprep.subr.mxu0 0.0
    %1074 = vmatpush1.msra.mxu0 0.0
    %1075 = vmatprep.subr.mxu0 0.0
    %1076 = vmatpush1.msra.mxu0 0.0
    %1077 = vmatprep.subr.mxu0 0.0
    %1078 = vmatpush1.msra.mxu0 0.0
    %1079 = vmatprep.subr.mxu0 0.0
    %1080 = vmatpush1.msra.mxu0 0.0
    %1081 = vmatprep.subr.mxu0 0.0
    %1082 = vmatpush1.msra.mxu0 0.0
    %1083 = vmatprep.subr.mxu0 0.0
    %1084 = vmatpush1.msra.mxu0 0.0
    %1085 = vmatprep.subr.mxu0 0.0
    %1086 = vmatpush1.msra.mxu0 0.0
    %1087 = vmatprep.subr.mxu0 0.0
    %1088 = vmatpush1.msra.mxu0 0.0
    %1089 = vmatprep.subr.mxu0 0.0
    %1090 = vmatpush1.msra.mxu0 0.0
    %1091 = vmatprep.subr.mxu0 0.0
    %1092 = vmatpush1.msra.mxu0 0.0
    %1093 = vmatprep.subr.mxu0 0.0
    %1094 = vmatpush1.msra.mxu0 0.0
    %1095 = vmatprep.subr.mxu0 0.0
    %1096 = vmatpush1.msra.mxu0 0.0
    %1097 = vmatprep.subr.mxu0 0.0
    %1098 = vmatpush1.msra.mxu0 0.0
    %1099 = vmatprep.subr.mxu0 0.0
    %1100 = vmatpush1.msra.mxu0 0.0
    %1101 = vmatprep.subr.mxu0 0.0
    %1102 = vmatpush1.msra.mxu0 0.0
    %1103 = vmatprep.subr.mxu0 0.0
    %1104 = vmatpush1.msra.mxu0 0.0
    %1105 = vmatprep.subr.mxu0 0.0
    %1106 = vmatpush1.msra.mxu0 0.0
    %1107 = vmatprep.subr.mxu0 0.0
    %1108 = vmatpush1.msra.mxu0 0.0
    %1109 = vmatprep.mubr.f32.mxu0 0.0
    %1110 = vmatmul.mubr.f32.gmra.mrb[0].mxu0 %v736
    %v1111 = vpop.f32.mrb[0].mxu0
    %v1112 = vadd.f32 %v527, %v1111
    %v1113 = vpop.f32.mrb[0].mxu0
    %v1114 = vadd.f32 %v529, %v1113
    %1115 = vmatprep.mubr.f32.mxu0 0.0
    %1116 = vmatmul.mubr.f32.gmra.mrb[0].mxu0 %v739
    %v1117 = vpop.f32.mrb[0].mxu0
    %v1118 = vadd.f32 %v533, %v1117
    %v1119 = vpop.f32.mrb[0].mxu0
    %v1120 = vadd.f32 %v535, %v1119
    %1121 = vmatprep.mubr.f32.mxu0 0.0
    %1122 = vmatmul.mubr.f32.gmra.mrb[0].mxu0 %v742
    %v1123 = vpop.f32.mrb[0].mxu0
    %v1124 = vadd.f32 %v539, %v1123
    %v1125 = vpop.f32.mrb[0].mxu0
    %v1126 = vadd.f32 %v541, %v1125
    %1127 = vmatprep.mubr.f32.mxu0 0.0
    %1128 = vmatmul.mubr.f32.gmra.mrb[0].mxu0 %v745
    %v1129 = vpop.f32.mrb[0].mxu0
    %v1130 = vadd.f32 %v545, %v1129
    %v1131 = vpop.f32.mrb[0].mxu0
    %v1132 = vadd.f32 %v547, %v1131
    %1133 = vmatprep.mubr.f32.mxu0 0.0
    %1134 = vmatmul.mubr.f32.gmra.mrb[0].mxu0 %v748
    %v1135 = vpop.f32.mrb[0].mxu0
    %v1136 = vadd.f32 %v551, %v1135
    %v1137 = vpop.f32.mrb[0].mxu0
    %v1138 = vadd.f32 %v553, %v1137
    %1139 = vmatprep.mubr.f32.mxu0 0.0
    %1140 = vmatmul.mubr.f32.gmra.mrb[0].mxu0 %v751
    %v1141 = vpop.f32.mrb[0].mxu0
    %v1142 = vadd.f32 %v557, %v1141
    %v1143 = vpop.f32.mrb[0].mxu0
    %v1144 = vadd.f32 %v559, %v1143
    %1145 = vmatprep.mubr.f32.mxu0 0.0
    %1146 = vmatmul.mubr.f32.gmra.mrb[0].mxu0 %v754
    %v1147 = vpop.f32.mrb[0].mxu0
    %v1148 = vadd.f32 %v563, %v1147
    %v1149 = vpop.f32.mrb[0].mxu0
    %v1150 = vadd.f32 %v565, %v1149
    %1151 = vmatprep.mubr.f32.mxu0 0.0
    %1152 = vmatmul.mubr.f32.gmra.mrb[0].mxu0 %v757
    %v1153 = vpop.f32.mrb[0].mxu0
    %v1154 = vadd.f32 %v569, %v1153
    %v1155 = vpop.f32.mrb[0].mxu0
    %v1156 = vadd.f32 %v571, %v1155
    %1157 = vmatprep.mubr.f32.mxu0 0.0
    %1158 = vmatmul.mubr.f32.gmra.mrb[0].mxu0 %v760
    %v1159 = vpop.f32.mrb[0].mxu0
    %v1160 = vadd.f32 %v575, %v1159
    %v1161 = vpop.f32.mrb[0].mxu0
    %v1162 = vadd.f32 %v577, %v1161
    %1163 = vmatprep.mubr.f32.mxu0 0.0
    %1164 = vmatmul.mubr.f32.gmra.mrb[0].mxu0 %v763
    %v1165 = vpop.f32.mrb[0].mxu0
    %v1166 = vadd.f32 %v581, %v1165
    %v1167 = vpop.f32.mrb[0].mxu0
    %v1168 = vadd.f32 %v583, %v1167
    %1169 = vmatprep.mubr.f32.mxu0 0.0
    %1170 = vmatmul.mubr.f32.gmra.mrb[0].mxu0 %v766
    %v1171 = vpop.f32.mrb[0].mxu0
    %v1172 = vadd.f32 %v587, %v1171
    %v1173 = vpop.f32.mrb[0].mxu0
    %v1174 = vadd.f32 %v589, %v1173
    %1175 = vmatprep.mubr.f32.mxu0 0.0
    %1176 = vmatmul.mubr.f32.gmra.mrb[0].mxu0 %v769
    %v1177 = vpop.f32.mrb[0].mxu0
    %v1178 = vadd.f32 %v593, %v1177
    %v1179 = vpop.f32.mrb[0].mxu0
    %v1180 = vadd.f32 %v595, %v1179
    %1181 = vdwg.mxu0
    %1182 = vmatprep.subr.mxu0 %v100
    %1183 = vmatpush1.msra.mxu0 %v99
    %1184 = vmatprep.subr.mxu0 0.0
    %1185 = vmatpush1.msra.mxu0 0.0
    %1186 = vmatprep.subr.mxu0 0.0
    %1187 = vmatpush1.msra.mxu0 0.0
    %1188 = vmatprep.subr.mxu0 0.0
    %1189 = vmatpush1.msra.mxu0 0.0
    %1190 = vmatprep.subr.mxu0 0.0
    %1191 = vmatpush1.msra.mxu0 0.0
    %1192 = vmatprep.subr.mxu0 0.0
    %1193 = vmatpush1.msra.mxu0 0.0
    %1194 = vmatprep.subr.mxu0 0.0
    %1195 = vmatpush1.msra.mxu0 0.0
    %1196 = vmatprep.subr.mxu0 0.0
    %1197 = vmatpush1.msra.mxu0 0.0
    %1198 = vmatprep.subr.mxu0 0.0
    %1199 = vmatpush1.msra.mxu0 0.0
    %1200 = vmatprep.subr.mxu0 0.0
    %1201 = vmatpush1.msra.mxu0 0.0
    %1202 = vmatprep.subr.mxu0 0.0
    %1203 = vmatpush1.msra.mxu0 0.0
    %1204 = vmatprep.subr.mxu0 0.0
    %1205 = vmatpush1.msra.mxu0 0.0
    %1206 = vmatprep.subr.mxu0 0.0
    %1207 = vmatpush1.msra.mxu0 0.0
    %1208 = vmatprep.subr.mxu0 0.0
    %1209 = vmatpush1.msra.mxu0 0.0
    %1210 = vmatprep.subr.mxu0 0.0
    %1211 = vmatpush1.msra.mxu0 0.0
    %1212 = vmatprep.subr.mxu0 0.0
    %1213 = vmatpush1.msra.mxu0 0.0
    %1214 = vmatprep.subr.mxu0 0.0
    %1215 = vmatpush1.msra.mxu0 0.0
    %1216 = vmatprep.subr.mxu0 0.0
    %1217 = vmatpush1.msra.mxu0 0.0
    %1218 = vmatprep.subr.mxu0 0.0
    %1219 = vmatpush1.msra.mxu0 0.0
    %1220 = vmatprep.subr.mxu0 0.0
    %1221 = vmatpush1.msra.mxu0 0.0
    %1222 = vmatprep.subr.mxu0 0.0
    %1223 = vmatpush1.msra.mxu0 0.0
    %1224 = vmatprep.subr.mxu0 0.0
    %1225 = vmatpush1.msra.mxu0 0.0
    %1226 = vmatprep.subr.mxu0 0.0
    %1227 = vmatpush1.msra.mxu0 0.0
    %1228 = vmatprep.subr.mxu0 0.0
    %1229 = vmatpush1.msra.mxu0 0.0
    %1230 = vmatprep.subr.mxu0 0.0
    %1231 = vmatpush1.msra.mxu0 0.0
    %1232 = vmatprep.subr.mxu0 0.0
    %1233 = vmatpush1.msra.mxu0 0.0
    %1234 = vmatprep.subr.mxu0 0.0
    %1235 = vmatpush1.msra.mxu0 0.0
    %1236 = vmatprep.subr.mxu0 0.0
    %1237 = vmatpush1.msra.mxu0 0.0
    %1238 = vmatprep.subr.mxu0 0.0
    %1239 = vmatpush1.msra.mxu0 0.0
    %1240 = vmatprep.subr.mxu0 0.0
    %1241 = vmatpush1.msra.mxu0 0.0
    %1242 = vmatprep.subr.mxu0 0.0
    %1243 = vmatpush1.msra.mxu0 0.0
    %1244 = vmatprep.subr.mxu0 0.0
    %1245 = vmatpush1.msra.mxu0 0.0
    %1246 = vmatprep.mubr.f32.mxu0 0.0
    %1247 = vmatmul.mubr.f32.gmra.mrb[0].mxu0 %v736
    %v1248 = vpop.f32.mrb[0].mxu0
    %v1249 = vadd.f32 %v664, %v1248
    %v1250 = vpop.f32.mrb[0].mxu0
    %v1251 = vadd.f32 %v666, %v1250
    %1252 = vmatprep.mubr.f32.mxu0 0.0
    %1253 = vmatmul.mubr.f32.gmra.mrb[0].mxu0 %v739
    %v1254 = vpop.f32.mrb[0].mxu0
    %v1255 = vadd.f32 %v670, %v1254
    %v1256 = vpop.f32.mrb[0].mxu0
    %v1257 = vadd.f32 %v672, %v1256
    %1258 = vmatprep.mubr.f32.mxu0 0.0
    %1259 = vmatmul.mubr.f32.gmra.mrb[0].mxu0 %v742
    %v1260 = vpop.f32.mrb[0].mxu0
    %v1261 = vadd.f32 %v676, %v1260
    %v1262 = vpop.f32.mrb[0].mxu0
    %v1263 = vadd.f32 %v678, %v1262
    %1264 = vmatprep.mubr.f32.mxu0 0.0
    %1265 = vmatmul.mubr.f32.gmra.mrb[0].mxu0 %v745
    %v1266 = vpop.f32.mrb[0].mxu0
    %v1267 = vadd.f32 %v682, %v1266
    %v1268 = vpop.f32.mrb[0].mxu0
    %v1269 = vadd.f32 %v684, %v1268
    %1270 = vmatprep.mubr.f32.mxu0 0.0
    %1271 = vmatmul.mubr.f32.gmra.mrb[0].mxu0 %v748
    %v1272 = vpop.f32.mrb[0].mxu0
    %v1273 = vadd.f32 %v688, %v1272
    %v1274 = vpop.f32.mrb[0].mxu0
    %v1275 = vadd.f32 %v690, %v1274
    %1276 = vmatprep.mubr.f32.mxu0 0.0
    %1277 = vmatmul.mubr.f32.gmra.mrb[0].mxu0 %v751
    %v1278 = vpop.f32.mrb[0].mxu0
    %v1279 = vadd.f32 %v694, %v1278
    %v1280 = vpop.f32.mrb[0].mxu0
    %v1281 = vadd.f32 %v696, %v1280
    %1282 = vmatprep.mubr.f32.mxu0 0.0
    %1283 = vmatmul.mubr.f32.gmra.mrb[0].mxu0 %v754
    %v1284 = vpop.f32.mrb[0].mxu0
    %v1285 = vadd.f32 %v700, %v1284
    %v1286 = vpop.f32.mrb[0].mxu0
    %v1287 = vadd.f32 %v702, %v1286
    %1288 = vmatprep.mubr.f32.mxu0 0.0
    %1289 = vmatmul.mubr.f32.gmra.mrb[0].mxu0 %v757
    %v1290 = vpop.f32.mrb[0].mxu0
    %v1291 = vadd.f32 %v706, %v1290
    %v1292 = vpop.f32.mrb[0].mxu0
    %v1293 = vadd.f32 %v708, %v1292
    %1294 = vmatprep.mubr.f32.mxu0 0.0
    %1295 = vmatmul.mubr.f32.gmra.mrb[0].mxu0 %v760
    %v1296 = vpop.f32.mrb[0].mxu0
    %v1297 = vadd.f32 %v712, %v1296
    %v1298 = vpop.f32.mrb[0].mxu0
    %v1299 = vadd.f32 %v714, %v1298
    %1300 = vmatprep.mubr.f32.mxu0 0.0
    %1301 = vmatmul.mubr.f32.gmra.mrb[0].mxu0 %v763
    %v1302 = vpop.f32.mrb[0].mxu0
    %v1303 = vadd.f32 %v718, %v1302
    %v1304 = vpop.f32.mrb[0].mxu0
    %v1305 = vadd.f32 %v720, %v1304
    %1306 = vmatprep.mubr.f32.mxu0 0.0
    %1307 = vmatmul.mubr.f32.gmra.mrb[0].mxu0 %v766
    %v1308 = vpop.f32.mrb[0].mxu0
    %v1309 = vadd.f32 %v724, %v1308
    %v1310 = vpop.f32.mrb[0].mxu0
    %v1311 = vadd.f32 %v726, %v1310
    %1312 = vmatprep.mubr.f32.mxu0 0.0
    %1313 = vmatmul.mubr.f32.gmra.mrb[0].mxu0 %v769
    %v1314 = vpop.f32.mrb[0].mxu0
    %v1315 = vadd.f32 %v730, %v1314
    %v1316 = vpop.f32.mrb[0].mxu0
    %v1317 = vadd.f32 %v732, %v1316
    %1318 = vdwg.mxu0
    %v1319 = vmax.f32 %v838, 0.0
    %v1320 = vmax.f32 %v840, 0.0
    %v1321 = vmax.f32 %v975, 0.0
    %v1322 = vmax.f32 %v977, 0.0
    %v1323 = vmax.f32 %v1112, 0.0
    %v1324 = vmax.f32 %v1114, 0.0
    %v1325 = vmax.f32 %v1249, 0.0
    %v1326 = vmax.f32 %v1251, 0.0
    %v1327 = vmax.f32 %v844, 0.0
    %v1328 = vmax.f32 %v846, 0.0
    %v1329 = vmax.f32 %v981, 0.0
    %v1330 = vmax.f32 %v983, 0.0
    %v1331 = vmax.f32 %v1118, 0.0
    %v1332 = vmax.f32 %v1120, 0.0
    %v1333 = vmax.f32 %v1255, 0.0
    %v1334 = vmax.f32 %v1257, 0.0
    %v1335 = vmax.f32 %v850, 0.0
    %v1336 = vmax.f32 %v852, 0.0
    %v1337 = vmax.f32 %v987, 0.0
    %v1338 = vmax.f32 %v989, 0.0
    %v1339 = vmax.f32 %v1124, 0.0
    %v1340 = vmax.f32 %v1126, 0.0
    %v1341 = vmax.f32 %v1261, 0.0
    %v1342 = vmax.f32 %v1263, 0.0
    %v1343 = vmax.f32 %v856, 0.0
    %v1344 = vmax.f32 %v858, 0.0
    %v1345 = vmax.f32 %v993, 0.0
    %v1346 = vmax.f32 %v995, 0.0
    %v1347 = vmax.f32 %v1130, 0.0
    %v1348 = vmax.f32 %v1132, 0.0
    %v1349 = vmax.f32 %v1267, 0.0
    %v1350 = vmax.f32 %v1269, 0.0
    %v1351 = vmax.f32 %v862, 0.0
    %v1352 = vmax.f32 %v864, 0.0
    %v1353 = vmax.f32 %v999, 0.0
    %v1354 = vmax.f32 %v1001, 0.0
    %v1355 = vmax.f32 %v1136, 0.0
    %v1356 = vmax.f32 %v1138, 0.0
    %v1357 = vmax.f32 %v1273, 0.0
    %v1358 = vmax.f32 %v1275, 0.0
    %v1359 = vmax.f32 %v868, 0.0
    %v1360 = vmax.f32 %v870, 0.0
    %v1361 = vmax.f32 %v1005, 0.0
    %v1362 = vmax.f32 %v1007, 0.0
    %v1363 = vmax.f32 %v1142, 0.0
    %v1364 = vmax.f32 %v1144, 0.0
    %v1365 = vmax.f32 %v1279, 0.0
    %v1366 = vmax.f32 %v1281, 0.0
    %v1367 = vmax.f32 %v874, 0.0
    %v1368 = vmax.f32 %v876, 0.0
    %v1369 = vmax.f32 %v1011, 0.0
    %v1370 = vmax.f32 %v1013, 0.0
    %v1371 = vmax.f32 %v1148, 0.0
    %v1372 = vmax.f32 %v1150, 0.0
    %v1373 = vmax.f32 %v1285, 0.0
    %v1374 = vmax.f32 %v1287, 0.0
    %v1375 = vmax.f32 %v880, 0.0
    %v1376 = vmax.f32 %v882, 0.0
    %v1377 = vmax.f32 %v1017, 0.0
    %v1378 = vmax.f32 %v1019, 0.0
    %v1379 = vmax.f32 %v1154, 0.0
    %v1380 = vmax.f32 %v1156, 0.0
    %v1381 = vmax.f32 %v1291, 0.0
    %v1382 = vmax.f32 %v1293, 0.0
    %v1383 = vmax.f32 %v886, 0.0
    %v1384 = vmax.f32 %v888, 0.0
    %v1385 = vmax.f32 %v1023, 0.0
    %v1386 = vmax.f32 %v1025, 0.0
    %v1387 = vmax.f32 %v1160, 0.0
    %v1388 = vmax.f32 %v1162, 0.0
    %v1389 = vmax.f32 %v1297, 0.0
    %v1390 = vmax.f32 %v1299, 0.0
    %v1391 = vmax.f32 %v892, 0.0
    %v1392 = vmax.f32 %v894, 0.0
    %v1393 = vmax.f32 %v1029, 0.0
    %v1394 = vmax.f32 %v1031, 0.0
    %v1395 = vmax.f32 %v1166, 0.0
    %v1396 = vmax.f32 %v1168, 0.0
    %v1397 = vmax.f32 %v1303, 0.0
    %v1398 = vmax.f32 %v1305, 0.0
    %v1399 = vmax.f32 %v898, 0.0
    %v1400 = vmax.f32 %v900, 0.0
    %v1401 = vmax.f32 %v1035, 0.0
    %v1402 = vmax.f32 %v1037, 0.0
    %v1403 = vmax.f32 %v1172, 0.0
    %v1404 = vmax.f32 %v1174, 0.0
    %v1405 = vmax.f32 %v1309, 0.0
    %v1406 = vmax.f32 %v1311, 0.0
    %v1407 = vmax.f32 %v904, 0.0
    %v1408 = vmax.f32 %v906, 0.0
    %v1409 = vmax.f32 %v1041, 0.0
    %v1410 = vmax.f32 %v1043, 0.0
    %v1411 = vmax.f32 %v1178, 0.0
    %v1412 = vmax.f32 %v1180, 0.0
    %v1413 = vmax.f32 %v1315, 0.0
    %v1414 = vmax.f32 %v1317, 0.0
    %v1415 = vld [vmem:[%s5] sm:$0xff]
    %v1416 = vld [vmem:[%s5 + $0x8] sm:$0x7f]
    %v1417 = vld [vmem:[%s6] sm:$0xff]
    %v1418 = vld [vmem:[%s6 + $0x8] sm:$0x7f]
    %1420 = vset.pattern.permute.xlu0 0
    %1421 = vperm.xlu0 %1420, %v1417
    %v1422 = vpop.permute.xlu0 %1421
    %1425 = vset.pattern.permute.xlu0 0
    %1426 = vperm.xlu0 %1425, %v1418
    %v1427 = vpop.permute.xlu0 %1426
    %vm1429 = vcmask 785408
    %v1431 = vsel %vm1429, %v1415, 0
    %v1434 = vsel %vm1429, %v1416, 0
    %1436 = vmatprep.subr.mxu0 %v1320
    %1437 = vmatpush1.msra.mxu0 %v1319
    %1438 = vmatprep.subr.mxu0 %v1328
    %1439 = vmatpush1.msra.mxu0 %v1327
    %1440 = vmatprep.subr.mxu0 %v1336
    %1441 = vmatpush1.msra.mxu0 %v1335
    %1442 = vmatprep.subr.mxu0 %v1344
    %1443 = vmatpush1.msra.mxu0 %v1343
    %1444 = vmatprep.subr.mxu0 %v1352
    %1445 = vmatpush1.msra.mxu0 %v1351
    %1446 = vmatprep.subr.mxu0 %v1360
    %1447 = vmatpush1.msra.mxu0 %v1359
    %1448 = vmatprep.subr.mxu0 %v1368
    %1449 = vmatpush1.msra.mxu0 %v1367
    %1450 = vmatprep.subr.mxu0 %v1376
    %1451 = vmatpush1.msra.mxu0 %v1375
    %1452 = vmatprep.subr.mxu0 %v1384
    %1453 = vmatpush1.msra.mxu0 %v1383
    %1454 = vmatprep.subr.mxu0 %v1392
    %1455 = vmatpush1.msra.mxu0 %v1391
    %1456 = vmatprep.subr.mxu0 %v1400
    %1457 = vmatpush1.msra.mxu0 %v1399
    %1458 = vmatprep.subr.mxu0 %v1408
    %1459 = vmatpush1.msra.mxu0 %v1407
    %1460 = vmatprep.subr.mxu0 0.0
    %1461 = vmatpush1.msra.mxu0 0.0
    %1462 = vmatprep.subr.mxu0 0.0
    %1463 = vmatpush1.msra.mxu0 0.0
    %1464 = vmatprep.subr.mxu0 0.0
    %1465 = vmatpush1.msra.mxu0 0.0
    %1466 = vmatprep.subr.mxu0 0.0
    %1467 = vmatpush1.msra.mxu0 0.0
    %1468 = vmatprep.subr.mxu0 0.0
    %1469 = vmatpush1.msra.mxu0 0.0
    %1470 = vmatprep.subr.mxu0 0.0
    %1471 = vmatpush1.msra.mxu0 0.0
    %1472 = vmatprep.subr.mxu0 0.0
    %1473 = vmatpush1.msra.mxu0 0.0
    %1474 = vmatprep.subr.mxu0 0.0
    %1475 = vmatpush1.msra.mxu0 0.0
    %1476 = vmatprep.subr.mxu0 0.0
    %1477 = vmatpush1.msra.mxu0 0.0
    %1478 = vmatprep.subr.mxu0 0.0
    %1479 = vmatpush1.msra.mxu0 0.0
    %1480 = vmatprep.subr.mxu0 0.0
    %1481 = vmatpush1.msra.mxu0 0.0
    %1482 = vmatprep.subr.mxu0 0.0
    %1483 = vmatpush1.msra.mxu0 0.0
    %1484 = vmatprep.subr.mxu0 0.0
    %1485 = vmatpush1.msra.mxu0 0.0
    %1486 = vmatprep.subr.mxu0 0.0
    %1487 = vmatpush1.msra.mxu0 0.0
    %1488 = vmatprep.subr.mxu0 0.0
    %1489 = vmatpush1.msra.mxu0 0.0
    %1490 = vmatprep.subr.mxu0 0.0
    %1491 = vmatpush1.msra.mxu0 0.0
    %1492 = vmatprep.subr.mxu0 0.0
    %1493 = vmatpush1.msra.mxu0 0.0
    %1494 = vmatprep.subr.mxu0 0.0
    %1495 = vmatpush1.msra.mxu0 0.0
    %1496 = vmatprep.subr.mxu0 0.0
    %1497 = vmatpush1.msra.mxu0 0.0
    %1498 = vmatprep.subr.mxu0 0.0
    %1499 = vmatpush1.msra.mxu0 0.0
    %1500 = vmatprep.mubr.f32.mxu0 0.0
    %1501 = vmatmul.mubr.f32.gmra.mrb[0].mxu0 %v1431
    %v1502 = vpop.f32.mrb[0].mxu0
    %v1503 = vadd.f32 %v1422, %v1502
    %v1504 = vpop.f32.mrb[0].mxu0
    %v1505 = vadd.f32 %v1422, %v1504
    %1506 = vmatprep.mubr.f32.mxu0 0.0
    %1507 = vmatmul.mubr.f32.gmra.mrb[0].mxu0 %v1434
    %v1508 = vpop.f32.mrb[0].mxu0
    %v1509 = vadd.f32 %v1427, %v1508
    %v1510 = vpop.f32.mrb[0].mxu0
    %v1511 = vadd.f32 %v1427, %v1510
    %1512 = vdwg.mxu0
    %1513 = vmatprep.subr.mxu0 %v1322
    %1514 = vmatpush1.msra.mxu0 %v1321
    %1515 = vmatprep.subr.mxu0 %v1330
    %1516 = vmatpush1.msra.mxu0 %v1329
    %1517 = vmatprep.subr.mxu0 %v1338
    %1518 = vmatpush1.msra.mxu0 %v1337
    %1519 = vmatprep.subr.mxu0 %v1346
    %1520 = vmatpush1.msra.mxu0 %v1345
    %1521 = vmatprep.subr.mxu0 %v1354
    %1522 = vmatpush1.msra.mxu0 %v1353
    %1523 = vmatprep.subr.mxu0 %v1362
    %1524 = vmatpush1.msra.mxu0 %v1361
    %1525 = vmatprep.subr.mxu0 %v1370
    %1526 = vmatpush1.msra.mxu0 %v1369
    %1527 = vmatprep.subr.mxu0 %v1378
    %1528 = vmatpush1.msra.mxu0 %v1377
    %1529 = vmatprep.subr.mxu0 %v1386
    %1530 = vmatpush1.msra.mxu0 %v1385
    %1531 = vmatprep.subr.mxu0 %v1394
    %1532 = vmatpush1.msra.mxu0 %v1393
    %1533 = vmatprep.subr.mxu0 %v1402
    %1534 = vmatpush1.msra.mxu0 %v1401
    %1535 = vmatprep.subr.mxu0 %v1410
    %1536 = vmatpush1.msra.mxu0 %v1409
    %1537 = vmatprep.subr.mxu0 0.0
    %1538 = vmatpush1.msra.mxu0 0.0
    %1539 = vmatprep.subr.mxu0 0.0
    %1540 = vmatpush1.msra.mxu0 0.0
    %1541 = vmatprep.subr.mxu0 0.0
    %1542 = vmatpush1.msra.mxu0 0.0
    %1543 = vmatprep.subr.mxu0 0.0
    %1544 = vmatpush1.msra.mxu0 0.0
    %1545 = vmatprep.subr.mxu0 0.0
    %1546 = vmatpush1.msra.mxu0 0.0
    %1547 = vmatprep.subr.mxu0 0.0
    %1548 = vmatpush1.msra.mxu0 0.0
    %1549 = vmatprep.subr.mxu0 0.0
    %1550 = vmatpush1.msra.mxu0 0.0
    %1551 = vmatprep.subr.mxu0 0.0
    %1552 = vmatpush1.msra.mxu0 0.0
    %1553 = vmatprep.subr.mxu0 0.0
    %1554 = vmatpush1.msra.mxu0 0.0
    %1555 = vmatprep.subr.mxu0 0.0
    %1556 = vmatpush1.msra.mxu0 0.0
    %1557 = vmatprep.subr.mxu0 0.0
    %1558 = vmatpush1.msra.mxu0 0.0
    %1559 = vmatprep.subr.mxu0 0.0
    %1560 = vmatpush1.msra.mxu0 0.0
    %1561 = vmatprep.subr.mxu0 0.0
    %1562 = vmatpush1.msra.mxu0 0.0
    %1563 = vmatprep.subr.mxu0 0.0
    %1564 = vmatpush1.msra.mxu0 0.0
    %1565 = vmatprep.subr.mxu0 0.0
    %1566 = vmatpush1.msra.mxu0 0.0
    %1567 = vmatprep.subr.mxu0 0.0
    %1568 = vmatpush1.msra.mxu0 0.0
    %1569 = vmatprep.subr.mxu0 0.0
    %1570 = vmatpush1.msra.mxu0 0.0
    %1571 = vmatprep.subr.mxu0 0.0
    %1572 = vmatpush1.msra.mxu0 0.0
    %1573 = vmatprep.subr.mxu0 0.0
    %1574 = vmatpush1.msra.mxu0 0.0
    %1575 = vmatprep.subr.mxu0 0.0
    %1576 = vmatpush1.msra.mxu0 0.0
    %1577 = vmatprep.mubr.f32.mxu0 0.0
    %1578 = vmatmul.mubr.f32.gmra.mrb[0].mxu0 %v1431
    %v1579 = vpop.f32.mrb[0].mxu0
    %v1580 = vadd.f32 %v1422, %v1579
    %v1581 = vpop.f32.mrb[0].mxu0
    %v1582 = vadd.f32 %v1422, %v1581
    %1583 = vmatprep.mubr.f32.mxu0 0.0
    %1584 = vmatmul.mubr.f32.gmra.mrb[0].mxu0 %v1434
    %v1585 = vpop.f32.mrb[0].mxu0
    %v1586 = vadd.f32 %v1427, %v1585
    %v1587 = vpop.f32.mrb[0].mxu0
    %v1588 = vadd.f32 %v1427, %v1587
    %1589 = vdwg.mxu0
    %1590 = vmatprep.subr.mxu0 %v1324
    %1591 = vmatpush1.msra.mxu0 %v1323
    %1592 = vmatprep.subr.mxu0 %v1332
    %1593 = vmatpush1.msra.mxu0 %v1331
    %1594 = vmatprep.subr.mxu0 %v1340
    %1595 = vmatpush1.msra.mxu0 %v1339
    %1596 = vmatprep.subr.mxu0 %v1348
    %1597 = vmatpush1.msra.mxu0 %v1347
    %1598 = vmatprep.subr.mxu0 %v1356
    %1599 = vmatpush1.msra.mxu0 %v1355
    %1600 = vmatprep.subr.mxu0 %v1364
    %1601 = vmatpush1.msra.mxu0 %v1363
    %1602 = vmatprep.subr.mxu0 %v1372
    %1603 = vmatpush1.msra.mxu0 %v1371
    %1604 = vmatprep.subr.mxu0 %v1380
    %1605 = vmatpush1.msra.mxu0 %v1379
    %1606 = vmatprep.subr.mxu0 %v1388
    %1607 = vmatpush1.msra.mxu0 %v1387
    %1608 = vmatprep.subr.mxu0 %v1396
    %1609 = vmatpush1.msra.mxu0 %v1395
    %1610 = vmatprep.subr.mxu0 %v1404
    %1611 = vmatpush1.msra.mxu0 %v1403
    %1612 = vmatprep.subr.mxu0 %v1412
    %1613 = vmatpush1.msra.mxu0 %v1411
    %1614 = vmatprep.subr.mxu0 0.0
    %1615 = vmatpush1.msra.mxu0 0.0
    %1616 = vmatprep.subr.mxu0 0.0
    %1617 = vmatpush1.msra.mxu0 0.0
    %1618 = vmatprep.subr.mxu0 0.0
    %1619 = vmatpush1.msra.mxu0 0.0
    %1620 = vmatprep.subr.mxu0 0.0
    %1621 = vmatpush1.msra.mxu0 0.0
    %1622 = vmatprep.subr.mxu0 0.0
    %1623 = vmatpush1.msra.mxu0 0.0
    %1624 = vmatprep.subr.mxu0 0.0
    %1625 = vmatpush1.msra.mxu0 0.0
    %1626 = vmatprep.subr.mxu0 0.0
    %1627 = vmatpush1.msra.mxu0 0.0
    %1628 = vmatprep.subr.mxu0 0.0
    %1629 = vmatpush1.msra.mxu0 0.0
    %1630 = vmatprep.subr.mxu0 0.0
    %1631 = vmatpush1.msra.mxu0 0.0
    %1632 = vmatprep.subr.mxu0 0.0
    %1633 = vmatpush1.msra.mxu0 0.0
    %1634 = vmatprep.subr.mxu0 0.0
    %1635 = vmatpush1.msra.mxu0 0.0
    %1636 = vmatprep.subr.mxu0 0.0
    %1637 = vmatpush1.msra.mxu0 0.0
    %1638 = vmatprep.subr.mxu0 0.0
    %1639 = vmatpush1.msra.mxu0 0.0
    %1640 = vmatprep.subr.mxu0 0.0
    %1641 = vmatpush1.msra.mxu0 0.0
    %1642 = vmatprep.subr.mxu0 0.0
    %1643 = vmatpush1.msra.mxu0 0.0
    %1644 = vmatprep.subr.mxu0 0.0
    %1645 = vmatpush1.msra.mxu0 0.0
    %1646 = vmatprep.subr.mxu0 0.0
    %1647 = vmatpush1.msra.mxu0 0.0
    %1648 = vmatprep.subr.mxu0 0.0
    %1649 = vmatpush1.msra.mxu0 0.0
    %1650 = vmatprep.subr.mxu0 0.0
    %1651 = vmatpush1.msra.mxu0 0.0
    %1652 = vmatprep.subr.mxu0 0.0
    %1653 = vmatpush1.msra.mxu0 0.0
    %1654 = vmatprep.mubr.f32.mxu0 0.0
    %1655 = vmatmul.mubr.f32.gmra.mrb[0].mxu0 %v1431
    %v1656 = vpop.f32.mrb[0].mxu0
    %v1657 = vadd.f32 %v1422, %v1656
    %v1658 = vpop.f32.mrb[0].mxu0
    %v1659 = vadd.f32 %v1422, %v1658
    %1660 = vmatprep.mubr.f32.mxu0 0.0
    %1661 = vmatmul.mubr.f32.gmra.mrb[0].mxu0 %v1434
    %v1662 = vpop.f32.mrb[0].mxu0
    %v1663 = vadd.f32 %v1427, %v1662
    %v1664 = vpop.f32.mrb[0].mxu0
    %v1665 = vadd.f32 %v1427, %v1664
    %1666 = vdwg.mxu0
    %1667 = vmatprep.subr.mxu0 %v1326
    %1668 = vmatpush1.msra.mxu0 %v1325
    %1669 = vmatprep.subr.mxu0 %v1334
    %1670 = vmatpush1.msra.mxu0 %v1333
    %1671 = vmatprep.subr.mxu0 %v1342
    %1672 = vmatpush1.msra.mxu0 %v1341
    %1673 = vmatprep.subr.mxu0 %v1350
    %1674 = vmatpush1.msra.mxu0 %v1349
    %1675 = vmatprep.subr.mxu0 %v1358
    %1676 = vmatpush1.msra.mxu0 %v1357
    %1677 = vmatprep.subr.mxu0 %v1366
    %1678 = vmatpush1.msra.mxu0 %v1365
    %1679 = vmatprep.subr.mxu0 %v1374
    %1680 = vmatpush1.msra.mxu0 %v1373
    %1681 = vmatprep.subr.mxu0 %v1382
    %1682 = vmatpush1.msra.mxu0 %v1381
    %1683 = vmatprep.subr.mxu0 %v1390
    %1684 = vmatpush1.msra.mxu0 %v1389
    %1685 = vmatprep.subr.mxu0 %v1398
    %1686 = vmatpush1.msra.mxu0 %v1397
    %1687 = vmatprep.subr.mxu0 %v1406
    %1688 = vmatpush1.msra.mxu0 %v1405
    %1689 = vmatprep.subr.mxu0 %v1414
    %1690 = vmatpush1.msra.mxu0 %v1413
    %1691 = vmatprep.subr.mxu0 0.0
    %1692 = vmatpush1.msra.mxu0 0.0
    %1693 = vmatprep.subr.mxu0 0.0
    %1694 = vmatpush1.msra.mxu0 0.0
    %1695 = vmatprep.subr.mxu0 0.0
    %1696 = vmatpush1.msra.mxu0 0.0
    %1697 = vmatprep.subr.mxu0 0.0
    %1698 = vmatpush1.msra.mxu0 0.0
    %1699 = vmatprep.subr.mxu0 0.0
    %1700 = vmatpush1.msra.mxu0 0.0
    %1701 = vmatprep.subr.mxu0 0.0
    %1702 = vmatpush1.msra.mxu0 0.0
    %1703 = vmatprep.subr.mxu0 0.0
    %1704 = vmatpush1.msra.mxu0 0.0
    %1705 = vmatprep.subr.mxu0 0.0
    %1706 = vmatpush1.msra.mxu0 0.0
    %1707 = vmatprep.subr.mxu0 0.0
    %1708 = vmatpush1.msra.mxu0 0.0
    %1709 = vmatprep.subr.mxu0 0.0
    %1710 = vmatpush1.msra.mxu0 0.0
    %1711 = vmatprep.subr.mxu0 0.0
    %1712 = vmatpush1.msra.mxu0 0.0
    %1713 = vmatprep.subr.mxu0 0.0
    %1714 = vmatpush1.msra.mxu0 0.0
    %1715 = vmatprep.subr.mxu0 0.0
    %1716 = vmatpush1.msra.mxu0 0.0
    %1717 = vmatprep.subr.mxu0 0.0
    %1718 = vmatpush1.msra.mxu0 0.0
    %1719 = vmatprep.subr.mxu0 0.0
    %1720 = vmatpush1.msra.mxu0 0.0
    %1721 = vmatprep.subr.mxu0 0.0
    %1722 = vmatpush1.msra.mxu0 0.0
    %1723 = vmatprep.subr.mxu0 0.0
    %1724 = vmatpush1.msra.mxu0 0.0
    %1725 = vmatprep.subr.mxu0 0.0
    %1726 = vmatpush1.msra.mxu0 0.0
    %1727 = vmatprep.subr.mxu0 0.0
    %1728 = vmatpush1.msra.mxu0 0.0
    %1729 = vmatprep.subr.mxu0 0.0
    %1730 = vmatpush1.msra.mxu0 0.0
    %1731 = vmatprep.mubr.f32.mxu0 0.0
    %1732 = vmatmul.mubr.f32.gmra.mrb[0].mxu0 %v1431
    %v1733 = vpop.f32.mrb[0].mxu0
    %v1734 = vadd.f32 %v1422, %v1733
    %v1735 = vpop.f32.mrb[0].mxu0
    %v1736 = vadd.f32 %v1422, %v1735
    %1737 = vmatprep.mubr.f32.mxu0 0.0
    %1738 = vmatmul.mubr.f32.gmra.mrb[0].mxu0 %v1434
    %v1739 = vpop.f32.mrb[0].mxu0
    %v1740 = vadd.f32 %v1427, %v1739
    %v1741 = vpop.f32.mrb[0].mxu0
    %v1742 = vadd.f32 %v1427, %v1741
    %1743 = vdwg.mxu0
    %v1744 = vcombine.low %v1503, %v1580
    %v1745 = vcombine.high %v1503, %v1580
    %v1747 = vunpack.c.l.s4 1983009808
    %v1748 = vunpack.c.0.s8 %v1747
    %v1749 = vlaneseq
    %v1750 = vshrl.u32 %v1749, 7
    %v1751 = vsub.s32 %v1748, %v1750
    %v1752 = vrot.slane %v1744, %v1751
    %v1754 = vunpack.c.l.s4 1983009808
    %v1755 = vunpack.c.0.s8 %v1754
    %v1756 = vlaneseq
    %v1757 = vshrl.u32 %v1756, 7
    %v1758 = vsub.s32 %v1755, %v1757
    %v1759 = vrot.slane %v1745, %v1758
    %v1760 = vcombine.low %v1505, %v1582
    %v1761 = vcombine.high %v1505, %v1582
    %v1763 = vunpack.c.l.s4 1983009808
    %v1764 = vunpack.c.0.s8 %v1763
    %v1765 = vlaneseq
    %v1766 = vshrl.u32 %v1765, 7
    %v1767 = vsub.s32 %v1764, %v1766
    %v1768 = vrot.slane %v1760, %v1767
    %v1770 = vunpack.c.l.s4 1983009808
    %v1771 = vunpack.c.0.s8 %v1770
    %v1772 = vlaneseq
    %v1773 = vshrl.u32 %v1772, 7
    %v1774 = vsub.s32 %v1771, %v1773
    %v1775 = vrot.slane %v1761, %v1774
    %v1776 = vcombine.low %v1657, %v1734
    %v1777 = vcombine.high %v1657, %v1734
    %v1779 = vunpack.c.l.s4 1983009808
    %v1780 = vunpack.c.0.s8 %v1779
    %v1781 = vlaneseq
    %v1782 = vshrl.u32 %v1781, 7
    %v1783 = vsub.s32 %v1780, %v1782
    %v1784 = vrot.slane %v1776, %v1783
    %v1786 = vunpack.c.l.s4 1983009808
    %v1787 = vunpack.c.0.s8 %v1786
    %v1788 = vlaneseq
    %v1789 = vshrl.u32 %v1788, 7
    %v1790 = vsub.s32 %v1787, %v1789
    %v1791 = vrot.slane %v1777, %v1790
    %v1792 = vcombine.low %v1659, %v1736
    %v1793 = vcombine.high %v1659, %v1736
    %v1795 = vunpack.c.l.s4 1983009808
    %v1796 = vunpack.c.0.s8 %v1795
    %v1797 = vlaneseq
    %v1798 = vshrl.u32 %v1797, 7
    %v1799 = vsub.s32 %v1796, %v1798
    %v1800 = vrot.slane %v1792, %v1799
    %v1802 = vunpack.c.l.s4 1983009808
    %v1803 = vunpack.c.0.s8 %v1802
    %v1804 = vlaneseq
    %v1805 = vshrl.u32 %v1804, 7
    %v1806 = vsub.s32 %v1803, %v1805
    %v1807 = vrot.slane %v1793, %v1806
    %v1808 = vcombine.low %v1752, %v1768
    %v1809 = vcombine.high %v1752, %v1768
    %v1811 = vunpack.c.l.s4 1934713408
    %v1812 = vunpack.c.0.s8 %v1811
    %v1813 = vlaneseq
    %v1814 = vshrl.u32 %v1813, 7
    %v1815 = vsub.s32 %v1812, %v1814
    %v1816 = vrot.slane %v1808, %v1815
    %v1818 = vunpack.c.l.s4 1934713408
    %v1819 = vunpack.c.0.s8 %v1818
    %v1820 = vlaneseq
    %v1821 = vshrl.u32 %v1820, 7
    %v1822 = vsub.s32 %v1819, %v1821
    %v1823 = vrot.slane %v1809, %v1822
    %v1824 = vcombine.low %v1759, %v1775
    %v1825 = vcombine.high %v1759, %v1775
    %v1827 = vunpack.c.l.s4 1934713408
    %v1828 = vunpack.c.0.s8 %v1827
    %v1829 = vlaneseq
    %v1830 = vshrl.u32 %v1829, 7
    %v1831 = vsub.s32 %v1828, %v1830
    %v1832 = vrot.slane %v1824, %v1831
    %v1834 = vunpack.c.l.s4 1934713408
    %v1835 = vunpack.c.0.s8 %v1834
    %v1836 = vlaneseq
    %v1837 = vshrl.u32 %v1836, 7
    %v1838 = vsub.s32 %v1835, %v1837
    %v1839 = vrot.slane %v1825, %v1838
    %v1840 = vcombine.low %v1784, %v1800
    %v1841 = vcombine.high %v1784, %v1800
    %v1843 = vunpack.c.l.s4 1934713408
    %v1844 = vunpack.c.0.s8 %v1843
    %v1845 = vlaneseq
    %v1846 = vshrl.u32 %v1845, 7
    %v1847 = vsub.s32 %v1844, %v1846
    %v1848 = vrot.slane %v1840, %v1847
    %v1850 = vunpack.c.l.s4 1934713408
    %v1851 = vunpack.c.0.s8 %v1850
    %v1852 = vlaneseq
    %v1853 = vshrl.u32 %v1852, 7
    %v1854 = vsub.s32 %v1851, %v1853
    %v1855 = vrot.slane %v1841, %v1854
    %v1856 = vcombine.low %v1791, %v1807
    %v1857 = vcombine.high %v1791, %v1807
    %v1859 = vunpack.c.l.s4 1934713408
    %v1860 = vunpack.c.0.s8 %v1859
    %v1861 = vlaneseq
    %v1862 = vshrl.u32 %v1861, 7
    %v1863 = vsub.s32 %v1860, %v1862
    %v1864 = vrot.slane %v1856, %v1863
    %v1866 = vunpack.c.l.s4 1934713408
    %v1867 = vunpack.c.0.s8 %v1866
    %v1868 = vlaneseq
    %v1869 = vshrl.u32 %v1868, 7
    %v1870 = vsub.s32 %v1867, %v1869
    %v1871 = vrot.slane %v1857, %v1870
    %v1872 = vcombine.low %v1816, %v1848
    %v1873 = vcombine.high %v1816, %v1848
    %v1874 = vcombine.low %v1823, %v1855
    %v1875 = vcombine.high %v1823, %v1855
    %v1876 = vcombine.low %v1832, %v1864
    %v1877 = vcombine.high %v1832, %v1864
    %v1878 = vcombine.low %v1839, %v1871
    %v1879 = vcombine.high %v1839, %v1871
    %v1880 = vcombine.low %v1509, %v1586
    %v1881 = vcombine.high %v1509, %v1586
    %v1883 = vunpack.c.l.s4 1983009808
    %v1884 = vunpack.c.0.s8 %v1883
    %v1885 = vlaneseq
    %v1886 = vshrl.u32 %v1885, 7
    %v1887 = vsub.s32 %v1884, %v1886
    %v1888 = vrot.slane %v1880, %v1887
    %v1890 = vunpack.c.l.s4 1983009808
    %v1891 = vunpack.c.0.s8 %v1890
    %v1892 = vlaneseq
    %v1893 = vshrl.u32 %v1892, 7
    %v1894 = vsub.s32 %v1891, %v1893
    %v1895 = vrot.slane %v1881, %v1894
    %v1896 = vcombine.low %v1511, %v1588
    %v1897 = vcombine.high %v1511, %v1588
    %v1899 = vunpack.c.l.s4 1983009808
    %v1900 = vunpack.c.0.s8 %v1899
    %v1901 = vlaneseq
    %v1902 = vshrl.u32 %v1901, 7
    %v1903 = vsub.s32 %v1900, %v1902
    %v1904 = vrot.slane %v1896, %v1903
    %v1906 = vunpack.c.l.s4 1983009808
    %v1907 = vunpack.c.0.s8 %v1906
    %v1908 = vlaneseq
    %v1909 = vshrl.u32 %v1908, 7
    %v1910 = vsub.s32 %v1907, %v1909
    %v1911 = vrot.slane %v1897, %v1910
    %v1912 = vcombine.low %v1663, %v1740
    %v1913 = vcombine.high %v1663, %v1740
    %v1915 = vunpack.c.l.s4 1983009808
    %v1916 = vunpack.c.0.s8 %v1915
    %v1917 = vlaneseq
    %v1918 = vshrl.u32 %v1917, 7
    %v1919 = vsub.s32 %v1916, %v1918
    %v1920 = vrot.slane %v1912, %v1919
    %v1922 = vunpack.c.l.s4 1983009808
    %v1923 = vunpack.c.0.s8 %v1922
    %v1924 = vlaneseq
    %v1925 = vshrl.u32 %v1924, 7
    %v1926 = vsub.s32 %v1923, %v1925
    %v1927 = vrot.slane %v1913, %v1926
    %v1928 = vcombine.low %v1665, %v1742
    %v1929 = vcombine.high %v1665, %v1742
    %v1931 = vunpack.c.l.s4 1983009808
    %v1932 = vunpack.c.0.s8 %v1931
    %v1933 = vlaneseq
    %v1934 = vshrl.u32 %v1933, 7
    %v1935 = vsub.s32 %v1932, %v1934
    %v1936 = vrot.slane %v1928, %v1935
    %v1938 = vunpack.c.l.s4 1983009808
    %v1939 = vunpack.c.0.s8 %v1938
    %v1940 = vlaneseq
    %v1941 = vshrl.u32 %v1940, 7
    %v1942 = vsub.s32 %v1939, %v1941
    %v1943 = vrot.slane %v1929, %v1942
    %v1944 = vcombine.low %v1888, %v1904
    %v1945 = vcombine.high %v1888, %v1904
    %v1947 = vunpack.c.l.s4 1934713408
    %v1948 = vunpack.c.0.s8 %v1947
    %v1949 = vlaneseq
    %v1950 = vshrl.u32 %v1949, 7
    %v1951 = vsub.s32 %v1948, %v1950
    %v1952 = vrot.slane %v1944, %v1951
    %v1954 = vunpack.c.l.s4 1934713408
    %v1955 = vunpack.c.0.s8 %v1954
    %v1956 = vlaneseq
    %v1957 = vshrl.u32 %v1956, 7
    %v1958 = vsub.s32 %v1955, %v1957
    %v1959 = vrot.slane %v1945, %v1958
    %v1960 = vcombine.low %v1895, %v1911
    %v1961 = vcombine.high %v1895, %v1911
    %v1963 = vunpack.c.l.s4 1934713408
    %v1964 = vunpack.c.0.s8 %v1963
    %v1965 = vlaneseq
    %v1966 = vshrl.u32 %v1965, 7
    %v1967 = vsub.s32 %v1964, %v1966
    %v1968 = vrot.slane %v1960, %v1967
    %v1970 = vunpack.c.l.s4 1934713408
    %v1971 = vunpack.c.0.s8 %v1970
    %v1972 = vlaneseq
    %v1973 = vshrl.u32 %v1972, 7
    %v1974 = vsub.s32 %v1971, %v1973
    %v1975 = vrot.slane %v1961, %v1974
    %v1976 = vcombine.low %v1920, %v1936
    %v1977 = vcombine.high %v1920, %v1936
    %v1979 = vunpack.c.l.s4 1934713408
    %v1980 = vunpack.c.0.s8 %v1979
    %v1981 = vlaneseq
    %v1982 = vshrl.u32 %v1981, 7
    %v1983 = vsub.s32 %v1980, %v1982
    %v1984 = vrot.slane %v1976, %v1983
    %v1986 = vunpack.c.l.s4 1934713408
    %v1987 = vunpack.c.0.s8 %v1986
    %v1988 = vlaneseq
    %v1989 = vshrl.u32 %v1988, 7
    %v1990 = vsub.s32 %v1987, %v1989
    %v1991 = vrot.slane %v1977, %v1990
    %v1992 = vcombine.low %v1927, %v1943
    %v1993 = vcombine.high %v1927, %v1943
    %v1995 = vunpack.c.l.s4 1934713408
    %v1996 = vunpack.c.0.s8 %v1995
    %v1997 = vlaneseq
    %v1998 = vshrl.u32 %v1997, 7
    %v1999 = vsub.s32 %v1996, %v1998
    %v2000 = vrot.slane %v1992, %v1999
    %v2002 = vunpack.c.l.s4 1934713408
    %v2003 = vunpack.c.0.s8 %v2002
    %v2004 = vlaneseq
    %v2005 = vshrl.u32 %v2004, 7
    %v2006 = vsub.s32 %v2003, %v2005
    %v2007 = vrot.slane %v1993, %v2006
    %v2008 = vcombine.low %v1952, %v1984
    %v2009 = vcombine.high %v1952, %v1984
    %v2010 = vcombine.low %v1959, %v1991
    %v2011 = vcombine.high %v1959, %v1991
    %v2012 = vcombine.low %v1968, %v2000
    %v2013 = vcombine.high %v1968, %v2000
    %v2014 = vcombine.low %v1975, %v2007
    %v2015 = vxor.u32 %v2012, 2147483648
    %v2016 = vmul.f32 %v2015, 1.442695
    %v2017 = vpow.pop %v2016
    %v2018 = vadd.f32 %v2017, 1.0
    %v2019 = vrcp.pop %v2018
    %v2020 = vmul.f32 1.0, %v2019
    %v2021 = vxor.u32 %v2013, 2147483648
    %v2022 = vmul.f32 %v2021, 1.442695
    %v2023 = vpow.pop %v2022
    %v2024 = vadd.f32 %v2023, 1.0
    %v2025 = vrcp.pop %v2024
    %v2026 = vmul.f32 1.0, %v2025
    %v2027 = vxor.u32 %v2014, 2147483648
    %v2028 = vmul.f32 %v2027, 1.442695
    %v2029 = vpow.pop %v2028
    %v2030 = vadd.f32 %v2029, 1.0
    %v2031 = vrcp.pop %v2030
    %v2032 = vmul.f32 1.0, %v2031
    %v2033 = vadd.f32 %v2020, %v2026
    %v2034 = vadd.f32 %v2033, %v2032
    %v2035 = vadd.f32 %v2034, 1e-10
    %v2036 = vrcp.pop %v2035
    %v2037 = vmul.f32 %v2020, %v2036
    %2038 = vst [vmem:[#allocation6] sm:$0xff] %v2037
    %v2039 = vmul.f32 %v2026, %v2036
    %s2040 = scalar_lea.vmem [#allocation6], 8
    %2041 = vst [vmem:[%s2040] sm:$0xff] %v2039
    %v2042 = vmul.f32 %v2032, %v2036
    %s2043 = scalar_lea.vmem [#allocation6], 16
    %2044 = vst [vmem:[%s2043] sm:$0xff] %v2042
    %v2045 = vld [vmem:[%s2] sm:$0xff]
    %v2046 = vld [vmem:[%s2 + $0x8] sm:$0xff]
    %v2047 = vld [vmem:[%s2 + $0x10] sm:$0xff]
    %v2048 = vld [vmem:[%s2 + $0x18] sm:$0xff]
    %v2049 = vld [vmem:[%s2 + $0x20] sm:$0xff]
    %v2050 = vld [vmem:[%s2 + $0x28] sm:$0xff]
    %2051 = vst [vmem:[#allocation5] sm:$0xff] %v2045
    %2052 = vst [vmem:[#allocation5 + $0x8] sm:$0xff] %v2046
    %2053 = vst [vmem:[#allocation5 + $0x10] sm:$0xff] %v2047
    %2054 = vst [vmem:[#allocation5 + $0x18] sm:$0xff] %v2048
    %2055 = vst [vmem:[#allocation5 + $0x20] sm:$0xff] %v2049
    %2056 = vst [vmem:[#allocation5 + $0x28] sm:$0xff] %v2050
    %v2057 = vmul.f32 %v1872, 0.1
    %v2058 = vmul.f32 %v1874, 0.1
    %v2059 = vmul.f32 %v1876, 0.1
    %v2060 = vmul.f32 %v1878, 0.1
    %v2061 = vmul.f32 %v2008, 0.1
    %v2062 = vmul.f32 %v2010, 0.1
    %v2063 = vmul.f32 %v2057, %v2057
    %v2064 = vmul.f32 %v2058, %v2058
    %v2065 = vadd.f32 %v2063, %v2064
    %v2066 = vmul.f32 %v2059, %v2059
    %v2067 = vadd.f32 %v2065, %v2066
    %v2068 = vadd.f32 %v2067, 1e-12
    %v2069 = vrsqrt.pop %v2068
    %v2070 = vmul.f32 %v2067, %v2069
    %v2071 = vmul.f32 %v2057, %v2069
    %v2072 = vmul.f32 %v2058, %v2069
    %v2073 = vmul.f32 %v2059, %v2069
    %v2074 = vmul.f32 %v2060, %v2069
    %v2075 = vmul.f32 %v2061, %v2069
    %v2076 = vmul.f32 %v2062, %v2069
    %v2077 = vand.u32 2147483647, %v2070
    %vm2078 = vcmp.le.f32.partialorder %v2077, 0.7853982
    %vm2079 = vcmp.lt.s32.totalorder %v2070, 0
    %v2080 = vand.u32 %v2070, 2139095040
    %v2081 = vshrl.u32 %v2080, 23
    %v2082 = vsub.s32 %v2081, 127
    %v2083 = vand.u32 2147483647, %v2070
    %v2084 = vand.u32 %v2083, 8388607
    %v2085 = vor.u32 %v2084, 8388608
    %v2086 = vsub.s32 0, %v2085
    %v2087 = vadd.s32 %v2082, 1
    %vm2088 = vcmp.gt.s32.totalorder %v2087, 0
    %v2089 = vsel %vm2088, %v2087, 0
    %v2090 = vshrl.u32 %v2089, 5
    %v2091 = vand.u32 %v2089, 31
    %v2092 = vsub.s32 32, %v2091
    %v2093 = vshrl.u32 683565275, %v2092
    %v2094 = vshll.u32 683565275, %v2091
    %v2095 = vshrl.u32 2475754826, %v2092
    %v2096 = vor.u32 %v2094, %v2095
    %v2097 = vshll.u32 2475754826, %v2091
    %v2098 = vshrl.u32 2131351028, %v2092
    %v2099 = vor.u32 %v2097, %v2098
    %v2100 = vshll.u32 2131351028, %v2091
    %v2101 = vshrl.u32 2102212464, %v2092
    %v2102 = vor.u32 %v2100, %v2101
    %v2103 = vshll.u32 2102212464, %v2091
    %v2104 = vshrl.u32 920167782, %v2092
    %v2105 = vor.u32 %v2103, %v2104
    %v2106 = vshll.u32 920167782, %v2091
    %v2107 = vshrl.u32 1326507024, %v2092
    %v2108 = vor.u32 %v2106, %v2107
    %vm2109 = vcmp.lt.s32.totalorder %v2090, 1
    %vm2110 = vcmp.lt.s32.totalorder %v2090, 2
    %vm2111 = vcmp.lt.s32.totalorder %v2090, 3
    %vm2112 = vcmp.lt.s32.totalorder %v2090, 4
    %v2113 = vsel %vm2109, %v2093, %v2096
    %v2114 = vsel %vm2112, %v2102, 2102212464
    %v2115 = vsel %vm2111, %v2099, %v2114
    %v2116 = vsel %vm2110, %v2113, %v2115
    %v2117 = vsel %vm2109, %v2096, %v2099
    %v2118 = vsel %vm2112, %v2105, 920167782
    %v2119 = vsel %vm2111, %v2102, %v2118
    %v2120 = vsel %vm2110, %v2117, %v2119
    %v2121 = vsel %vm2109, %v2099, %v2102
    %v2122 = vsel %vm2112, %v2108, 1326507024
    %v2123 = vsel %vm2111, %v2105, %v2122
    %v2124 = vsel %vm2110, %v2121, %v2123
    %v2125 = vshll.u32 %v2085, 8
    %v2126 = vmul.u32.u64.compose %v2125, %v2124
    %v2127 = vextract.low.u32 %v2126
    %v2128 = vextract.high.u32 %v2126
    %v2129 = vmul.u32.u64.compose %v2125, %v2120
    %v2130 = vextract.low.u32 %v2129
    %v2131 = vextract.high.u32 %v2129
    %v2132 = vmul.u32 %v2125, %v2116
    %v2133 = vadd.s32 %v2128, %v2130
    %vm2134 = vc.u32 %v2128, %v2130
    %v2135 = vadd.s32 %v2131, 1
    %v2136 = vsel %vm2134, %v2135, %v2131
    %v2137 = vadd.s32 %v2132, %v2136
    %v2138 = vadd.s32 %v2137, 536870912
    %v2139 = vshrl.u32 %v2138, 30
    %v2140 = vshll.u32 %v2139, 30
    %v2141 = vsub.s32 %v2137, %v2140
    %vm2142 = vcmp.lt.s32.totalorder %v2141, 0
    %v2143 = vsub.s32 0, %v2141
    %v2144 = vsel %vm2142, %v2143, %v2141
    %v2145 = vclz %v2144
    %v2146 = vsub.s32 %v2145, 2
    %vm2147 = vcmp.gt.s32.totalorder 0, %v2146
    %v2148 = vsel %vm2147, 0, %v2146
    %v2149 = vsub.s32 32, %v2148
    %v2150 = vshll.u32 %v2141, %v2148
    %v2151 = vshrl.u32 %v2133, %v2149
    %v2152 = vor.u32 %v2150, %v2151
    %v2153 = vsub.s32 4294967266, %v2148
    %v2154 = vadd.s32 %v2153, 127
    %v2155 = vshll.u32 %v2154, 23
    %v2156 = vor.u32 4788187, %v2155
    %v2157 = vand.u32 2147483647, %v2156
    %v2159 = vcvt.s32.f32 %v2152
    %v2160 = vmul.f32 %v2159, %v2157
    %v2161 = vxor.u32 %v2160, 2147483648
    %v2162 = vsel %vm2079, %v2161, %v2160
    %v2163 = vsub.s32 4, %v2139
    %v2164 = vsel %vm2079, %v2163, %v2139
    %v2165 = vsel %vm2078, %v2070, %v2162
    %v2166 = vsel %vm2078, 0, %v2164
    %v2167 = vcosq.f32.pop %v2165
    %v2168 = vsinq.f32.pop %v2165
    %vm2169 = vweird.f32 %v2070
    %v2170 = vadd.s32 %v2166, 3
    %v2171 = vand.u32 %v2170, 3
    %vm2172 = vcmp.lt.s32.totalorder %v2171, 2
    %vm2173 = vcmp.eq.s32.totalorder %v2171, 0
    %v2174 = vxor.u32 %v2168, 2147483648
    %v2175 = vsel %vm2173, %v2167, %v2174
    %vm2176 = vcmp.eq.s32.totalorder %v2171, 2
    %v2177 = vxor.u32 %v2167, 2147483648
    %v2178 = vsel %vm2176, %v2177, %v2168
    %v2179 = vsel %vm2172, %v2175, %v2178
    %v2180 = vsel %vm2169, nan, %v2179
    %v2181 = vand.u32 2147483647, %v2070
    %vm2182 = vcmp.le.f32.partialorder %v2181, 0.7853982
    %vm2183 = vcmp.lt.s32.totalorder %v2070, 0
    %v2184 = vand.u32 %v2070, 2139095040
    %v2185 = vshrl.u32 %v2184, 23
    %v2186 = vsub.s32 %v2185, 127
    %v2187 = vand.u32 2147483647, %v2070
    %v2188 = vand.u32 %v2187, 8388607
    %v2189 = vor.u32 %v2188, 8388608
    %v2190 = vsub.s32 0, %v2189
    %v2191 = vadd.s32 %v2186, 1
    %vm2192 = vcmp.gt.s32.totalorder %v2191, 0
    %v2193 = vsel %vm2192, %v2191, 0
    %v2194 = vshrl.u32 %v2193, 5
    %v2195 = vand.u32 %v2193, 31
    %v2196 = vsub.s32 32, %v2195
    %v2197 = vshrl.u32 683565275, %v2196
    %v2198 = vshll.u32 683565275, %v2195
    %v2199 = vshrl.u32 2475754826, %v2196
    %v2200 = vor.u32 %v2198, %v2199
    %v2201 = vshll.u32 2475754826, %v2195
    %v2202 = vshrl.u32 2131351028, %v2196
    %v2203 = vor.u32 %v2201, %v2202
    %v2204 = vshll.u32 2131351028, %v2195
    %v2205 = vshrl.u32 2102212464, %v2196
    %v2206 = vor.u32 %v2204, %v2205
    %v2207 = vshll.u32 2102212464, %v2195
    %v2208 = vshrl.u32 920167782, %v2196
    %v2209 = vor.u32 %v2207, %v2208
    %v2210 = vshll.u32 920167782, %v2195
    %v2211 = vshrl.u32 1326507024, %v2196
    %v2212 = vor.u32 %v2210, %v2211
    %vm2213 = vcmp.lt.s32.totalorder %v2194, 1
    %vm2214 = vcmp.lt.s32.totalorder %v2194, 2
    %vm2215 = vcmp.lt.s32.totalorder %v2194, 3
    %vm2216 = vcmp.lt.s32.totalorder %v2194, 4
    %v2217 = vsel %vm2213, %v2197, %v2200
    %v2218 = vsel %vm2216, %v2206, 2102212464
    %v2219 = vsel %vm2215, %v2203, %v2218
    %v2220 = vsel %vm2214, %v2217, %v2219
    %v2221 = vsel %vm2213, %v2200, %v2203
    %v2222 = vsel %vm2216, %v2209, 920167782
    %v2223 = vsel %vm2215, %v2206, %v2222
    %v2224 = vsel %vm2214, %v2221, %v2223
    %v2225 = vsel %vm2213, %v2203, %v2206
    %v2226 = vsel %vm2216, %v2212, 1326507024
    %v2227 = vsel %vm2215, %v2209, %v2226
    %v2228 = vsel %vm2214, %v2225, %v2227
    %v2229 = vshll.u32 %v2189, 8
    %v2230 = vmul.u32.u64.compose %v2229, %v2228
    %v2231 = vextract.low.u32 %v2230
    %v2232 = vextract.high.u32 %v2230
    %v2233 = vmul.u32.u64.compose %v2229, %v2224
    %v2234 = vextract.low.u32 %v2233
    %v2235 = vextract.high.u32 %v2233
    %v2236 = vmul.u32 %v2229, %v2220
    %v2237 = vadd.s32 %v2232, %v2234
    %vm2238 = vc.u32 %v2232, %v2234
    %v2239 = vadd.s32 %v2235, 1
    %v2240 = vsel %vm2238, %v2239, %v2235
    %v2241 = vadd.s32 %v2236, %v2240
    %v2242 = vadd.s32 %v2241, 536870912
    %v2243 = vshrl.u32 %v2242, 30
    %v2244 = vshll.u32 %v2243, 30
    %v2245 = vsub.s32 %v2241, %v2244
    %vm2246 = vcmp.lt.s32.totalorder %v2245, 0
    %v2247 = vsub.s32 0, %v2245
    %v2248 = vsel %vm2246, %v2247, %v2245
    %v2249 = vclz %v2248
    %v2250 = vsub.s32 %v2249, 2
    %vm2251 = vcmp.gt.s32.totalorder 0, %v2250
    %v2252 = vsel %vm2251, 0, %v2250
    %v2253 = vsub.s32 32, %v2252
    %v2254 = vshll.u32 %v2245, %v2252
    %v2255 = vshrl.u32 %v2237, %v2253
    %v2256 = vor.u32 %v2254, %v2255
    %v2257 = vsub.s32 4294967266, %v2252
    %v2258 = vadd.s32 %v2257, 127
    %v2259 = vshll.u32 %v2258, 23
    %v2260 = vor.u32 4788187, %v2259
    %v2261 = vand.u32 2147483647, %v2260
    %v2263 = vcvt.s32.f32 %v2256
    %v2264 = vmul.f32 %v2263, %v2261
    %v2265 = vxor.u32 %v2264, 2147483648
    %v2266 = vsel %vm2183, %v2265, %v2264
    %v2267 = vsub.s32 4, %v2243
    %v2268 = vsel %vm2183, %v2267, %v2243
    %v2269 = vsel %vm2182, %v2070, %v2266
    %v2270 = vsel %vm2182, 0, %v2268
    %v2271 = vcosq.f32.pop %v2269
    %v2272 = vsinq.f32.pop %v2269
    %vm2273 = vweird.f32 %v2070
    %v2274 = vand.u32 %v2270, 3
    %vm2275 = vcmp.lt.s32.totalorder %v2274, 2
    %vm2276 = vcmp.eq.s32.totalorder %v2274, 0
    %v2277 = vxor.u32 %v2272, 2147483648
    %v2278 = vsel %vm2276, %v2271, %v2277
    %vm2279 = vcmp.eq.s32.totalorder %v2274, 2
    %v2280 = vxor.u32 %v2271, 2147483648
    %v2281 = vsel %vm2279, %v2280, %v2272
    %v2282 = vsel %vm2275, %v2278, %v2281
    %v2283 = vsel %vm2273, nan, %v2282
    %v2284 = vsub.f32 1.0, %v2283
    %v2285 = vsub.f32 %v2070, %v2180
    %v2286 = vmul.f32 %v2071, %v2074
    %v2287 = vmul.f32 %v2072, %v2075
    %v2288 = vadd.f32 %v2286, %v2287
    %v2289 = vmul.f32 %v2073, %v2076
    %v2290 = vadd.f32 %v2288, %v2289
    %v2291 = vmul.f32 %v2070, %v2074
    %v2292 = vmul.f32 %v2072, %v2076
    %v2293 = vmul.f32 %v2073, %v2075
    %v2294 = vsub.f32 %v2292, %v2293
    %v2295 = vmul.f32 %v2284, %v2294
    %v2296 = vadd.f32 %v2291, %v2295
    %v2297 = vmul.f32 %v2071, %v2290
    %v2298 = vsub.f32 %v2297, %v2074
    %v2299 = vmul.f32 %v2285, %v2298
    %v2300 = vadd.f32 %v2296, %v2299
    %v2301 = vmul.f32 %v2070, %v2075
    %v2302 = vmul.f32 %v2073, %v2074
    %v2303 = vmul.f32 %v2071, %v2076
    %v2304 = vsub.f32 %v2302, %v2303
    %v2305 = vmul.f32 %v2284, %v2304
    %v2306 = vadd.f32 %v2301, %v2305
    %v2307 = vmul.f32 %v2072, %v2290
    %v2308 = vsub.f32 %v2307, %v2075
    %v2309 = vmul.f32 %v2285, %v2308
    %v2310 = vadd.f32 %v2306, %v2309
    %v2311 = vmul.f32 %v2070, %v2076
    %v2312 = vmul.f32 %v2071, %v2075
    %v2313 = vmul.f32 %v2072, %v2074
    %v2314 = vsub.f32 %v2312, %v2313
    %v2315 = vmul.f32 %v2284, %v2314
    %v2316 = vadd.f32 %v2311, %v2315
    %v2317 = vmul.f32 %v2073, %v2290
    %v2318 = vsub.f32 %v2317, %v2076
    %v2319 = vmul.f32 %v2285, %v2318
    %v2320 = vadd.f32 %v2316, %v2319
    %v2321 = vmul.f32 %v2071, %v2045
    %v2322 = vmul.f32 %v2072, %v2047
    %v2323 = vadd.f32 %v2321, %v2322
    %v2324 = vmul.f32 %v2073, %v2049
    %v2325 = vadd.f32 %v2323, %v2324
    %v2326 = vmul.f32 %v2045, %v2283
    %v2327 = vmul.f32 %v2072, %v2049
    %v2328 = vmul.f32 %v2073, %v2047
    %v2329 = vsub.f32 %v2327, %v2328
    %v2330 = vmul.f32 %v2329, %v2180
    %v2331 = vadd.f32 %v2326, %v2330
    %v2332 = vmul.f32 %v2071, %v2325
    %v2333 = vmul.f32 %v2332, %v2284
    %v2334 = vadd.f32 %v2331, %v2333
    %v2335 = vadd.f32 %v2334, %v2300
    %v2336 = vmul.f32 %v2047, %v2283
    %v2337 = vmul.f32 %v2073, %v2045
    %v2338 = vmul.f32 %v2071, %v2049
    %v2339 = vsub.f32 %v2337, %v2338
    %v2340 = vmul.f32 %v2339, %v2180
    %v2341 = vadd.f32 %v2336, %v2340
    %v2342 = vmul.f32 %v2072, %v2325
    %v2343 = vmul.f32 %v2342, %v2284
    %v2344 = vadd.f32 %v2341, %v2343
    %v2345 = vadd.f32 %v2344, %v2310
    %v2346 = vmul.f32 %v2049, %v2283
    %v2347 = vmul.f32 %v2071, %v2047
    %v2348 = vmul.f32 %v2072, %v2045
    %v2349 = vsub.f32 %v2347, %v2348
    %v2350 = vmul.f32 %v2349, %v2180
    %v2351 = vadd.f32 %v2346, %v2350
    %v2352 = vmul.f32 %v2073, %v2325
    %v2353 = vmul.f32 %v2352, %v2284
    %v2354 = vadd.f32 %v2351, %v2353
    %v2355 = vadd.f32 %v2354, %v2320
    %s2356 = scalar_lea.vmem [#allocation5], 48
    %2357 = vst [vmem:[%s2356] sm:$0xff] %v2335
    %s2358 = scalar_lea.vmem [#allocation5], 64
    %2359 = vst [vmem:[%s2358] sm:$0xff] %v2345
    %s2360 = scalar_lea.vmem [#allocation5], 80
    %2361 = vst [vmem:[%s2360] sm:$0xff] %v2355
    %v2362 = vadd.f32 %v2045, %v2046
    %v2363 = vadd.f32 %v2047, %v2048
    %v2364 = vadd.f32 %v2049, %v2050
    %v2365 = vmul.f32 %v2071, %v2362
    %v2366 = vmul.f32 %v2072, %v2363
    %v2367 = vadd.f32 %v2365, %v2366
    %v2368 = vmul.f32 %v2073, %v2364
    %v2369 = vadd.f32 %v2367, %v2368
    %v2370 = vmul.f32 %v2362, %v2283
    %v2371 = vmul.f32 %v2072, %v2364
    %v2372 = vmul.f32 %v2073, %v2363
    %v2373 = vsub.f32 %v2371, %v2372
    %v2374 = vmul.f32 %v2373, %v2180
    %v2375 = vadd.f32 %v2370, %v2374
    %v2376 = vmul.f32 %v2071, %v2369
    %v2377 = vmul.f32 %v2376, %v2284
    %v2378 = vadd.f32 %v2375, %v2377
    %v2379 = vadd.f32 %v2378, %v2300
    %v2380 = vsub.f32 %v2379, %v2335
    %s2381 = scalar_lea.vmem [#allocation5], 56
    %2382 = vst [vmem:[%s2381] sm:$0xff] %v2380
    %v2383 = vmul.f32 %v2363, %v2283
    %v2384 = vmul.f32 %v2073, %v2362
    %v2385 = vmul.f32 %v2071, %v2364
    %v2386 = vsub.f32 %v2384, %v2385
    %v2387 = vmul.f32 %v2386, %v2180
    %v2388 = vadd.f32 %v2383, %v2387
    %v2389 = vmul.f32 %v2072, %v2369
    %v2390 = vmul.f32 %v2389, %v2284
    %v2391 = vadd.f32 %v2388, %v2390
    %v2392 = vadd.f32 %v2391, %v2310
    %v2393 = vsub.f32 %v2392, %v2345
    %s2394 = scalar_lea.vmem [#allocation5], 72
    %2395 = vst [vmem:[%s2394] sm:$0xff] %v2393
    %v2396 = vmul.f32 %v2364, %v2283
    %v2397 = vmul.f32 %v2071, %v2363
    %v2398 = vmul.f32 %v2072, %v2362
    %v2399 = vsub.f32 %v2397, %v2398
    %v2400 = vmul.f32 %v2399, %v2180
    %v2401 = vadd.f32 %v2396, %v2400
    %v2402 = vmul.f32 %v2073, %v2369
    %v2403 = vmul.f32 %v2402, %v2284
    %v2404 = vadd.f32 %v2401, %v2403
    %v2405 = vadd.f32 %v2404, %v2320
    %v2406 = vsub.f32 %v2405, %v2355
    %s2407 = scalar_lea.vmem [#allocation5], 88
    %2408 = vst [vmem:[%s2407] sm:$0xff] %v2406
    %v2409 = vmul.f32 %v1873, 0.1
    %v2410 = vmul.f32 %v1875, 0.1
    %v2411 = vmul.f32 %v1877, 0.1
    %v2412 = vmul.f32 %v1879, 0.1
    %v2413 = vmul.f32 %v2009, 0.1
    %v2414 = vmul.f32 %v2011, 0.1
    %v2415 = vmul.f32 %v2409, %v2409
    %v2416 = vmul.f32 %v2410, %v2410
    %v2417 = vadd.f32 %v2415, %v2416
    %v2418 = vmul.f32 %v2411, %v2411
    %v2419 = vadd.f32 %v2417, %v2418
    %v2420 = vadd.f32 %v2419, 1e-12
    %v2421 = vrsqrt.pop %v2420
    %v2422 = vmul.f32 %v2419, %v2421
    %v2423 = vmul.f32 %v2409, %v2421
    %v2424 = vmul.f32 %v2410, %v2421
    %v2425 = vmul.f32 %v2411, %v2421
    %v2426 = vmul.f32 %v2412, %v2421
    %v2427 = vmul.f32 %v2413, %v2421
    %v2428 = vmul.f32 %v2414, %v2421
    %v2429 = vand.u32 2147483647, %v2422
    %vm2430 = vcmp.le.f32.partialorder %v2429, 0.7853982
    %vm2431 = vcmp.lt.s32.totalorder %v2422, 0
    %v2432 = vand.u32 %v2422, 2139095040
    %v2433 = vshrl.u32 %v2432, 23
    %v2434 = vsub.s32 %v2433, 127
    %v2435 = vand.u32 2147483647, %v2422
    %v2436 = vand.u32 %v2435, 8388607
    %v2437 = vor.u32 %v2436, 8388608
    %v2438 = vsub.s32 0, %v2437
    %v2439 = vadd.s32 %v2434, 1
    %vm2440 = vcmp.gt.s32.totalorder %v2439, 0
    %v2441 = vsel %vm2440, %v2439, 0
    %v2442 = vshrl.u32 %v2441, 5
    %v2443 = vand.u32 %v2441, 31
    %v2444 = vsub.s32 32, %v2443
    %v2445 = vshrl.u32 683565275, %v2444
    %v2446 = vshll.u32 683565275, %v2443
    %v2447 = vshrl.u32 2475754826, %v2444
    %v2448 = vor.u32 %v2446, %v2447
    %v2449 = vshll.u32 2475754826, %v2443
    %v2450 = vshrl.u32 2131351028, %v2444
    %v2451 = vor.u32 %v2449, %v2450
    %v2452 = vshll.u32 2131351028, %v2443
    %v2453 = vshrl.u32 2102212464, %v2444
    %v2454 = vor.u32 %v2452, %v2453
    %v2455 = vshll.u32 2102212464, %v2443
    %v2456 = vshrl.u32 920167782, %v2444
    %v2457 = vor.u32 %v2455, %v2456
    %v2458 = vshll.u32 920167782, %v2443
    %v2459 = vshrl.u32 1326507024, %v2444
    %v2460 = vor.u32 %v2458, %v2459
    %vm2461 = vcmp.lt.s32.totalorder %v2442, 1
    %vm2462 = vcmp.lt.s32.totalorder %v2442, 2
    %vm2463 = vcmp.lt.s32.totalorder %v2442, 3
    %vm2464 = vcmp.lt.s32.totalorder %v2442, 4
    %v2465 = vsel %vm2461, %v2445, %v2448
    %v2466 = vsel %vm2464, %v2454, 2102212464
    %v2467 = vsel %vm2463, %v2451, %v2466
    %v2468 = vsel %vm2462, %v2465, %v2467
    %v2469 = vsel %vm2461, %v2448, %v2451
    %v2470 = vsel %vm2464, %v2457, 920167782
    %v2471 = vsel %vm2463, %v2454, %v2470
    %v2472 = vsel %vm2462, %v2469, %v2471
    %v2473 = vsel %vm2461, %v2451, %v2454
    %v2474 = vsel %vm2464, %v2460, 1326507024
    %v2475 = vsel %vm2463, %v2457, %v2474
    %v2476 = vsel %vm2462, %v2473, %v2475
    %v2477 = vshll.u32 %v2437, 8
    %v2478 = vmul.u32.u64.compose %v2477, %v2476
    %v2479 = vextract.low.u32 %v2478
    %v2480 = vextract.high.u32 %v2478
    %v2481 = vmul.u32.u64.compose %v2477, %v2472
    %v2482 = vextract.low.u32 %v2481
    %v2483 = vextract.high.u32 %v2481
    %v2484 = vmul.u32 %v2477, %v2468
    %v2485 = vadd.s32 %v2480, %v2482
    %vm2486 = vc.u32 %v2480, %v2482
    %v2487 = vadd.s32 %v2483, 1
    %v2488 = vsel %vm2486, %v2487, %v2483
    %v2489 = vadd.s32 %v2484, %v2488
    %v2490 = vadd.s32 %v2489, 536870912
    %v2491 = vshrl.u32 %v2490, 30
    %v2492 = vshll.u32 %v2491, 30
    %v2493 = vsub.s32 %v2489, %v2492
    %vm2494 = vcmp.lt.s32.totalorder %v2493, 0
    %v2495 = vsub.s32 0, %v2493
    %v2496 = vsel %vm2494, %v2495, %v2493
    %v2497 = vclz %v2496
    %v2498 = vsub.s32 %v2497, 2
    %vm2499 = vcmp.gt.s32.totalorder 0, %v2498
    %v2500 = vsel %vm2499, 0, %v2498
    %v2501 = vsub.s32 32, %v2500
    %v2502 = vshll.u32 %v2493, %v2500
    %v2503 = vshrl.u32 %v2485, %v2501
    %v2504 = vor.u32 %v2502, %v2503
    %v2505 = vsub.s32 4294967266, %v2500
    %v2506 = vadd.s32 %v2505, 127
    %v2507 = vshll.u32 %v2506, 23
    %v2508 = vor.u32 4788187, %v2507
    %v2509 = vand.u32 2147483647, %v2508
    %v2511 = vcvt.s32.f32 %v2504
    %v2512 = vmul.f32 %v2511, %v2509
    %v2513 = vxor.u32 %v2512, 2147483648
    %v2514 = vsel %vm2431, %v2513, %v2512
    %v2515 = vsub.s32 4, %v2491
    %v2516 = vsel %vm2431, %v2515, %v2491
    %v2517 = vsel %vm2430, %v2422, %v2514
    %v2518 = vsel %vm2430, 0, %v2516
    %v2519 = vcosq.f32.pop %v2517
    %v2520 = vsinq.f32.pop %v2517
    %vm2521 = vweird.f32 %v2422
    %v2522 = vadd.s32 %v2518, 3
    %v2523 = vand.u32 %v2522, 3
    %vm2524 = vcmp.lt.s32.totalorder %v2523, 2
    %vm2525 = vcmp.eq.s32.totalorder %v2523, 0
    %v2526 = vxor.u32 %v2520, 2147483648
    %v2527 = vsel %vm2525, %v2519, %v2526
    %vm2528 = vcmp.eq.s32.totalorder %v2523, 2
    %v2529 = vxor.u32 %v2519, 2147483648
    %v2530 = vsel %vm2528, %v2529, %v2520
    %v2531 = vsel %vm2524, %v2527, %v2530
    %v2532 = vsel %vm2521, nan, %v2531
    %v2533 = vand.u32 2147483647, %v2422
    %vm2534 = vcmp.le.f32.partialorder %v2533, 0.7853982
    %vm2535 = vcmp.lt.s32.totalorder %v2422, 0
    %v2536 = vand.u32 %v2422, 2139095040
    %v2537 = vshrl.u32 %v2536, 23
    %v2538 = vsub.s32 %v2537, 127
    %v2539 = vand.u32 2147483647, %v2422
    %v2540 = vand.u32 %v2539, 8388607
    %v2541 = vor.u32 %v2540, 8388608
    %v2542 = vsub.s32 0, %v2541
    %v2543 = vadd.s32 %v2538, 1
    %vm2544 = vcmp.gt.s32.totalorder %v2543, 0
    %v2545 = vsel %vm2544, %v2543, 0
    %v2546 = vshrl.u32 %v2545, 5
    %v2547 = vand.u32 %v2545, 31
    %v2548 = vsub.s32 32, %v2547
    %v2549 = vshrl.u32 683565275, %v2548
    %v2550 = vshll.u32 683565275, %v2547
    %v2551 = vshrl.u32 2475754826, %v2548
    %v2552 = vor.u32 %v2550, %v2551
    %v2553 = vshll.u32 2475754826, %v2547
    %v2554 = vshrl.u32 2131351028, %v2548
    %v2555 = vor.u32 %v2553, %v2554
    %v2556 = vshll.u32 2131351028, %v2547
    %v2557 = vshrl.u32 2102212464, %v2548
    %v2558 = vor.u32 %v2556, %v2557
    %v2559 = vshll.u32 2102212464, %v2547
    %v2560 = vshrl.u32 920167782, %v2548
    %v2561 = vor.u32 %v2559, %v2560
    %v2562 = vshll.u32 920167782, %v2547
    %v2563 = vshrl.u32 1326507024, %v2548
    %v2564 = vor.u32 %v2562, %v2563
    %vm2565 = vcmp.lt.s32.totalorder %v2546, 1
    %vm2566 = vcmp.lt.s32.totalorder %v2546, 2
    %vm2567 = vcmp.lt.s32.totalorder %v2546, 3
    %vm2568 = vcmp.lt.s32.totalorder %v2546, 4
    %v2569 = vsel %vm2565, %v2549, %v2552
    %v2570 = vsel %vm2568, %v2558, 2102212464
    %v2571 = vsel %vm2567, %v2555, %v2570
    %v2572 = vsel %vm2566, %v2569, %v2571
    %v2573 = vsel %vm2565, %v2552, %v2555
    %v2574 = vsel %vm2568, %v2561, 920167782
    %v2575 = vsel %vm2567, %v2558, %v2574
    %v2576 = vsel %vm2566, %v2573, %v2575
    %v2577 = vsel %vm2565, %v2555, %v2558
    %v2578 = vsel %vm2568, %v2564, 1326507024
    %v2579 = vsel %vm2567, %v2561, %v2578
    %v2580 = vsel %vm2566, %v2577, %v2579
    %v2581 = vshll.u32 %v2541, 8
    %v2582 = vmul.u32.u64.compose %v2581, %v2580
    %v2583 = vextract.low.u32 %v2582
    %v2584 = vextract.high.u32 %v2582
    %v2585 = vmul.u32.u64.compose %v2581, %v2576
    %v2586 = vextract.low.u32 %v2585
    %v2587 = vextract.high.u32 %v2585
    %v2588 = vmul.u32 %v2581, %v2572
    %v2589 = vadd.s32 %v2584, %v2586
    %vm2590 = vc.u32 %v2584, %v2586
    %v2591 = vadd.s32 %v2587, 1
    %v2592 = vsel %vm2590, %v2591, %v2587
    %v2593 = vadd.s32 %v2588, %v2592
    %v2594 = vadd.s32 %v2593, 536870912
    %v2595 = vshrl.u32 %v2594, 30
    %v2596 = vshll.u32 %v2595, 30
    %v2597 = vsub.s32 %v2593, %v2596
    %vm2598 = vcmp.lt.s32.totalorder %v2597, 0
    %v2599 = vsub.s32 0, %v2597
    %v2600 = vsel %vm2598, %v2599, %v2597
    %v2601 = vclz %v2600
    %v2602 = vsub.s32 %v2601, 2
    %vm2603 = vcmp.gt.s32.totalorder 0, %v2602
    %v2604 = vsel %vm2603, 0, %v2602
    %v2605 = vsub.s32 32, %v2604
    %v2606 = vshll.u32 %v2597, %v2604
    %v2607 = vshrl.u32 %v2589, %v2605
    %v2608 = vor.u32 %v2606, %v2607
    %v2609 = vsub.s32 4294967266, %v2604
    %v2610 = vadd.s32 %v2609, 127
    %v2611 = vshll.u32 %v2610, 23
    %v2612 = vor.u32 4788187, %v2611
    %v2613 = vand.u32 2147483647, %v2612
    %v2615 = vcvt.s32.f32 %v2608
    %v2616 = vmul.f32 %v2615, %v2613
    %v2617 = vxor.u32 %v2616, 2147483648
    %v2618 = vsel %vm2535, %v2617, %v2616
    %v2619 = vsub.s32 4, %v2595
    %v2620 = vsel %vm2535, %v2619, %v2595
    %v2621 = vsel %vm2534, %v2422, %v2618
    %v2622 = vsel %vm2534, 0, %v2620
    %v2623 = vcosq.f32.pop %v2621
    %v2624 = vsinq.f32.pop %v2621
    %vm2625 = vweird.f32 %v2422
    %v2626 = vand.u32 %v2622, 3
    %vm2627 = vcmp.lt.s32.totalorder %v2626, 2
    %vm2628 = vcmp.eq.s32.totalorder %v2626, 0
    %v2629 = vxor.u32 %v2624, 2147483648
    %v2630 = vsel %vm2628, %v2623, %v2629
    %vm2631 = vcmp.eq.s32.totalorder %v2626, 2
    %v2632 = vxor.u32 %v2623, 2147483648
    %v2633 = vsel %vm2631, %v2632, %v2624
    %v2634 = vsel %vm2627, %v2630, %v2633
    %v2635 = vsel %vm2625, nan, %v2634
    %v2636 = vsub.f32 1.0, %v2635
    %v2637 = vsub.f32 %v2422, %v2532
    %v2638 = vmul.f32 %v2423, %v2426
    %v2639 = vmul.f32 %v2424, %v2427
    %v2640 = vadd.f32 %v2638, %v2639
    %v2641 = vmul.f32 %v2425, %v2428
    %v2642 = vadd.f32 %v2640, %v2641
    %v2643 = vmul.f32 %v2422, %v2426
    %v2644 = vmul.f32 %v2424, %v2428
    %v2645 = vmul.f32 %v2425, %v2427
    %v2646 = vsub.f32 %v2644, %v2645
    %v2647 = vmul.f32 %v2636, %v2646
    %v2648 = vadd.f32 %v2643, %v2647
    %v2649 = vmul.f32 %v2423, %v2642
    %v2650 = vsub.f32 %v2649, %v2426
    %v2651 = vmul.f32 %v2637, %v2650
    %v2652 = vadd.f32 %v2648, %v2651
    %v2653 = vmul.f32 %v2422, %v2427
    %v2654 = vmul.f32 %v2425, %v2426
    %v2655 = vmul.f32 %v2423, %v2428
    %v2656 = vsub.f32 %v2654, %v2655
    %v2657 = vmul.f32 %v2636, %v2656
    %v2658 = vadd.f32 %v2653, %v2657
    %v2659 = vmul.f32 %v2424, %v2642
    %v2660 = vsub.f32 %v2659, %v2427
    %v2661 = vmul.f32 %v2637, %v2660
    %v2662 = vadd.f32 %v2658, %v2661
    %v2663 = vmul.f32 %v2422, %v2428
    %v2664 = vmul.f32 %v2423, %v2427
    %v2665 = vmul.f32 %v2424, %v2426
    %v2666 = vsub.f32 %v2664, %v2665
    %v2667 = vmul.f32 %v2636, %v2666
    %v2668 = vadd.f32 %v2663, %v2667
    %v2669 = vmul.f32 %v2425, %v2642
    %v2670 = vsub.f32 %v2669, %v2428
    %v2671 = vmul.f32 %v2637, %v2670
    %v2672 = vadd.f32 %v2668, %v2671
    %v2673 = vmul.f32 %v2423, %v2045
    %v2674 = vmul.f32 %v2424, %v2047
    %v2675 = vadd.f32 %v2673, %v2674
    %v2676 = vmul.f32 %v2425, %v2049
    %v2677 = vadd.f32 %v2675, %v2676
    %v2678 = vmul.f32 %v2045, %v2635
    %v2679 = vmul.f32 %v2424, %v2049
    %v2680 = vmul.f32 %v2425, %v2047
    %v2681 = vsub.f32 %v2679, %v2680
    %v2682 = vmul.f32 %v2681, %v2532
    %v2683 = vadd.f32 %v2678, %v2682
    %v2684 = vmul.f32 %v2423, %v2677
    %v2685 = vmul.f32 %v2684, %v2636
    %v2686 = vadd.f32 %v2683, %v2685
    %v2687 = vadd.f32 %v2686, %v2652
    %v2688 = vmul.f32 %v2047, %v2635
    %v2689 = vmul.f32 %v2425, %v2045
    %v2690 = vmul.f32 %v2423, %v2049
    %v2691 = vsub.f32 %v2689, %v2690
    %v2692 = vmul.f32 %v2691, %v2532
    %v2693 = vadd.f32 %v2688, %v2692
    %v2694 = vmul.f32 %v2424, %v2677
    %v2695 = vmul.f32 %v2694, %v2636
    %v2696 = vadd.f32 %v2693, %v2695
    %v2697 = vadd.f32 %v2696, %v2662
    %v2698 = vmul.f32 %v2049, %v2635
    %v2699 = vmul.f32 %v2423, %v2047
    %v2700 = vmul.f32 %v2424, %v2045
    %v2701 = vsub.f32 %v2699, %v2700
    %v2702 = vmul.f32 %v2701, %v2532
    %v2703 = vadd.f32 %v2698, %v2702
    %v2704 = vmul.f32 %v2425, %v2677
    %v2705 = vmul.f32 %v2704, %v2636
    %v2706 = vadd.f32 %v2703, %v2705
    %v2707 = vadd.f32 %v2706, %v2672
    %s2708 = scalar_lea.vmem [#allocation5], 96
    %2709 = vst [vmem:[%s2708] sm:$0xff] %v2687
    %s2710 = scalar_lea.vmem [#allocation5], 112
    %2711 = vst [vmem:[%s2710] sm:$0xff] %v2697
    %s2712 = scalar_lea.vmem [#allocation5], 128
    %2713 = vst [vmem:[%s2712] sm:$0xff] %v2707
    %v2714 = vmul.f32 %v2423, %v2362
    %v2715 = vmul.f32 %v2424, %v2363
    %v2716 = vadd.f32 %v2714, %v2715
    %v2717 = vmul.f32 %v2425, %v2364
    %v2718 = vadd.f32 %v2716, %v2717
    %v2719 = vmul.f32 %v2362, %v2635
    %v2720 = vmul.f32 %v2424, %v2364
    %v2721 = vmul.f32 %v2425, %v2363
    %v2722 = vsub.f32 %v2720, %v2721
    %v2723 = vmul.f32 %v2722, %v2532
    %v2724 = vadd.f32 %v2719, %v2723
    %v2725 = vmul.f32 %v2423, %v2718
    %v2726 = vmul.f32 %v2725, %v2636
    %v2727 = vadd.f32 %v2724, %v2726
    %v2728 = vadd.f32 %v2727, %v2652
    %v2729 = vsub.f32 %v2728, %v2687
    %s2730 = scalar_lea.vmem [#allocation5], 104
    %2731 = vst [vmem:[%s2730] sm:$0xff] %v2729
    %v2732 = vmul.f32 %v2363, %v2635
    %v2733 = vmul.f32 %v2425, %v2362
    %v2734 = vmul.f32 %v2423, %v2364
    %v2735 = vsub.f32 %v2733, %v2734
    %v2736 = vmul.f32 %v2735, %v2532
    %v2737 = vadd.f32 %v2732, %v2736
    %v2738 = vmul.f32 %v2424, %v2718
    %v2739 = vmul.f32 %v2738, %v2636
    %v2740 = vadd.f32 %v2737, %v2739
    %v2741 = vadd.f32 %v2740, %v2662
    %v2742 = vsub.f32 %v2741, %v2697
    %s2743 = scalar_lea.vmem [#allocation5], 120
    %2744 = vst [vmem:[%s2743] sm:$0xff] %v2742
    %v2745 = vmul.f32 %v2364, %v2635
    %v2746 = vmul.f32 %v2423, %v2363
    %v2747 = vmul.f32 %v2424, %v2362
    %v2748 = vsub.f32 %v2746, %v2747
    %v2749 = vmul.f32 %v2748, %v2532
    %v2750 = vadd.f32 %v2745, %v2749
    %v2751 = vmul.f32 %v2425, %v2718
    %v2752 = vmul.f32 %v2751, %v2636
    %v2753 = vadd.f32 %v2750, %v2752
    %v2754 = vadd.f32 %v2753, %v2672
    %v2755 = vsub.f32 %v2754, %v2707
    %s2756 = scalar_lea.vmem [#allocation5], 136
    %2757 = vst [vmem:[%s2756] sm:$0xff] %v2755
    // Predicated region
    $region34: #{tpu_custom_call.1} parent=1 // pred_check
      _
    $region35: #{tpu_custom_call.1} parent=1 // pred_check_branch
      %2759 = sbr.rel (0) target = $region37
    $region36: #{tpu_custom_call.1} parent=1 // pred_region
      %s2761 = ssub.s32 2304, 2304
      %2762 = vsyncadd [#allocation4], %s2761
      %s2763 = sshll.u32 [#allocation5], 4
      %s2764 = int_to_ptr.vmem [resolvable:$true] %s2763
      %2769 = dma.vmem_to_hbm [thread:$0]  %s2764, 2304, %s7, [#allocation4], 128, 128, 8
    $region37: #{tpu_custom_call.1} parent=1 // pred_fallthru
      _
    // Predicated region
    $region38: #{tpu_custom_call.1} parent=1 // pred_check
      _
    $region39: #{tpu_custom_call.1} parent=1 // pred_check_branch
      %2771 = sbr.rel (0) target = $region41
    $region40: #{tpu_custom_call.1} parent=1 // pred_region
      %s2773 = ssub.s32 384, 384
      %2774 = vsyncadd [#allocation7], %s2773
      %s2775 = sshll.u32 [#allocation6], 4
      %s2776 = int_to_ptr.vmem [resolvable:$true] %s2775
      %2781 = dma.vmem_to_hbm [thread:$0]  %s2776, 384, %s8, [#allocation7], 128, 128, 8
    $region41: #{tpu_custom_call.1} parent=1 // pred_fallthru
      _
    // Predicated region
    $region42: #{tpu_custom_call.1} parent=1 // pred_check
      _
    $region43: #{tpu_custom_call.1} parent=1 // pred_check_branch
      %2783 = sbr.rel (0) target = $region45
    $region44: #{tpu_custom_call.1} parent=1 // pred_region
      %2784 = dma.done [#allocation4], 2304
    $region45: #{tpu_custom_call.1} parent=1 // pred_fallthru
      _
    // Predicated region
    $region46: #{tpu_custom_call.1} parent=1 // pred_check
      _
    $region47: #{tpu_custom_call.1} parent=1 // pred_check_branch
      %2786 = sbr.rel (0) target = $region49
    $region48: #{tpu_custom_call.1} parent=1 // pred_region
      %2787 = dma.done [#allocation7], 384
    $region49: #{tpu_custom_call.1} parent=1 // pred_fallthru
      _
    %2788 = vsyncpa [#allocation3], 1
    %2789 = vsyncpa [#allocation4], 1
    %2790 = vsyncpa [#allocation7], 1

</llo_original>
